<compile_context>
chip_gen: v7x
topology: tpu7x:2x2x1
jax: 0.10.0
libtpu: 0.0.40
codegen_flags: <defaults>
</compile_context>

<pallas_src>
import jax
import jax.numpy as jnp
from jax import lax
from jax.experimental import pallas as pl
from jax.experimental.pallas import tpu as pltpu


def _lane_shift(a, s, P):
    """b[:, p] = a[:, (p + s) % P] for static s (cyclic lane shift).

    Explicit slice+concat along the lane axis; pltpu.roll is the single-XLU-op
    equivalent and a drop-in replacement.
    """
    s = s % P
    if s == 0:
        return a
    return jnp.concatenate([a[:, s:], a[:, :s]], axis=1)


def _make_kernel(H2, W2, Ch, Cout, has_wmap, mm_dtype):
    P = H2 * W2
    Cin1 = 2 * Ch
    R1 = 9 * Cin1
    R2 = 9 * Cout
    # flat lane offset of conv tap (ky, kx); row-major tap order matches weights
    shifts = [(ky - 1) * W2 + (kx - 1) for ky in range(3) for kx in range(3)]

    def kernel(feat_ref, mask_ref, w1_ref, w2_ref, *rest):
        if has_wmap:
            (wmap_ref, a1_ref, c1_ref, a2_ref, c2_ref, out_ref, col_ref) = rest
        else:
            (a1_ref, c1_ref, a2_ref, c2_ref, out_ref, col_ref) = rest

        # rows [0:Ch] = unpooled x (pre-relu), rows [Ch:2Ch] = skip connection
        feat_raw = feat_ref[...]
        rowid = lax.broadcasted_iota(jnp.int32, (Cin1, P), 0)
        feat = jnp.where(rowid < Ch, jnp.maximum(feat_raw, 0.0), feat_raw)

        def build_im2col(src, cin):
            # col[t*cin + i, p] = src[i, p + shift_t]   (0 outside the image)
            for t, s in enumerate(shifts):
                blk = _lane_shift(src, s, P)
                if s != 0:
                    blk = blk * mask_ref[pl.ds(t, 1), :]
                col_ref[pl.ds(t * cin, cin), :] = blk.astype(col_ref.dtype)

        # ---- conv1 (3x3, pad 1) over the channel concat: one MXU matmul ----
        build_im2col(feat, Cin1)
        acc1 = jnp.dot(w1_ref[...], col_ref[pl.ds(0, R1), :],
                       preferred_element_type=jnp.float32)
        h1 = jnp.maximum(acc1 * a1_ref[...] + c1_ref[...], 0.0)   # bias+BN1+relu

        # ---- conv2 (3x3, pad 1): one MXU matmul ----
        build_im2col(h1.astype(mm_dtype), Cout)
        acc2 = jnp.dot(w2_ref[...], col_ref[pl.ds(0, R2), :],
                       preferred_element_type=jnp.float32)
        h2 = acc2 * a2_ref[...] + c2_ref[...]                     # bias+BN2

        # ---- residual: channel_map(unpooled x) ----
        if has_wmap:
            # 1x1 conv; connection columns of the weight are zero.
            res = jnp.dot(wmap_ref[...], feat_raw.astype(mm_dtype),
                          preferred_element_type=jnp.float32)
        else:
            # identity channel_map (in_channels//2 == out_channels): no matmul.
            res = feat_raw[:Cout, :]

        out_ref[...] = (h2 + res).astype(out_ref.dtype)

    return kernel, R1, R2


def deep_unet_upsample(x, connection, idx, params, *, matmul_dtype=jnp.float32):
    """x: (N, Cin//2, H, W), connection: (N, Cin//2, 2H, 2W), idx: (N, Cin//2, H, W).

    All NCHW (PyTorch convention).  Returns (N, Cout, 2H, 2W) float32.
    Set matmul_dtype=jnp.bfloat16 on v6e/v7x for 2x MXU rate (f32 accumulation).
    """
    N, Ch, H, W = x.shape
    H2, W2 = 2 * H, 2 * W
    P = H2 * W2
    Cin1 = 2 * Ch
    Cout = params['w1'].shape[0]
    eps = 1e-5

    # ---- MaxUnpool2d(2,2) + channel concat: one fused XLA elementwise op ----
    pos = jnp.arange(P, dtype=jnp.int32).reshape(1, 1, H2, W2)
    x_up = jnp.repeat(jnp.repeat(x, 2, axis=2), 2, axis=3)
    idx_up = jnp.repeat(jnp.repeat(idx.astype(jnp.int32), 2, axis=2), 2, axis=3)
    x_unpool = jnp.where(idx_up == pos, x_up, 0.0)
    featcat = jnp.concatenate([x_unpool, connection], axis=1)
    featcat = featcat.reshape(N, Cin1, P).astype(jnp.float32)

    # ---- conv weights: OIHW -> (Cout, 9*Cin), rows ordered (tap, in_channel) ----
    w1mat = jnp.transpose(params['w1'], (0, 2, 3, 1)).reshape(Cout, 9 * Cin1)
    w2mat = jnp.transpose(params['w2'], (0, 2, 3, 1)).reshape(Cout, 9 * Cout)
    w1mat = w1mat.astype(matmul_dtype)
    w2mat = w2mat.astype(matmul_dtype)

    has_wmap = params['wmap'] is not None
    if has_wmap:
        wmap = params['wmap'][:, :, 0, 0]                               # (Cout, Ch)
        wmap_ext = jnp.concatenate(
            [wmap, jnp.zeros((Cout, Ch), wmap.dtype)], axis=1).astype(matmul_dtype)

    # ---- conv bias + eval-mode BatchNorm folded into per-channel affine ----
    s1 = params['gamma1'] / jnp.sqrt(params['var1'] + eps)
    a1 = s1.reshape(Cout, 1)
    c1 = (s1 * (params['b1'] - params['mean1']) + params['beta1']).reshape(Cout, 1)
    s2 = params['gamma2'] / jnp.sqrt(params['var2'] + eps)
    a2 = s2.reshape(Cout, 1)
    c2 = (s2 * (params['b2'] - params['mean2']) + params['beta2']).reshape(Cout, 1)

    # ---- boundary masks for the 9 taps (zero where the lane shift wraps) ----
    yy = jnp.arange(H2).reshape(H2, 1)
    xx = jnp.arange(W2).reshape(1, W2)
    mask9 = jnp.stack(
        [((yy + ky - 1 >= 0) & (yy + ky - 1 < H2) &
          (xx + kx - 1 >= 0) & (xx + kx - 1 < W2)).astype(jnp.float32).reshape(P)
         for ky in range(3) for kx in range(3)], axis=0)                # (9, P)

    kernel, R1, R2 = _make_kernel(H2, W2, Ch, Cout, has_wmap, matmul_dtype)

    def const(shape):
        return pl.BlockSpec(shape, lambda n: (0,) * len(shape))

    in_specs = [
        pl.BlockSpec((None, Cin1, P), lambda n: (n, 0, 0)),             # featcat
        const((9, P)),                                                  # tap masks
        const((Cout, R1)),                                              # conv1 W
        const((Cout, R2)),                                              # conv2 W
    ]
    args = [featcat, mask9, w1mat, w2mat]
    if has_wmap:
        in_specs.append(const((Cout, Cin1)))                            # channel_map W
        args.append(wmap_ext)
    in_specs += [const((Cout, 1))] * 4                                  # a1, c1, a2, c2
    args += [a1, c1, a2, c2]

    grid_spec = pltpu.PrefetchScalarGridSpec(
        num_scalar_prefetch=0,
        grid=(N,),
        in_specs=in_specs,
        out_specs=pl.BlockSpec((None, Cout, P), lambda n: (n, 0, 0)),
        scratch_shapes=[pltpu.VMEM((max(R1, R2), P), matmul_dtype)],    # im2col slab
    )

    out = pl.pallas_call(
        kernel,
        out_shape=jax.ShapeDtypeStruct((N, Cout, P), jnp.float32),
        grid_spec=grid_spec,
        compiler_params=pltpu.CompilerParams(
            dimension_semantics=("parallel",)),                         # megacore (v7x)
    )(*args)

    return out.reshape(N, Cout, H2, W2)        # already NCHW; no transpose needed


def init_params(key, in_channels, out_channels):
    Ch = in_channels // 2
    ks = jax.random.split(key, 13)
    p = {
        'w1': 0.2 * jax.random.normal(ks[0], (out_channels, in_channels, 3, 3), jnp.float32),
        'b1': 0.1 * jax.random.normal(ks[1], (out_channels,), jnp.float32),
        'w2': 0.2 * jax.random.normal(ks[2], (out_channels, out_channels, 3, 3), jnp.float32),
        'b2': 0.1 * jax.random.normal(ks[3], (out_channels,), jnp.float32),
        'gamma1': 1.0 + 0.1 * jax.random.normal(ks[4], (out_channels,), jnp.float32),
        'beta1': 0.1 * jax.random.normal(ks[5], (out_channels,), jnp.float32),
        'mean1': 0.1 * jax.random.normal(ks[6], (out_channels,), jnp.float32),
        'var1': 0.5 + jax.random.uniform(ks[7], (out_channels,), jnp.float32),
        'gamma2': 1.0 + 0.1 * jax.random.normal(ks[8], (out_channels,), jnp.float32),
        'beta2': 0.1 * jax.random.normal(ks[9], (out_channels,), jnp.float32),
        'mean2': 0.1 * jax.random.normal(ks[10], (out_channels,), jnp.float32),
        'var2': 0.5 + jax.random.uniform(ks[11], (out_channels,), jnp.float32),
    }
    if Ch == out_channels:
        p['wmap'] = None                               # nn.Sequential() identity
    else:
        p['wmap'] = 0.2 * jax.random.normal(ks[12], (out_channels, Ch, 1, 1), jnp.float32)
    return p


def ref_forward(x, connection, idx, params):
    """Pure-JAX reference mirroring the PyTorch forward (eval-mode BN)."""
    N, Ch, H, W = x.shape
    H2, W2 = 2 * H, 2 * W
    eps = 1e-5
    pos = jnp.arange(H2 * W2, dtype=jnp.int32).reshape(1, 1, H2, W2)
    x_up = jnp.repeat(jnp.repeat(x, 2, axis=2), 2, axis=3)
    idx_up = jnp.repeat(jnp.repeat(idx.astype(jnp.int32), 2, axis=2), 2, axis=3)
    xu = jnp.where(idx_up == pos, x_up, 0.0)                       # MaxUnpool2d(2,2)

    feat = jnp.concatenate([jnp.maximum(xu, 0.0), connection], axis=1)

    def conv3(a, w, b):
        y = lax.conv_general_dilated(a, w, (1, 1), ((1, 1), (1, 1)),
                                     dimension_numbers=('NCHW', 'OIHW', 'NCHW'),
                                     precision=lax.Precision.HIGHEST)
        return y + b.reshape(1, -1, 1, 1)

    def bn(y, g, be, m, v):
        g, be, m, v = (t.reshape(1, -1, 1, 1) for t in (g, be, m, v))
        return g * (y - m) / jnp.sqrt(v + eps) + be

    y = bn(conv3(feat, params['w1'], params['b1']),
           params['gamma1'], params['beta1'], params['mean1'], params['var1'])
    y = jnp.maximum(y, 0.0)
    y = bn(conv3(y, params['w2'], params['b2']),
           params['gamma2'], params['beta2'], params['mean2'], params['var2'])
    if params['wmap'] is None:
        res = xu
    else:
        res = lax.conv_general_dilated(xu, params['wmap'], (1, 1), ((0, 0), (0, 0)),
                                       dimension_numbers=('NCHW', 'OIHW', 'NCHW'),
                                       precision=lax.Precision.HIGHEST)
    return y + res


if __name__ == "__main__":
    key = jax.random.PRNGKey(0)
    N, H, W = 2, 16, 16
    H2, W2 = 2 * H, 2 * W

    # (in_channels, out_channels): first exercises the 1x1-conv channel_map path,
    # second the identity channel_map fast path (in_channels // 2 == out_channels).
    for cfg_i, (cin, cout) in enumerate([(8, 8), (16, 8)]):
        Ch = cin // 2
        key, k_x, k_c, k_r, k_c2, k_p = jax.random.split(key, 6)
        x = jax.random.normal(k_x, (N, Ch, H, W), jnp.float32)
        connection = jax.random.normal(k_c, (N, Ch, H2, W2), jnp.float32)
        # pooling indices as MaxPool2d(2,2,return_indices=True) would produce them
        # (flat index into H2*W2, always inside the own 2x2 window), int32.
        dr = jax.random.randint(k_r, (N, Ch, H, W), 0, 2)
        dc = jax.random.randint(k_c2, (N, Ch, H, W), 0, 2)
        hh = jnp.arange(H).reshape(1, 1, H, 1)
        ww = jnp.arange(W).reshape(1, 1, 1, W)
        idx = ((2 * hh + dr) * W2 + (2 * ww + dc)).astype(jnp.int32)

        params = init_params(k_p, cin, cout)

        run = jax.jit(lambda a, b, c: deep_unet_upsample(a, b, c, params))
        out = jax.block_until_ready(run(x, connection, idx))

        ref = ref_forward(x, connection, idx, params)
        assert out.shape == (N, cout, H2, W2), (cfg_i, out.shape)
        err = float(jnp.max(jnp.abs(out - ref)))
        assert jnp.allclose(out, ref, rtol=2e-2, atol=2e-2), (cfg_i, err)

    print("KERNEL_OK")
</pallas_src>

<mosaic_0001>
module attributes {stable_mosaic.version = 11 : i64} {
  func.func @kernel(%arg0: i32, %arg1: memref<1x8x1024xf32, #tpu.memory_space<vmem>>, %arg2: memref<9x1024xf32, #tpu.memory_space<vmem>>, %arg3: memref<8x72xf32, #tpu.memory_space<vmem>>, %arg4: memref<8x72xf32, #tpu.memory_space<vmem>>, %arg5: memref<8x8xf32, #tpu.memory_space<vmem>>, %arg6: memref<8x1xf32, #tpu.memory_space<vmem>>, %arg7: memref<8x1xf32, #tpu.memory_space<vmem>>, %arg8: memref<8x1xf32, #tpu.memory_space<vmem>>, %arg9: memref<8x1xf32, #tpu.memory_space<vmem>>, %arg10: memref<1x8x1024xf32, #tpu.memory_space<vmem>>, %arg11: memref<72x1024xf32, #tpu.memory_space<vmem>>) attributes {dimension_semantics = [#tpu.dimension_semantics<parallel>], iteration_bounds = array<i64: 2>, scalar_prefetch = 0 : i64, scratch_operands = 1 : i64, tpu.core_type = #tpu.core_type<tc>, window_params = [{transform_indices = @transform_0, window_bounds = array<i64: 1, 8, 1024>}, {pipeline_mode = #tpu.pipeline_mode<synchronous>, transform_indices = @transform_1, window_bounds = array<i64: 9, 1024>}, {pipeline_mode = #tpu.pipeline_mode<synchronous>, transform_indices = @transform_2, window_bounds = array<i64: 8, 72>}, {pipeline_mode = #tpu.pipeline_mode<synchronous>, transform_indices = @transform_3, window_bounds = array<i64: 8, 72>}, {pipeline_mode = #tpu.pipeline_mode<synchronous>, transform_indices = @transform_4, window_bounds = array<i64: 8, 8>}, {pipeline_mode = #tpu.pipeline_mode<synchronous>, transform_indices = @transform_5, window_bounds = array<i64: 8, 1>}, {pipeline_mode = #tpu.pipeline_mode<synchronous>, transform_indices = @transform_6, window_bounds = array<i64: 8, 1>}, {pipeline_mode = #tpu.pipeline_mode<synchronous>, transform_indices = @transform_7, window_bounds = array<i64: 8, 1>}, {pipeline_mode = #tpu.pipeline_mode<synchronous>, transform_indices = @transform_8, window_bounds = array<i64: 8, 1>}, {transform_indices = @transform_9, window_bounds = array<i64: 1, 8, 1024>}]} {
    %c0 = arith.constant 0 : index
    %c0_0 = arith.constant 0 : index
    %c0_1 = arith.constant 0 : index
    %0 = vector.load %arg1[%c0, %c0_0, %c0_1] : memref<1x8x1024xf32, #tpu.memory_space<vmem>>, vector<1x8x1024xf32>
    %1 = vector.shape_cast %0 : vector<1x8x1024xf32> to vector<8x1024xf32>
    %2 = tpu.iota {dimensions = array<i32: 0>} : vector<8x1024xi32>
    %c4_i32 = arith.constant 4 : i32
    %3 = vector.broadcast %c4_i32 : i32 to vector<8x1024xi32>
    %4 = arith.cmpi slt, %2, %3 : vector<8x1024xi32>
    %cst = arith.constant 0.000000e+00 : f32
    %5 = vector.broadcast %cst : f32 to vector<8x1024xf32>
    %6 = arith.maximumf %1, %5 : vector<8x1024xf32>
    %7 = arith.select %4, %6, %1 : vector<8x1024xi1>, vector<8x1024xf32>
    %8 = vector.extract_strided_slice %7 {offsets = [0, 991], sizes = [8, 33], strides = [1, 1]} : vector<8x1024xf32> to vector<8x33xf32>
    %9 = vector.extract_strided_slice %7 {offsets = [0, 0], sizes = [8, 991], strides = [1, 1]} : vector<8x1024xf32> to vector<8x991xf32>
    %10 = tpu.concatenate %8, %9 in 1 : vector<8x33xf32>, vector<8x991xf32> -> vector<8x1024xf32>
    %c0_2 = arith.constant 0 : index
    %c0_3 = arith.constant 0 : index
    %11 = vector.load %arg2[%c0_2, %c0_3] : memref<9x1024xf32, #tpu.memory_space<vmem>>, vector<1x1024xf32>
    %12 = vector.broadcast %11 : vector<1x1024xf32> to vector<8x1024xf32>
    %13 = arith.mulf %10, %12 : vector<8x1024xf32>
    %c0_4 = arith.constant 0 : index
    %c0_5 = arith.constant 0 : index
    %14 = vector.load %arg11[%c0_4, %c0_5] : memref<72x1024xf32, #tpu.memory_space<vmem>>, vector<8x1024xf32>
    tpu.vector_store %arg11[%c0_4, %c0_5], %13 {strides = array<i32>} : memref<72x1024xf32, #tpu.memory_space<vmem>>, vector<8x1024xf32>,
    %15 = vector.extract_strided_slice %7 {offsets = [0, 992], sizes = [8, 32], strides = [1, 1]} : vector<8x1024xf32> to vector<8x32xf32>
    %16 = vector.extract_strided_slice %7 {offsets = [0, 0], sizes = [8, 992], strides = [1, 1]} : vector<8x1024xf32> to vector<8x992xf32>
    %17 = tpu.concatenate %15, %16 in 1 : vector<8x32xf32>, vector<8x992xf32> -> vector<8x1024xf32>
    %c1 = arith.constant 1 : index
    %c0_6 = arith.constant 0 : index
    %18 = vector.load %arg2[%c1, %c0_6] : memref<9x1024xf32, #tpu.memory_space<vmem>>, vector<1x1024xf32>
    %19 = vector.broadcast %18 : vector<1x1024xf32> to vector<8x1024xf32>
    %20 = arith.mulf %17, %19 : vector<8x1024xf32>
    %c8 = arith.constant 8 : index
    %c0_7 = arith.constant 0 : index
    %21 = vector.load %arg11[%c8, %c0_7] : memref<72x1024xf32, #tpu.memory_space<vmem>>, vector<8x1024xf32>
    tpu.vector_store %arg11[%c8, %c0_7], %20 {strides = array<i32>} : memref<72x1024xf32, #tpu.memory_space<vmem>>, vector<8x1024xf32>,
    %22 = vector.extract_strided_slice %7 {offsets = [0, 993], sizes = [8, 31], strides = [1, 1]} : vector<8x1024xf32> to vector<8x31xf32>
    %23 = vector.extract_strided_slice %7 {offsets = [0, 0], sizes = [8, 993], strides = [1, 1]} : vector<8x1024xf32> to vector<8x993xf32>
    %24 = tpu.concatenate %22, %23 in 1 : vector<8x31xf32>, vector<8x993xf32> -> vector<8x1024xf32>
    %c2 = arith.constant 2 : index
    %c0_8 = arith.constant 0 : index
    %25 = vector.load %arg2[%c2, %c0_8] : memref<9x1024xf32, #tpu.memory_space<vmem>>, vector<1x1024xf32>
    %26 = vector.broadcast %25 : vector<1x1024xf32> to vector<8x1024xf32>
    %27 = arith.mulf %24, %26 : vector<8x1024xf32>
    %c16 = arith.constant 16 : index
    %c0_9 = arith.constant 0 : index
    %28 = vector.load %arg11[%c16, %c0_9] : memref<72x1024xf32, #tpu.memory_space<vmem>>, vector<8x1024xf32>
    tpu.vector_store %arg11[%c16, %c0_9], %27 {strides = array<i32>} : memref<72x1024xf32, #tpu.memory_space<vmem>>, vector<8x1024xf32>,
    %29 = vector.extract_strided_slice %7 {offsets = [0, 1023], sizes = [8, 1], strides = [1, 1]} : vector<8x1024xf32> to vector<8x1xf32>
    %30 = vector.extract_strided_slice %7 {offsets = [0, 0], sizes = [8, 1023], strides = [1, 1]} : vector<8x1024xf32> to vector<8x1023xf32>
    %31 = tpu.concatenate %29, %30 in 1 : vector<8x1xf32>, vector<8x1023xf32> -> vector<8x1024xf32>
    %c3 = arith.constant 3 : index
    %c0_10 = arith.constant 0 : index
    %32 = vector.load %arg2[%c3, %c0_10] : memref<9x1024xf32, #tpu.memory_space<vmem>>, vector<1x1024xf32>
    %33 = vector.broadcast %32 : vector<1x1024xf32> to vector<8x1024xf32>
    %34 = arith.mulf %31, %33 : vector<8x1024xf32>
    %c24 = arith.constant 24 : index
    %c0_11 = arith.constant 0 : index
    %35 = vector.load %arg11[%c24, %c0_11] : memref<72x1024xf32, #tpu.memory_space<vmem>>, vector<8x1024xf32>
    tpu.vector_store %arg11[%c24, %c0_11], %34 {strides = array<i32>} : memref<72x1024xf32, #tpu.memory_space<vmem>>, vector<8x1024xf32>,
    %c32 = arith.constant 32 : index
    %c0_12 = arith.constant 0 : index
    %36 = vector.load %arg11[%c32, %c0_12] : memref<72x1024xf32, #tpu.memory_space<vmem>>, vector<8x1024xf32>
    tpu.vector_store %arg11[%c32, %c0_12], %7 {strides = array<i32>} : memref<72x1024xf32, #tpu.memory_space<vmem>>, vector<8x1024xf32>,
    %37 = vector.extract_strided_slice %7 {offsets = [0, 1], sizes = [8, 1023], strides = [1, 1]} : vector<8x1024xf32> to vector<8x1023xf32>
    %38 = vector.extract_strided_slice %7 {offsets = [0, 0], sizes = [8, 1], strides = [1, 1]} : vector<8x1024xf32> to vector<8x1xf32>
    %39 = tpu.concatenate %37, %38 in 1 : vector<8x1023xf32>, vector<8x1xf32> -> vector<8x1024xf32>
    %c5 = arith.constant 5 : index
    %c0_13 = arith.constant 0 : index
    %40 = vector.load %arg2[%c5, %c0_13] : memref<9x1024xf32, #tpu.memory_space<vmem>>, vector<1x1024xf32>
    %41 = vector.broadcast %40 : vector<1x1024xf32> to vector<8x1024xf32>
    %42 = arith.mulf %39, %41 : vector<8x1024xf32>
    %c40 = arith.constant 40 : index
    %c0_14 = arith.constant 0 : index
    %43 = vector.load %arg11[%c40, %c0_14] : memref<72x1024xf32, #tpu.memory_space<vmem>>, vector<8x1024xf32>
    tpu.vector_store %arg11[%c40, %c0_14], %42 {strides = array<i32>} : memref<72x1024xf32, #tpu.memory_space<vmem>>, vector<8x1024xf32>,
    %44 = vector.extract_strided_slice %7 {offsets = [0, 31], sizes = [8, 993], strides = [1, 1]} : vector<8x1024xf32> to vector<8x993xf32>
    %45 = vector.extract_strided_slice %7 {offsets = [0, 0], sizes = [8, 31], strides = [1, 1]} : vector<8x1024xf32> to vector<8x31xf32>
    %46 = tpu.concatenate %44, %45 in 1 : vector<8x993xf32>, vector<8x31xf32> -> vector<8x1024xf32>
    %c6 = arith.constant 6 : index
    %c0_15 = arith.constant 0 : index
    %47 = vector.load %arg2[%c6, %c0_15] : memref<9x1024xf32, #tpu.memory_space<vmem>>, vector<1x1024xf32>
    %48 = vector.broadcast %47 : vector<1x1024xf32> to vector<8x1024xf32>
    %49 = arith.mulf %46, %48 : vector<8x1024xf32>
    %c48 = arith.constant 48 : index
    %c0_16 = arith.constant 0 : index
    %50 = vector.load %arg11[%c48, %c0_16] : memref<72x1024xf32, #tpu.memory_space<vmem>>, vector<8x1024xf32>
    tpu.vector_store %arg11[%c48, %c0_16], %49 {strides = array<i32>} : memref<72x1024xf32, #tpu.memory_space<vmem>>, vector<8x1024xf32>,
    %51 = vector.extract_strided_slice %7 {offsets = [0, 32], sizes = [8, 992], strides = [1, 1]} : vector<8x1024xf32> to vector<8x992xf32>
    %52 = vector.extract_strided_slice %7 {offsets = [0, 0], sizes = [8, 32], strides = [1, 1]} : vector<8x1024xf32> to vector<8x32xf32>
    %53 = tpu.concatenate %51, %52 in 1 : vector<8x992xf32>, vector<8x32xf32> -> vector<8x1024xf32>
    %c7 = arith.constant 7 : index
    %c0_17 = arith.constant 0 : index
    %54 = vector.load %arg2[%c7, %c0_17] : memref<9x1024xf32, #tpu.memory_space<vmem>>, vector<1x1024xf32>
    %55 = vector.broadcast %54 : vector<1x1024xf32> to vector<8x1024xf32>
    %56 = arith.mulf %53, %55 : vector<8x1024xf32>
    %c56 = arith.constant 56 : index
    %c0_18 = arith.constant 0 : index
    %57 = vector.load %arg11[%c56, %c0_18] : memref<72x1024xf32, #tpu.memory_space<vmem>>, vector<8x1024xf32>
    tpu.vector_store %arg11[%c56, %c0_18], %56 {strides = array<i32>} : memref<72x1024xf32, #tpu.memory_space<vmem>>, vector<8x1024xf32>,
    %58 = vector.extract_strided_slice %7 {offsets = [0, 33], sizes = [8, 991], strides = [1, 1]} : vector<8x1024xf32> to vector<8x991xf32>
    %59 = vector.extract_strided_slice %7 {offsets = [0, 0], sizes = [8, 33], strides = [1, 1]} : vector<8x1024xf32> to vector<8x33xf32>
    %60 = tpu.concatenate %58, %59 in 1 : vector<8x991xf32>, vector<8x33xf32> -> vector<8x1024xf32>
    %c8_19 = arith.constant 8 : index
    %c0_20 = arith.constant 0 : index
    %61 = vector.load %arg2[%c8_19, %c0_20] : memref<9x1024xf32, #tpu.memory_space<vmem>>, vector<1x1024xf32>
    %62 = vector.broadcast %61 : vector<1x1024xf32> to vector<8x1024xf32>
    %63 = arith.mulf %60, %62 : vector<8x1024xf32>
    %c64 = arith.constant 64 : index
    %c0_21 = arith.constant 0 : index
    %64 = vector.load %arg11[%c64, %c0_21] : memref<72x1024xf32, #tpu.memory_space<vmem>>, vector<8x1024xf32>
    tpu.vector_store %arg11[%c64, %c0_21], %63 {strides = array<i32>} : memref<72x1024xf32, #tpu.memory_space<vmem>>, vector<8x1024xf32>,
    %c0_22 = arith.constant 0 : index
    %c0_23 = arith.constant 0 : index
    %65 = vector.load %arg3[%c0_22, %c0_23] : memref<8x72xf32, #tpu.memory_space<vmem>>, vector<8x72xf32>
    %c0_24 = arith.constant 0 : index
    %c0_25 = arith.constant 0 : index
    %66 = vector.load %arg11[%c0_24, %c0_25] : memref<72x1024xf32, #tpu.memory_space<vmem>>, vector<72x1024xf32>
    %cst_26 = arith.constant dense<0.000000e+00> : vector<8x1024xf32>
    %67 = tpu.matmul %65, %66, %cst_26 {dimension_numbers = #tpu.dot_dimension_numbers<[1], [0], [0], [1], [0, 0, 1, 1], [], []>} : vector<8x72xf32>, vector<72x1024xf32>, vector<8x1024xf32> -> vector<8x1024xf32>
    %c0_27 = arith.constant 0 : index
    %c0_28 = arith.constant 0 : index
    %68 = vector.load %arg6[%c0_27, %c0_28] : memref<8x1xf32, #tpu.memory_space<vmem>>, vector<8x1xf32>
    %69 = vector.broadcast %68 : vector<8x1xf32> to vector<8x1024xf32>
    %70 = arith.mulf %67, %69 : vector<8x1024xf32>
    %c0_29 = arith.constant 0 : index
    %c0_30 = arith.constant 0 : index
    %71 = vector.load %arg7[%c0_29, %c0_30] : memref<8x1xf32, #tpu.memory_space<vmem>>, vector<8x1xf32>
    %72 = vector.broadcast %71 : vector<8x1xf32> to vector<8x1024xf32>
    %73 = arith.addf %70, %72 : vector<8x1024xf32>
    %cst_31 = arith.constant 0.000000e+00 : f32
    %74 = vector.broadcast %cst_31 : f32 to vector<8x1024xf32>
    %75 = arith.maximumf %73, %74 : vector<8x1024xf32>
    %76 = vector.extract_strided_slice %75 {offsets = [0, 991], sizes = [8, 33], strides = [1, 1]} : vector<8x1024xf32> to vector<8x33xf32>
    %77 = vector.extract_strided_slice %75 {offsets = [0, 0], sizes = [8, 991], strides = [1, 1]} : vector<8x1024xf32> to vector<8x991xf32>
    %78 = tpu.concatenate %76, %77 in 1 : vector<8x33xf32>, vector<8x991xf32> -> vector<8x1024xf32>
    %c0_32 = arith.constant 0 : index
    %c0_33 = arith.constant 0 : index
    %79 = vector.load %arg2[%c0_32, %c0_33] : memref<9x1024xf32, #tpu.memory_space<vmem>>, vector<1x1024xf32>
    %80 = vector.broadcast %79 : vector<1x1024xf32> to vector<8x1024xf32>
    %81 = arith.mulf %78, %80 : vector<8x1024xf32>
    %c0_34 = arith.constant 0 : index
    %c0_35 = arith.constant 0 : index
    %82 = vector.load %arg11[%c0_34, %c0_35] : memref<72x1024xf32, #tpu.memory_space<vmem>>, vector<8x1024xf32>
    tpu.vector_store %arg11[%c0_34, %c0_35], %81 {strides = array<i32>} : memref<72x1024xf32, #tpu.memory_space<vmem>>, vector<8x1024xf32>,
    %83 = vector.extract_strided_slice %75 {offsets = [0, 992], sizes = [8, 32], strides = [1, 1]} : vector<8x1024xf32> to vector<8x32xf32>
    %84 = vector.extract_strided_slice %75 {offsets = [0, 0], sizes = [8, 992], strides = [1, 1]} : vector<8x1024xf32> to vector<8x992xf32>
    %85 = tpu.concatenate %83, %84 in 1 : vector<8x32xf32>, vector<8x992xf32> -> vector<8x1024xf32>
    %c1_36 = arith.constant 1 : index
    %c0_37 = arith.constant 0 : index
    %86 = vector.load %arg2[%c1_36, %c0_37] : memref<9x1024xf32, #tpu.memory_space<vmem>>, vector<1x1024xf32>
    %87 = vector.broadcast %86 : vector<1x1024xf32> to vector<8x1024xf32>
    %88 = arith.mulf %85, %87 : vector<8x1024xf32>
    %c8_38 = arith.constant 8 : index
    %c0_39 = arith.constant 0 : index
    %89 = vector.load %arg11[%c8_38, %c0_39] : memref<72x1024xf32, #tpu.memory_space<vmem>>, vector<8x1024xf32>
    tpu.vector_store %arg11[%c8_38, %c0_39], %88 {strides = array<i32>} : memref<72x1024xf32, #tpu.memory_space<vmem>>, vector<8x1024xf32>,
    %90 = vector.extract_strided_slice %75 {offsets = [0, 993], sizes = [8, 31], strides = [1, 1]} : vector<8x1024xf32> to vector<8x31xf32>
    %91 = vector.extract_strided_slice %75 {offsets = [0, 0], sizes = [8, 993], strides = [1, 1]} : vector<8x1024xf32> to vector<8x993xf32>
    %92 = tpu.concatenate %90, %91 in 1 : vector<8x31xf32>, vector<8x993xf32> -> vector<8x1024xf32>
    %c2_40 = arith.constant 2 : index
    %c0_41 = arith.constant 0 : index
    %93 = vector.load %arg2[%c2_40, %c0_41] : memref<9x1024xf32, #tpu.memory_space<vmem>>, vector<1x1024xf32>
    %94 = vector.broadcast %93 : vector<1x1024xf32> to vector<8x1024xf32>
    %95 = arith.mulf %92, %94 : vector<8x1024xf32>
    %c16_42 = arith.constant 16 : index
    %c0_43 = arith.constant 0 : index
    %96 = vector.load %arg11[%c16_42, %c0_43] : memref<72x1024xf32, #tpu.memory_space<vmem>>, vector<8x1024xf32>
    tpu.vector_store %arg11[%c16_42, %c0_43], %95 {strides = array<i32>} : memref<72x1024xf32, #tpu.memory_space<vmem>>, vector<8x1024xf32>,
    %97 = vector.extract_strided_slice %75 {offsets = [0, 1023], sizes = [8, 1], strides = [1, 1]} : vector<8x1024xf32> to vector<8x1xf32>
    %98 = vector.extract_strided_slice %75 {offsets = [0, 0], sizes = [8, 1023], strides = [1, 1]} : vector<8x1024xf32> to vector<8x1023xf32>
    %99 = tpu.concatenate %97, %98 in 1 : vector<8x1xf32>, vector<8x1023xf32> -> vector<8x1024xf32>
    %c3_44 = arith.constant 3 : index
    %c0_45 = arith.constant 0 : index
    %100 = vector.load %arg2[%c3_44, %c0_45] : memref<9x1024xf32, #tpu.memory_space<vmem>>, vector<1x1024xf32>
    %101 = vector.broadcast %100 : vector<1x1024xf32> to vector<8x1024xf32>
    %102 = arith.mulf %99, %101 : vector<8x1024xf32>
    %c24_46 = arith.constant 24 : index
    %c0_47 = arith.constant 0 : index
    %103 = vector.load %arg11[%c24_46, %c0_47] : memref<72x1024xf32, #tpu.memory_space<vmem>>, vector<8x1024xf32>
    tpu.vector_store %arg11[%c24_46, %c0_47], %102 {strides = array<i32>} : memref<72x1024xf32, #tpu.memory_space<vmem>>, vector<8x1024xf32>,
    %c32_48 = arith.constant 32 : index
    %c0_49 = arith.constant 0 : index
    %104 = vector.load %arg11[%c32_48, %c0_49] : memref<72x1024xf32, #tpu.memory_space<vmem>>, vector<8x1024xf32>
    tpu.vector_store %arg11[%c32_48, %c0_49], %75 {strides = array<i32>} : memref<72x1024xf32, #tpu.memory_space<vmem>>, vector<8x1024xf32>,
    %105 = vector.extract_strided_slice %75 {offsets = [0, 1], sizes = [8, 1023], strides = [1, 1]} : vector<8x1024xf32> to vector<8x1023xf32>
    %106 = vector.extract_strided_slice %75 {offsets = [0, 0], sizes = [8, 1], strides = [1, 1]} : vector<8x1024xf32> to vector<8x1xf32>
    %107 = tpu.concatenate %105, %106 in 1 : vector<8x1023xf32>, vector<8x1xf32> -> vector<8x1024xf32>
    %c5_50 = arith.constant 5 : index
    %c0_51 = arith.constant 0 : index
    %108 = vector.load %arg2[%c5_50, %c0_51] : memref<9x1024xf32, #tpu.memory_space<vmem>>, vector<1x1024xf32>
    %109 = vector.broadcast %108 : vector<1x1024xf32> to vector<8x1024xf32>
    %110 = arith.mulf %107, %109 : vector<8x1024xf32>
    %c40_52 = arith.constant 40 : index
    %c0_53 = arith.constant 0 : index
    %111 = vector.load %arg11[%c40_52, %c0_53] : memref<72x1024xf32, #tpu.memory_space<vmem>>, vector<8x1024xf32>
    tpu.vector_store %arg11[%c40_52, %c0_53], %110 {strides = array<i32>} : memref<72x1024xf32, #tpu.memory_space<vmem>>, vector<8x1024xf32>,
    %112 = vector.extract_strided_slice %75 {offsets = [0, 31], sizes = [8, 993], strides = [1, 1]} : vector<8x1024xf32> to vector<8x993xf32>
    %113 = vector.extract_strided_slice %75 {offsets = [0, 0], sizes = [8, 31], strides = [1, 1]} : vector<8x1024xf32> to vector<8x31xf32>
    %114 = tpu.concatenate %112, %113 in 1 : vector<8x993xf32>, vector<8x31xf32> -> vector<8x1024xf32>
    %c6_54 = arith.constant 6 : index
    %c0_55 = arith.constant 0 : index
    %115 = vector.load %arg2[%c6_54, %c0_55] : memref<9x1024xf32, #tpu.memory_space<vmem>>, vector<1x1024xf32>
    %116 = vector.broadcast %115 : vector<1x1024xf32> to vector<8x1024xf32>
    %117 = arith.mulf %114, %116 : vector<8x1024xf32>
    %c48_56 = arith.constant 48 : index
    %c0_57 = arith.constant 0 : index
    %118 = vector.load %arg11[%c48_56, %c0_57] : memref<72x1024xf32, #tpu.memory_space<vmem>>, vector<8x1024xf32>
    tpu.vector_store %arg11[%c48_56, %c0_57], %117 {strides = array<i32>} : memref<72x1024xf32, #tpu.memory_space<vmem>>, vector<8x1024xf32>,
    %119 = vector.extract_strided_slice %75 {offsets = [0, 32], sizes = [8, 992], strides = [1, 1]} : vector<8x1024xf32> to vector<8x992xf32>
    %120 = vector.extract_strided_slice %75 {offsets = [0, 0], sizes = [8, 32], strides = [1, 1]} : vector<8x1024xf32> to vector<8x32xf32>
    %121 = tpu.concatenate %119, %120 in 1 : vector<8x992xf32>, vector<8x32xf32> -> vector<8x1024xf32>
    %c7_58 = arith.constant 7 : index
    %c0_59 = arith.constant 0 : index
    %122 = vector.load %arg2[%c7_58, %c0_59] : memref<9x1024xf32, #tpu.memory_space<vmem>>, vector<1x1024xf32>
    %123 = vector.broadcast %122 : vector<1x1024xf32> to vector<8x1024xf32>
    %124 = arith.mulf %121, %123 : vector<8x1024xf32>
    %c56_60 = arith.constant 56 : index
    %c0_61 = arith.constant 0 : index
    %125 = vector.load %arg11[%c56_60, %c0_61] : memref<72x1024xf32, #tpu.memory_space<vmem>>, vector<8x1024xf32>
    tpu.vector_store %arg11[%c56_60, %c0_61], %124 {strides = array<i32>} : memref<72x1024xf32, #tpu.memory_space<vmem>>, vector<8x1024xf32>,
    %126 = vector.extract_strided_slice %75 {offsets = [0, 33], sizes = [8, 991], strides = [1, 1]} : vector<8x1024xf32> to vector<8x991xf32>
    %127 = vector.extract_strided_slice %75 {offsets = [0, 0], sizes = [8, 33], strides = [1, 1]} : vector<8x1024xf32> to vector<8x33xf32>
    %128 = tpu.concatenate %126, %127 in 1 : vector<8x991xf32>, vector<8x33xf32> -> vector<8x1024xf32>
    %c8_62 = arith.constant 8 : index
    %c0_63 = arith.constant 0 : index
    %129 = vector.load %arg2[%c8_62, %c0_63] : memref<9x1024xf32, #tpu.memory_space<vmem>>, vector<1x1024xf32>
    %130 = vector.broadcast %129 : vector<1x1024xf32> to vector<8x1024xf32>
    %131 = arith.mulf %128, %130 : vector<8x1024xf32>
    %c64_64 = arith.constant 64 : index
    %c0_65 = arith.constant 0 : index
    %132 = vector.load %arg11[%c64_64, %c0_65] : memref<72x1024xf32, #tpu.memory_space<vmem>>, vector<8x1024xf32>
    tpu.vector_store %arg11[%c64_64, %c0_65], %131 {strides = array<i32>} : memref<72x1024xf32, #tpu.memory_space<vmem>>, vector<8x1024xf32>,
    %c0_66 = arith.constant 0 : index
    %c0_67 = arith.constant 0 : index
    %133 = vector.load %arg4[%c0_66, %c0_67] : memref<8x72xf32, #tpu.memory_space<vmem>>, vector<8x72xf32>
    %c0_68 = arith.constant 0 : index
    %c0_69 = arith.constant 0 : index
    %134 = vector.load %arg11[%c0_68, %c0_69] : memref<72x1024xf32, #tpu.memory_space<vmem>>, vector<72x1024xf32>
    %cst_70 = arith.constant dense<0.000000e+00> : vector<8x1024xf32>
    %135 = tpu.matmul %133, %134, %cst_70 {dimension_numbers = #tpu.dot_dimension_numbers<[1], [0], [0], [1], [0, 0, 1, 1], [], []>} : vector<8x72xf32>, vector<72x1024xf32>, vector<8x1024xf32> -> vector<8x1024xf32>
    %c0_71 = arith.constant 0 : index
    %c0_72 = arith.constant 0 : index
    %136 = vector.load %arg8[%c0_71, %c0_72] : memref<8x1xf32, #tpu.memory_space<vmem>>, vector<8x1xf32>
    %137 = vector.broadcast %136 : vector<8x1xf32> to vector<8x1024xf32>
    %138 = arith.mulf %135, %137 : vector<8x1024xf32>
    %c0_73 = arith.constant 0 : index
    %c0_74 = arith.constant 0 : index
    %139 = vector.load %arg9[%c0_73, %c0_74] : memref<8x1xf32, #tpu.memory_space<vmem>>, vector<8x1xf32>
    %140 = vector.broadcast %139 : vector<8x1xf32> to vector<8x1024xf32>
    %141 = arith.addf %138, %140 : vector<8x1024xf32>
    %c0_75 = arith.constant 0 : index
    %c0_76 = arith.constant 0 : index
    %142 = vector.load %arg5[%c0_75, %c0_76] : memref<8x8xf32, #tpu.memory_space<vmem>>, vector<8x8xf32>
    %cst_77 = arith.constant dense<0.000000e+00> : vector<8x1024xf32>
    %143 = tpu.matmul %142, %1, %cst_77 {dimension_numbers = #tpu.dot_dimension_numbers<[1], [0], [0], [1], [0, 0, 1, 1], [], []>} : vector<8x8xf32>, vector<8x1024xf32>, vector<8x1024xf32> -> vector<8x1024xf32>
    %144 = arith.addf %141, %143 : vector<8x1024xf32>
    %c0_78 = arith.constant 0 : index
    %c0_79 = arith.constant 0 : index
    %c0_80 = arith.constant 0 : index
    %145 = vector.load %arg10[%c0_78, %c0_79, %c0_80] : memref<1x8x1024xf32, #tpu.memory_space<vmem>>, vector<1x8x1024xf32>
    %146 = vector.shape_cast %145 : vector<1x8x1024xf32> to vector<8x1024xf32>
    %147 = vector.shape_cast %144 : vector<8x1024xf32> to vector<1x8x1024xf32>
    tpu.vector_store %arg10[%c0_78, %c0_79, %c0_80], %147 {strides = array<i32>} : memref<1x8x1024xf32, #tpu.memory_space<vmem>>, vector<1x8x1024xf32>,
    return
  }
  func.func @transform_0(%arg0: i32) -> (i32, i32, i32) {
    %c0_i32 = arith.constant 0 : i32
    %c0_i32_0 = arith.constant 0 : i32
    %c0_i32_1 = arith.constant 0 : i32
    return %arg0, %c0_i32, %c0_i32_0 : i32, i32, i32
  }
  func.func @transform_1(%arg0: i32) -> (i32, i32) {
    %c0_i32 = arith.constant 0 : i32
    %c0_i32_0 = arith.constant 0 : i32
    %c0_i32_1 = arith.constant 0 : i32
    return %c0_i32, %c0_i32_0 : i32, i32
  }
  func.func @transform_2(%arg0: i32) -> (i32, i32) {
    %c0_i32 = arith.constant 0 : i32
    %c0_i32_0 = arith.constant 0 : i32
    %c0_i32_1 = arith.constant 0 : i32
    return %c0_i32, %c0_i32_0 : i32, i32
  }
  func.func @transform_3(%arg0: i32) -> (i32, i32) {
    %c0_i32 = arith.constant 0 : i32
    %c0_i32_0 = arith.constant 0 : i32
    %c0_i32_1 = arith.constant 0 : i32
    return %c0_i32, %c0_i32_0 : i32, i32
  }
  func.func @transform_4(%arg0: i32) -> (i32, i32) {
    %c0_i32 = arith.constant 0 : i32
    %c0_i32_0 = arith.constant 0 : i32
    %c0_i32_1 = arith.constant 0 : i32
    return %c0_i32, %c0_i32_0 : i32, i32
  }
  func.func @transform_5(%arg0: i32) -> (i32, i32) {
    %c0_i32 = arith.constant 0 : i32
    %c0_i32_0 = arith.constant 0 : i32
    %c0_i32_1 = arith.constant 0 : i32
    return %c0_i32, %c0_i32_0 : i32, i32
  }
  func.func @transform_6(%arg0: i32) -> (i32, i32) {
    %c0_i32 = arith.constant 0 : i32
    %c0_i32_0 = arith.constant 0 : i32
    %c0_i32_1 = arith.constant 0 : i32
    return %c0_i32, %c0_i32_0 : i32, i32
  }
  func.func @transform_7(%arg0: i32) -> (i32, i32) {
    %c0_i32 = arith.constant 0 : i32
    %c0_i32_0 = arith.constant 0 : i32
    %c0_i32_1 = arith.constant 0 : i32
    return %c0_i32, %c0_i32_0 : i32, i32
  }
  func.func @transform_8(%arg0: i32) -> (i32, i32) {
    %c0_i32 = arith.constant 0 : i32
    %c0_i32_0 = arith.constant 0 : i32
    %c0_i32_1 = arith.constant 0 : i32
    return %c0_i32, %c0_i32_0 : i32, i32
  }
  func.func @transform_9(%arg0: i32) -> (i32, i32, i32) {
    %c0_i32 = arith.constant 0 : i32
    %c0_i32_0 = arith.constant 0 : i32
    %c0_i32_1 = arith.constant 0 : i32
    return %arg0, %c0_i32, %c0_i32_0 : i32, i32, i32
  }
}

</mosaic_0001>

<llo_original>
// kernel: _lambda_.1
$region0: #{_lambda_.1}
  #allocation0 [shape = 'u32[]', space=smem, size = 0x4, offset = 0x4, fixed_abs, tag = 'smem constant byte address 0x4 - core index']
  #allocation1 [shape = 'u32[144,128]{1,0:T(1,128)}', space=vmem, size = 0x12000, scoped, tag = 'internal scratch']
  #allocation2 [shape = 'f32[72,1024]{1,0:T(8,128)}', space=vmem, size = 0x48000, scoped, tag = 'scratch operand']
  %s0 = inlined_call_operand.vmem [shape: f32[2,8,1024], index: 0, kind: input, shape index: {}]
  %s1 = inlined_call_operand.vmem [shape: f32[9,1024], index: 1, kind: input, shape index: {}]
  %s2 = inlined_call_operand.vmem [shape: f32[8,72], index: 2, kind: input, shape index: {}]
  %s3 = inlined_call_operand.vmem [shape: f32[8,72], index: 3, kind: input, shape index: {}]
  %s4 = inlined_call_operand.vmem [shape: f32[8,8], index: 4, kind: input, shape index: {}]
  %s5 = inlined_call_operand.vmem [shape: f32[8,1], index: 5, kind: input, shape index: {}]
  %s6 = inlined_call_operand.vmem [shape: f32[8,1], index: 6, kind: input, shape index: {}]
  %s7 = inlined_call_operand.vmem [shape: f32[8,1], index: 7, kind: input, shape index: {}]
  %s8 = inlined_call_operand.vmem [shape: f32[8,1], index: 8, kind: input, shape index: {}]
  %s9 = inlined_call_operand.vmem [shape: f32[2,8,1024], index: 9, kind: output, shape index: {}]
  %s10 = sld [smem:[#allocation0]]
  $region69: #{_lambda_.1} parent=0
    _
  %s12 = ssub.s32 1, %s10
  %s13 = scalar_select 0, %s12, %s10
  loop: start=0, step=1, limit=4
  $region2: #{_lambda_.1} parent=0 // loop_pre_header
    _
  $region3: #{_lambda_.1} parent=0 // loop_header
    %s15 = sphi 0, %s19
    %p16 = scmp.ge.s32.totalorder %s15, 4
    %s25 = sphi 0, %s27
    %s28 = sphi 0, %s25
    %s29 = sphi 0, %s28
    %s45 = sphi 0, %s29
    %s49 = sphi 0, %s49
    %s51 = sphi 0, %s49
    %s52 = sphi 0, %s51
    %s66 = sphi 0, %s52
    %s70 = sphi 0, %s70
    %s72 = sphi 0, %s70
    %s73 = sphi 0, %s72
    %s87 = sphi 0, %s73
    %s91 = sphi 0, %s91
    %s93 = sphi 0, %s91
    %s94 = sphi 0, %s93
    %s108 = sphi 0, %s94
    %s112 = sphi 0, %s112
    %s114 = sphi 0, %s112
    %s115 = sphi 0, %s114
    %s129 = sphi 0, %s115
    %s133 = sphi 0, %s133
    %s135 = sphi 0, %s133
    %s136 = sphi 0, %s135
    %s150 = sphi 0, %s136
    %s154 = sphi 0, %s154
    %s156 = sphi 0, %s154
    %s157 = sphi 0, %s156
    %s171 = sphi 0, %s157
    %s175 = sphi 0, %s175
    %s177 = sphi 0, %s175
    %s178 = sphi 0, %s177
    %s192 = sphi 0, %s178
    %s196 = sphi 0, %s196
    %s198 = sphi 0, %s196
    %s199 = sphi 0, %s198
    %s213 = sphi 0, %s199
    %s219 = sphi 0, %s221
    %s222 = sphi 0, %s219
    %s223 = sphi 0, %s222
    %s239 = sphi 0, %s223
  $region4: #{_lambda_.1} parent=0 // loop_header_branch
    %18 = sbr.rel (%p16) target = $region8
  $region5: #{_lambda_.1} parent=0 // loop_body
    %s20 = ssub.s32 %s15, 1
    %s21 = ssub.s32 %s15, 2
    %s22 = sadd.s32 %s15, 1
    %s23 = ssub.s32 %s15, %s22
    %p24 = scmp.eq.s32.totalorder %s23, 0
    %s26 = sadd.s32 %s25, 1
    %s27 = scalar_select %p24, %s25, %s26
    %p30 = pneg %p24
    %p31 = scmp.eq.s32.totalorder %s15, 1
    %p32 = por %p30, %p31
    %p33 = scmp.ne.s32.totalorder %s25, %s28
    %p34 = scmp.eq.s32.totalorder %s15, 0
    %p35 = por %p33, %p34
    %p36 = scmp.ne.s32.totalorder %s25, %s28
    %p37 = scmp.eq.s32.totalorder %s20, 1
    %p38 = por %p36, %p37
    %p39 = scmp.ne.s32.totalorder %s28, %s29
    %p40 = scmp.eq.s32.totalorder %s20, 0
    %p41 = por %p39, %p40
    %p42 = scmp.ne.s32.totalorder %s28, %s29
    %p43 = scmp.eq.s32.totalorder %s21, 1
    %p44 = por %p42, %p43
    %p46 = scmp.ne.s32.totalorder %s29, %s45
    %p47 = scmp.eq.s32.totalorder %s21, 0
    %p48 = por %p46, %p47
    %s50 = sadd.s32 %s49, 1
    %p53 = scmp.eq.s32.totalorder %s15, 1
    %p54 = scmp.ne.s32.totalorder %s49, %s51
    %p55 = scmp.eq.s32.totalorder %s15, 0
    %p56 = por %p54, %p55
    %p57 = scmp.ne.s32.totalorder %s49, %s51
    %p58 = scmp.eq.s32.totalorder %s20, 1
    %p59 = por %p57, %p58
    %p60 = scmp.ne.s32.totalorder %s51, %s52
    %p61 = scmp.eq.s32.totalorder %s20, 0
    %p62 = por %p60, %p61
    %p63 = scmp.ne.s32.totalorder %s51, %s52
    %p64 = scmp.eq.s32.totalorder %s21, 1
    %p65 = por %p63, %p64
    %p67 = scmp.ne.s32.totalorder %s52, %s66
    %p68 = scmp.eq.s32.totalorder %s21, 0
    %p69 = por %p67, %p68
    %s71 = sadd.s32 %s70, 1
    %p74 = scmp.eq.s32.totalorder %s15, 1
    %p75 = scmp.ne.s32.totalorder %s70, %s72
    %p76 = scmp.eq.s32.totalorder %s15, 0
    %p77 = por %p75, %p76
    %p78 = scmp.ne.s32.totalorder %s70, %s72
    %p79 = scmp.eq.s32.totalorder %s20, 1
    %p80 = por %p78, %p79
    %p81 = scmp.ne.s32.totalorder %s72, %s73
    %p82 = scmp.eq.s32.totalorder %s20, 0
    %p83 = por %p81, %p82
    %p84 = scmp.ne.s32.totalorder %s72, %s73
    %p85 = scmp.eq.s32.totalorder %s21, 1
    %p86 = por %p84, %p85
    %p88 = scmp.ne.s32.totalorder %s73, %s87
    %p89 = scmp.eq.s32.totalorder %s21, 0
    %p90 = por %p88, %p89
    %s92 = sadd.s32 %s91, 1
    %p95 = scmp.eq.s32.totalorder %s15, 1
    %p96 = scmp.ne.s32.totalorder %s91, %s93
    %p97 = scmp.eq.s32.totalorder %s15, 0
    %p98 = por %p96, %p97
    %p99 = scmp.ne.s32.totalorder %s91, %s93
    %p100 = scmp.eq.s32.totalorder %s20, 1
    %p101 = por %p99, %p100
    %p102 = scmp.ne.s32.totalorder %s93, %s94
    %p103 = scmp.eq.s32.totalorder %s20, 0
    %p104 = por %p102, %p103
    %p105 = scmp.ne.s32.totalorder %s93, %s94
    %p106 = scmp.eq.s32.totalorder %s21, 1
    %p107 = por %p105, %p106
    %p109 = scmp.ne.s32.totalorder %s94, %s108
    %p110 = scmp.eq.s32.totalorder %s21, 0
    %p111 = por %p109, %p110
    %s113 = sadd.s32 %s112, 1
    %p116 = scmp.eq.s32.totalorder %s15, 1
    %p117 = scmp.ne.s32.totalorder %s112, %s114
    %p118 = scmp.eq.s32.totalorder %s15, 0
    %p119 = por %p117, %p118
    %p120 = scmp.ne.s32.totalorder %s112, %s114
    %p121 = scmp.eq.s32.totalorder %s20, 1
    %p122 = por %p120, %p121
    %p123 = scmp.ne.s32.totalorder %s114, %s115
    %p124 = scmp.eq.s32.totalorder %s20, 0
    %p125 = por %p123, %p124
    %p126 = scmp.ne.s32.totalorder %s114, %s115
    %p127 = scmp.eq.s32.totalorder %s21, 1
    %p128 = por %p126, %p127
    %p130 = scmp.ne.s32.totalorder %s115, %s129
    %p131 = scmp.eq.s32.totalorder %s21, 0
    %p132 = por %p130, %p131
    %s134 = sadd.s32 %s133, 1
    %p137 = scmp.eq.s32.totalorder %s15, 1
    %p138 = scmp.ne.s32.totalorder %s133, %s135
    %p139 = scmp.eq.s32.totalorder %s15, 0
    %p140 = por %p138, %p139
    %p141 = scmp.ne.s32.totalorder %s133, %s135
    %p142 = scmp.eq.s32.totalorder %s20, 1
    %p143 = por %p141, %p142
    %p144 = scmp.ne.s32.totalorder %s135, %s136
    %p145 = scmp.eq.s32.totalorder %s20, 0
    %p146 = por %p144, %p145
    %p147 = scmp.ne.s32.totalorder %s135, %s136
    %p148 = scmp.eq.s32.totalorder %s21, 1
    %p149 = por %p147, %p148
    %p151 = scmp.ne.s32.totalorder %s136, %s150
    %p152 = scmp.eq.s32.totalorder %s21, 0
    %p153 = por %p151, %p152
    %s155 = sadd.s32 %s154, 1
    %p158 = scmp.eq.s32.totalorder %s15, 1
    %p159 = scmp.ne.s32.totalorder %s154, %s156
    %p160 = scmp.eq.s32.totalorder %s15, 0
    %p161 = por %p159, %p160
    %p162 = scmp.ne.s32.totalorder %s154, %s156
    %p163 = scmp.eq.s32.totalorder %s20, 1
    %p164 = por %p162, %p163
    %p165 = scmp.ne.s32.totalorder %s156, %s157
    %p166 = scmp.eq.s32.totalorder %s20, 0
    %p167 = por %p165, %p166
    %p168 = scmp.ne.s32.totalorder %s156, %s157
    %p169 = scmp.eq.s32.totalorder %s21, 1
    %p170 = por %p168, %p169
    %p172 = scmp.ne.s32.totalorder %s157, %s171
    %p173 = scmp.eq.s32.totalorder %s21, 0
    %p174 = por %p172, %p173
    %s176 = sadd.s32 %s175, 1
    %p179 = scmp.eq.s32.totalorder %s15, 1
    %p180 = scmp.ne.s32.totalorder %s175, %s177
    %p181 = scmp.eq.s32.totalorder %s15, 0
    %p182 = por %p180, %p181
    %p183 = scmp.ne.s32.totalorder %s175, %s177
    %p184 = scmp.eq.s32.totalorder %s20, 1
    %p185 = por %p183, %p184
    %p186 = scmp.ne.s32.totalorder %s177, %s178
    %p187 = scmp.eq.s32.totalorder %s20, 0
    %p188 = por %p186, %p187
    %p189 = scmp.ne.s32.totalorder %s177, %s178
    %p190 = scmp.eq.s32.totalorder %s21, 1
    %p191 = por %p189, %p190
    %p193 = scmp.ne.s32.totalorder %s178, %s192
    %p194 = scmp.eq.s32.totalorder %s21, 0
    %p195 = por %p193, %p194
    %s197 = sadd.s32 %s196, 1
    %p200 = scmp.eq.s32.totalorder %s15, 1
    %p201 = scmp.ne.s32.totalorder %s196, %s198
    %p202 = scmp.eq.s32.totalorder %s15, 0
    %p203 = por %p201, %p202
    %p204 = scmp.ne.s32.totalorder %s196, %s198
    %p205 = scmp.eq.s32.totalorder %s20, 1
    %p206 = por %p204, %p205
    %p207 = scmp.ne.s32.totalorder %s198, %s199
    %p208 = scmp.eq.s32.totalorder %s20, 0
    %p209 = por %p207, %p208
    %p210 = scmp.ne.s32.totalorder %s198, %s199
    %p211 = scmp.eq.s32.totalorder %s21, 1
    %p212 = por %p210, %p211
    %p214 = scmp.ne.s32.totalorder %s199, %s213
    %p215 = scmp.eq.s32.totalorder %s21, 0
    %p216 = por %p214, %p215
    %s217 = ssub.s32 %s15, %s22
    %p218 = scmp.eq.s32.totalorder %s217, 0
    %s220 = sadd.s32 %s219, 1
    %s221 = scalar_select %p218, %s219, %s220
    %p224 = pneg %p218
    %p225 = scmp.eq.s32.totalorder %s15, 1
    %p226 = por %p224, %p225
    %p227 = scmp.ne.s32.totalorder %s219, %s222
    %p228 = scmp.eq.s32.totalorder %s15, 0
    %p229 = por %p227, %p228
    %p230 = scmp.ne.s32.totalorder %s219, %s222
    %p231 = scmp.eq.s32.totalorder %s20, 1
    %p232 = por %p230, %p231
    %p233 = scmp.ne.s32.totalorder %s222, %s223
    %p234 = scmp.eq.s32.totalorder %s20, 0
    %p235 = por %p233, %p234
    %p236 = scmp.ne.s32.totalorder %s222, %s223
    %p237 = scmp.eq.s32.totalorder %s21, 1
    %p238 = por %p236, %p237
    %p240 = scmp.ne.s32.totalorder %s223, %s239
    %p241 = scmp.eq.s32.totalorder %s21, 0
    %p242 = por %p240, %p241
    %p243 = scmp.le.s32.totalorder 1, %s15
    %p244 = scmp.lt.s32.totalorder %s15, 3
    %p245 = pnand %p243, %p244
    %p246 = pneg %p245
    // Predicated region
    $region9: #{_lambda_.1} parent=5 // pred_check
      _
    $region10: #{_lambda_.1} parent=5 // pred_check_branch
      %248 = sbr.rel (%p245) target = $region12
    $region11: #{_lambda_.1} parent=5 // pred_region
      %s249 = ssub.s32 %s15, 1
      // Predicated region
      $region13: #{_lambda_.1} parent=11 // pred_check
        %p250 = pneg %p62
      $region14: #{_lambda_.1} parent=11 // pred_check_branch
        %252 = sbr.rel (%p250) target = $region16
      $region15: #{_lambda_.1} parent=11 // pred_region
        _
      $region16: #{_lambda_.1} parent=11 // pred_fallthru
        _
      // Predicated region
      $region17: #{_lambda_.1} parent=11 // pred_check
        %p253 = pneg %p83
      $region18: #{_lambda_.1} parent=11 // pred_check_branch
        %255 = sbr.rel (%p253) target = $region20
      $region19: #{_lambda_.1} parent=11 // pred_region
        _
      $region20: #{_lambda_.1} parent=11 // pred_fallthru
        _
      // Predicated region
      $region21: #{_lambda_.1} parent=11 // pred_check
        %p256 = pneg %p104
      $region22: #{_lambda_.1} parent=11 // pred_check_branch
        %258 = sbr.rel (%p256) target = $region24
      $region23: #{_lambda_.1} parent=11 // pred_region
        _
      $region24: #{_lambda_.1} parent=11 // pred_fallthru
        _
      // Predicated region
      $region25: #{_lambda_.1} parent=11 // pred_check
        %p259 = pneg %p125
      $region26: #{_lambda_.1} parent=11 // pred_check_branch
        %261 = sbr.rel (%p259) target = $region28
      $region27: #{_lambda_.1} parent=11 // pred_region
        _
      $region28: #{_lambda_.1} parent=11 // pred_fallthru
        _
      // Predicated region
      $region29: #{_lambda_.1} parent=11 // pred_check
        %p262 = pneg %p146
      $region30: #{_lambda_.1} parent=11 // pred_check_branch
        %264 = sbr.rel (%p262) target = $region32
      $region31: #{_lambda_.1} parent=11 // pred_region
        _
      $region32: #{_lambda_.1} parent=11 // pred_fallthru
        _
      // Predicated region
      $region33: #{_lambda_.1} parent=11 // pred_check
        %p265 = pneg %p167
      $region34: #{_lambda_.1} parent=11 // pred_check_branch
        %267 = sbr.rel (%p265) target = $region36
      $region35: #{_lambda_.1} parent=11 // pred_region
        _
      $region36: #{_lambda_.1} parent=11 // pred_fallthru
        _
      // Predicated region
      $region37: #{_lambda_.1} parent=11 // pred_check
        %p268 = pneg %p188
      $region38: #{_lambda_.1} parent=11 // pred_check_branch
        %270 = sbr.rel (%p268) target = $region40
      $region39: #{_lambda_.1} parent=11 // pred_region
        _
      $region40: #{_lambda_.1} parent=11 // pred_fallthru
        _
      // Predicated region
      $region41: #{_lambda_.1} parent=11 // pred_check
        %p271 = pneg %p209
      $region42: #{_lambda_.1} parent=11 // pred_check_branch
        %273 = sbr.rel (%p271) target = $region44
      $region43: #{_lambda_.1} parent=11 // pred_region
        _
      $region44: #{_lambda_.1} parent=11 // pred_fallthru
        _
    $region12: #{_lambda_.1} parent=5 // pred_fallthru
      _
    %p274 = scmp.lt.s32.totalorder %s15, 2
    // Predicated region
    $region45: #{_lambda_.1} parent=5 // pred_check
      %p275 = pneg %p274
    $region46: #{_lambda_.1} parent=5 // pred_check_branch
      %277 = sbr.rel (%p275) target = $region48
    $region47: #{_lambda_.1} parent=5 // pred_region
      // Predicated region
      $region49: #{_lambda_.1} parent=47 // pred_check
        %p278 = pneg %p35
      $region50: #{_lambda_.1} parent=47 // pred_check_branch
        %280 = sbr.rel (%p278) target = $region52
      $region51: #{_lambda_.1} parent=47 // pred_region
        %p281 = scmp.lt.s32.totalorder %s15, 1
        %s282 = scalar_select %p281, %s15, 1
        %s283 = smul.addr %s282, 8
        %s284 = smul.addr %s283, 8
        %s285 = scalar_lea.vmem %s0, %s284
      $region52: #{_lambda_.1} parent=47 // pred_fallthru
        _
    $region48: #{_lambda_.1} parent=5 // pred_fallthru
      _
    %p286 = scmp.le.s32.totalorder 1, %s15
    %p287 = scmp.lt.s32.totalorder %s15, 3
    %p288 = pnand %p286, %p287
    %p289 = pneg %p288
    // Predicated region
    $region53: #{_lambda_.1} parent=5 // pred_check
      _
    $region54: #{_lambda_.1} parent=5 // pred_check_branch
      %291 = sbr.rel (%p288) target = $region56
    $region55: #{_lambda_.1} parent=5 // pred_region
      %s292 = ssub.s32 %s15, 1
      %p293 = scmp.lt.s32.totalorder %s20, 1
      %s294 = scalar_select %p293, %s20, 1
      %s295 = smul.addr %s294, 8
      %s296 = smul.addr %s295, 8
      %s297 = scalar_lea.vmem %s0, %s296
      %p298 = pneg %p41
      %p299 = pneg %p38
      %p300 = pneg %p62
      %p301 = pneg %p59
      %p302 = pneg %p83
      %p303 = pneg %p80
      %p304 = pneg %p104
      %p305 = pneg %p101
      %p306 = pneg %p125
      %p307 = pneg %p122
      %p308 = pneg %p146
      %p309 = pneg %p143
      %p310 = pneg %p167
      %p311 = pneg %p164
      %p312 = pneg %p188
      %p313 = pneg %p185
      %p314 = pneg %p209
      %p315 = pneg %p206
      %p316 = pneg %p235
      %p317 = pneg %p232
      %p318 = scmp.lt.s32.totalorder %s20, 1
      %s319 = scalar_select %p318, %s20, 1
      %s320 = smul.addr %s319, 8
      %s321 = smul.addr %s320, 8
      %s322 = scalar_lea.vmem %s9, %s321
      %p323 = scmp.lt.s32.totalorder %s20, 1
      %s324 = scalar_select %p323, %s20, 1
      %s325 = smul.addr %s324, 8
      %s326 = smul.addr %s325, 8
      %s327 = scalar_lea.vmem %s0, %s326
      %p328 = scmp.lt.s32.totalorder %s20, 1
      %s329 = scalar_select %p328, %s20, 1
      %s330 = smul.addr %s329, 8
      %s331 = smul.addr %s330, 8
      %s332 = scalar_lea.vmem %s9, %s331
      %v333 = vld [vmem:[%s327] sm:$0xff]
      %v334 = vld [vmem:[%s327 + $0x8] sm:$0xff]
      %v335 = vld [vmem:[%s327 + $0x10] sm:$0xff]
      %v336 = vld [vmem:[%s327 + $0x18] sm:$0xff]
      %v337 = vld [vmem:[%s327 + $0x20] sm:$0xff]
      %v338 = vld [vmem:[%s327 + $0x28] sm:$0xff]
      %v339 = vld [vmem:[%s327 + $0x30] sm:$0xff]
      %v340 = vld [vmem:[%s327 + $0x38] sm:$0xff]
      %v341 = vlaneseq
      %v342 = vshrl.u32 %v341, 7
      %vm343 = vcmp.lt.s32.totalorder %v342, 4
      %v344 = vmax.f32 %v333, 0.0
      %v345 = vmax.f32 %v334, 0.0
      %v346 = vmax.f32 %v335, 0.0
      %v347 = vmax.f32 %v336, 0.0
      %v348 = vmax.f32 %v337, 0.0
      %v349 = vmax.f32 %v338, 0.0
      %v350 = vmax.f32 %v339, 0.0
      %v351 = vmax.f32 %v340, 0.0
      %v352 = vsel %vm343, %v344, %v333
      %v353 = vsel %vm343, %v345, %v334
      %v354 = vsel %vm343, %v346, %v335
      %v355 = vsel %vm343, %v347, %v336
      %v356 = vsel %vm343, %v348, %v337
      %v357 = vsel %vm343, %v349, %v338
      %v358 = vsel %vm343, %v350, %v339
      %v359 = vsel %vm343, %v351, %v340
      %361 = vrot.lane.b32.xlu0 %v359, 33
      %v362 = vpop.permute.xlu0 %361
      %371 = vrot.lane.b32.xlu0 %v352, 33
      %v372 = vpop.permute.xlu0 %371
      %373 = vrot.lane.b32.xlu0 %v353, 33
      %v374 = vpop.permute.xlu0 %373
      %375 = vrot.lane.b32.xlu0 %v354, 33
      %v376 = vpop.permute.xlu0 %375
      %377 = vrot.lane.b32.xlu0 %v355, 33
      %v378 = vpop.permute.xlu0 %377
      %379 = vrot.lane.b32.xlu0 %v356, 33
      %v380 = vpop.permute.xlu0 %379
      %381 = vrot.lane.b32.xlu0 %v357, 33
      %v382 = vpop.permute.xlu0 %381
      %383 = vrot.lane.b32.xlu0 %v358, 33
      %v384 = vpop.permute.xlu0 %383
      %vm385 = vcmask 269312
      %v386 = vsel %vm385, %v372, %v374
      %v387 = vsel %vm385, %v374, %v376
      %v388 = vsel %vm385, %v376, %v378
      %v389 = vsel %vm385, %v378, %v380
      %v390 = vsel %vm385, %v380, %v382
      %v391 = vsel %vm385, %v382, %v384
      %v392 = vsel %vm385, %v384, %v362
      %v401 = vsel %vm385, %v362, %v372
      %v402 = vld [vmem:[%s1] ss:$8 sm:$0xf]
      %v403 = vld [vmem:[%s1] ss:$8 sm:$0xf0]
      %v404 = vor.u32 %v402, %v403
      %v406 = vlaneseq
      %v407 = vshrl.u32 %v406, 7
      %v408 = vsub.s32 0, %v407
      %v409 = vrot.slane %v404, %v408
      %v410 = vlaneseq
      %v411 = vshrl.u32 %v410, 7
      %v412 = vsub.s32 1, %v411
      %v413 = vrot.slane %v404, %v412
      %v414 = vlaneseq
      %v415 = vshrl.u32 %v414, 7
      %v416 = vsub.s32 2, %v415
      %v417 = vrot.slane %v404, %v416
      %v418 = vlaneseq
      %v419 = vshrl.u32 %v418, 7
      %v420 = vsub.s32 3, %v419
      %v421 = vrot.slane %v404, %v420
      %v422 = vlaneseq
      %v423 = vshrl.u32 %v422, 7
      %v424 = vsub.s32 4, %v423
      %v425 = vrot.slane %v404, %v424
      %v426 = vlaneseq
      %v427 = vshrl.u32 %v426, 7
      %v428 = vsub.s32 5, %v427
      %v429 = vrot.slane %v404, %v428
      %v430 = vlaneseq
      %v431 = vshrl.u32 %v430, 7
      %v432 = vsub.s32 6, %v431
      %v433 = vrot.slane %v404, %v432
      %v434 = vlaneseq
      %v435 = vshrl.u32 %v434, 7
      %v436 = vsub.s32 7, %v435
      %v437 = vrot.slane %v404, %v436
      %v446 = vmul.f32 %v401, %v409
      %v447 = vmul.f32 %v386, %v413
      %v448 = vmul.f32 %v387, %v417
      %v449 = vmul.f32 %v388, %v421
      %v450 = vmul.f32 %v389, %v425
      %v451 = vmul.f32 %v390, %v429
      %v452 = vmul.f32 %v391, %v433
      %v453 = vmul.f32 %v392, %v437
      %454 = vst [vmem:[#allocation2] sm:$0xff] %v446
      %455 = vst [vmem:[#allocation2 + $0x8] sm:$0xff] %v447
      %456 = vst [vmem:[#allocation2 + $0x10] sm:$0xff] %v448
      %457 = vst [vmem:[#allocation2 + $0x18] sm:$0xff] %v449
      %458 = vst [vmem:[#allocation2 + $0x20] sm:$0xff] %v450
      %459 = vst [vmem:[#allocation2 + $0x28] sm:$0xff] %v451
      %460 = vst [vmem:[#allocation2 + $0x30] sm:$0xff] %v452
      %461 = vst [vmem:[#allocation2 + $0x38] sm:$0xff] %v453
      %462 = vrot.lane.b32.xlu0 %v359, 32
      %v463 = vpop.permute.xlu0 %462
      %465 = vrot.lane.b32.xlu0 %v352, 32
      %v466 = vpop.permute.xlu0 %465
      %467 = vrot.lane.b32.xlu0 %v353, 32
      %v468 = vpop.permute.xlu0 %467
      %469 = vrot.lane.b32.xlu0 %v354, 32
      %v470 = vpop.permute.xlu0 %469
      %471 = vrot.lane.b32.xlu0 %v355, 32
      %v472 = vpop.permute.xlu0 %471
      %473 = vrot.lane.b32.xlu0 %v356, 32
      %v474 = vpop.permute.xlu0 %473
      %475 = vrot.lane.b32.xlu0 %v357, 32
      %v476 = vpop.permute.xlu0 %475
      %477 = vrot.lane.b32.xlu0 %v358, 32
      %v478 = vpop.permute.xlu0 %477
      %vm479 = vcmask 261120
      %v480 = vsel %vm479, %v466, %v468
      %v481 = vsel %vm479, %v468, %v470
      %v482 = vsel %vm479, %v470, %v472
      %v483 = vsel %vm479, %v472, %v474
      %v484 = vsel %vm479, %v474, %v476
      %v485 = vsel %vm479, %v476, %v478
      %v486 = vsel %vm479, %v478, %v463
      %v495 = vsel %vm479, %v463, %v466
      %s496 = scalar_lea.vmem %s1, 1
      %v497 = vld [vmem:[%s496] ss:$8 sm:$0xf]
      %v498 = vld [vmem:[%s496] ss:$8 sm:$0xf0]
      %v499 = vor.u32 %v497, %v498
      %v501 = vlaneseq
      %v502 = vshrl.u32 %v501, 7
      %v503 = vsub.s32 0, %v502
      %v504 = vrot.slane %v499, %v503
      %v505 = vlaneseq
      %v506 = vshrl.u32 %v505, 7
      %v507 = vsub.s32 1, %v506
      %v508 = vrot.slane %v499, %v507
      %v509 = vlaneseq
      %v510 = vshrl.u32 %v509, 7
      %v511 = vsub.s32 2, %v510
      %v512 = vrot.slane %v499, %v511
      %v513 = vlaneseq
      %v514 = vshrl.u32 %v513, 7
      %v515 = vsub.s32 3, %v514
      %v516 = vrot.slane %v499, %v515
      %v517 = vlaneseq
      %v518 = vshrl.u32 %v517, 7
      %v519 = vsub.s32 4, %v518
      %v520 = vrot.slane %v499, %v519
      %v521 = vlaneseq
      %v522 = vshrl.u32 %v521, 7
      %v523 = vsub.s32 5, %v522
      %v524 = vrot.slane %v499, %v523
      %v525 = vlaneseq
      %v526 = vshrl.u32 %v525, 7
      %v527 = vsub.s32 6, %v526
      %v528 = vrot.slane %v499, %v527
      %v529 = vlaneseq
      %v530 = vshrl.u32 %v529, 7
      %v531 = vsub.s32 7, %v530
      %v532 = vrot.slane %v499, %v531
      %v541 = vmul.f32 %v495, %v504
      %v542 = vmul.f32 %v480, %v508
      %v543 = vmul.f32 %v481, %v512
      %v544 = vmul.f32 %v482, %v516
      %v545 = vmul.f32 %v483, %v520
      %v546 = vmul.f32 %v484, %v524
      %v547 = vmul.f32 %v485, %v528
      %v548 = vmul.f32 %v486, %v532
      %549 = vst [vmem:[#allocation2 + $0x40] sm:$0xff] %v541
      %550 = vst [vmem:[#allocation2 + $0x48] sm:$0xff] %v542
      %551 = vst [vmem:[#allocation2 + $0x50] sm:$0xff] %v543
      %552 = vst [vmem:[#allocation2 + $0x58] sm:$0xff] %v544
      %553 = vst [vmem:[#allocation2 + $0x60] sm:$0xff] %v545
      %554 = vst [vmem:[#allocation2 + $0x68] sm:$0xff] %v546
      %555 = vst [vmem:[#allocation2 + $0x70] sm:$0xff] %v547
      %556 = vst [vmem:[#allocation2 + $0x78] sm:$0xff] %v548
      %557 = vrot.lane.b32.xlu0 %v359, 31
      %v558 = vpop.permute.xlu0 %557
      %560 = vrot.lane.b32.xlu0 %v352, 31
      %v561 = vpop.permute.xlu0 %560
      %562 = vrot.lane.b32.xlu0 %v353, 31
      %v563 = vpop.permute.xlu0 %562
      %564 = vrot.lane.b32.xlu0 %v354, 31
      %v565 = vpop.permute.xlu0 %564
      %566 = vrot.lane.b32.xlu0 %v355, 31
      %v567 = vpop.permute.xlu0 %566
      %568 = vrot.lane.b32.xlu0 %v356, 31
      %v569 = vpop.permute.xlu0 %568
      %570 = vrot.lane.b32.xlu0 %v357, 31
      %v571 = vpop.permute.xlu0 %570
      %572 = vrot.lane.b32.xlu0 %v358, 31
      %v573 = vpop.permute.xlu0 %572
      %vm574 = vcmask 252928
      %v575 = vsel %vm574, %v561, %v563
      %v576 = vsel %vm574, %v563, %v565
      %v577 = vsel %vm574, %v565, %v567
      %v578 = vsel %vm574, %v567, %v569
      %v579 = vsel %vm574, %v569, %v571
      %v580 = vsel %vm574, %v571, %v573
      %v581 = vsel %vm574, %v573, %v558
      %v590 = vsel %vm574, %v558, %v561
      %s591 = scalar_lea.vmem %s1, 2
      %v592 = vld [vmem:[%s591] ss:$8 sm:$0xf]
      %v593 = vld [vmem:[%s591] ss:$8 sm:$0xf0]
      %v594 = vor.u32 %v592, %v593
      %v596 = vlaneseq
      %v597 = vshrl.u32 %v596, 7
      %v598 = vsub.s32 0, %v597
      %v599 = vrot.slane %v594, %v598
      %v600 = vlaneseq
      %v601 = vshrl.u32 %v600, 7
      %v602 = vsub.s32 1, %v601
      %v603 = vrot.slane %v594, %v602
      %v604 = vlaneseq
      %v605 = vshrl.u32 %v604, 7
      %v606 = vsub.s32 2, %v605
      %v607 = vrot.slane %v594, %v606
      %v608 = vlaneseq
      %v609 = vshrl.u32 %v608, 7
      %v610 = vsub.s32 3, %v609
      %v611 = vrot.slane %v594, %v610
      %v612 = vlaneseq
      %v613 = vshrl.u32 %v612, 7
      %v614 = vsub.s32 4, %v613
      %v615 = vrot.slane %v594, %v614
      %v616 = vlaneseq
      %v617 = vshrl.u32 %v616, 7
      %v618 = vsub.s32 5, %v617
      %v619 = vrot.slane %v594, %v618
      %v620 = vlaneseq
      %v621 = vshrl.u32 %v620, 7
      %v622 = vsub.s32 6, %v621
      %v623 = vrot.slane %v594, %v622
      %v624 = vlaneseq
      %v625 = vshrl.u32 %v624, 7
      %v626 = vsub.s32 7, %v625
      %v627 = vrot.slane %v594, %v626
      %v636 = vmul.f32 %v590, %v599
      %v637 = vmul.f32 %v575, %v603
      %v638 = vmul.f32 %v576, %v607
      %v639 = vmul.f32 %v577, %v611
      %v640 = vmul.f32 %v578, %v615
      %v641 = vmul.f32 %v579, %v619
      %v642 = vmul.f32 %v580, %v623
      %v643 = vmul.f32 %v581, %v627
      %644 = vst [vmem:[#allocation2 + $0x80] sm:$0xff] %v636
      %645 = vst [vmem:[#allocation2 + $0x88] sm:$0xff] %v637
      %646 = vst [vmem:[#allocation2 + $0x90] sm:$0xff] %v638
      %647 = vst [vmem:[#allocation2 + $0x98] sm:$0xff] %v639
      %648 = vst [vmem:[#allocation2 + $0xa0] sm:$0xff] %v640
      %649 = vst [vmem:[#allocation2 + $0xa8] sm:$0xff] %v641
      %650 = vst [vmem:[#allocation2 + $0xb0] sm:$0xff] %v642
      %651 = vst [vmem:[#allocation2 + $0xb8] sm:$0xff] %v643
      %652 = vrot.lane.b32.xlu0 %v359, 1
      %v653 = vpop.permute.xlu0 %652
      %655 = vrot.lane.b32.xlu0 %v352, 1
      %v656 = vpop.permute.xlu0 %655
      %657 = vrot.lane.b32.xlu0 %v353, 1
      %v658 = vpop.permute.xlu0 %657
      %659 = vrot.lane.b32.xlu0 %v354, 1
      %v660 = vpop.permute.xlu0 %659
      %661 = vrot.lane.b32.xlu0 %v355, 1
      %v662 = vpop.permute.xlu0 %661
      %663 = vrot.lane.b32.xlu0 %v356, 1
      %v664 = vpop.permute.xlu0 %663
      %665 = vrot.lane.b32.xlu0 %v357, 1
      %v666 = vpop.permute.xlu0 %665
      %667 = vrot.lane.b32.xlu0 %v358, 1
      %v668 = vpop.permute.xlu0 %667
      %vm669 = vcmask 7168
      %v670 = vsel %vm669, %v656, %v658
      %v671 = vsel %vm669, %v658, %v660
      %v672 = vsel %vm669, %v660, %v662
      %v673 = vsel %vm669, %v662, %v664
      %v674 = vsel %vm669, %v664, %v666
      %v675 = vsel %vm669, %v666, %v668
      %v676 = vsel %vm669, %v668, %v653
      %v685 = vsel %vm669, %v653, %v656
      %s686 = scalar_lea.vmem %s1, 3
      %v687 = vld [vmem:[%s686] ss:$8 sm:$0xf]
      %v688 = vld [vmem:[%s686] ss:$8 sm:$0xf0]
      %v689 = vor.u32 %v687, %v688
      %v691 = vlaneseq
      %v692 = vshrl.u32 %v691, 7
      %v693 = vsub.s32 0, %v692
      %v694 = vrot.slane %v689, %v693
      %v695 = vlaneseq
      %v696 = vshrl.u32 %v695, 7
      %v697 = vsub.s32 1, %v696
      %v698 = vrot.slane %v689, %v697
      %v699 = vlaneseq
      %v700 = vshrl.u32 %v699, 7
      %v701 = vsub.s32 2, %v700
      %v702 = vrot.slane %v689, %v701
      %v703 = vlaneseq
      %v704 = vshrl.u32 %v703, 7
      %v705 = vsub.s32 3, %v704
      %v706 = vrot.slane %v689, %v705
      %v707 = vlaneseq
      %v708 = vshrl.u32 %v707, 7
      %v709 = vsub.s32 4, %v708
      %v710 = vrot.slane %v689, %v709
      %v711 = vlaneseq
      %v712 = vshrl.u32 %v711, 7
      %v713 = vsub.s32 5, %v712
      %v714 = vrot.slane %v689, %v713
      %v715 = vlaneseq
      %v716 = vshrl.u32 %v715, 7
      %v717 = vsub.s32 6, %v716
      %v718 = vrot.slane %v689, %v717
      %v719 = vlaneseq
      %v720 = vshrl.u32 %v719, 7
      %v721 = vsub.s32 7, %v720
      %v722 = vrot.slane %v689, %v721
      %v731 = vmul.f32 %v685, %v694
      %v732 = vmul.f32 %v670, %v698
      %v733 = vmul.f32 %v671, %v702
      %v734 = vmul.f32 %v672, %v706
      %v735 = vmul.f32 %v673, %v710
      %v736 = vmul.f32 %v674, %v714
      %v737 = vmul.f32 %v675, %v718
      %v738 = vmul.f32 %v676, %v722
      %739 = vst [vmem:[#allocation2 + $0xc0] sm:$0xff] %v731
      %740 = vst [vmem:[#allocation2 + $0xc8] sm:$0xff] %v732
      %741 = vst [vmem:[#allocation2 + $0xd0] sm:$0xff] %v733
      %742 = vst [vmem:[#allocation2 + $0xd8] sm:$0xff] %v734
      %743 = vst [vmem:[#allocation2 + $0xe0] sm:$0xff] %v735
      %744 = vst [vmem:[#allocation2 + $0xe8] sm:$0xff] %v736
      %745 = vst [vmem:[#allocation2 + $0xf0] sm:$0xff] %v737
      %746 = vst [vmem:[#allocation2 + $0xf8] sm:$0xff] %v738
      %747 = vst [vmem:[#allocation2 + $0x100] sm:$0xff] %v352
      %748 = vst [vmem:[#allocation2 + $0x108] sm:$0xff] %v353
      %749 = vst [vmem:[#allocation2 + $0x110] sm:$0xff] %v354
      %750 = vst [vmem:[#allocation2 + $0x118] sm:$0xff] %v355
      %751 = vst [vmem:[#allocation2 + $0x120] sm:$0xff] %v356
      %752 = vst [vmem:[#allocation2 + $0x128] sm:$0xff] %v357
      %753 = vst [vmem:[#allocation2 + $0x130] sm:$0xff] %v358
      %754 = vst [vmem:[#allocation2 + $0x138] sm:$0xff] %v359
      %755 = vrot.lane.b32.xlu0 %v352, 127
      %v756 = vpop.permute.xlu0 %755
      %757 = vrot.lane.b32.xlu0 %v353, 127
      %v758 = vpop.permute.xlu0 %757
      %759 = vrot.lane.b32.xlu0 %v354, 127
      %v760 = vpop.permute.xlu0 %759
      %761 = vrot.lane.b32.xlu0 %v355, 127
      %v762 = vpop.permute.xlu0 %761
      %763 = vrot.lane.b32.xlu0 %v356, 127
      %v764 = vpop.permute.xlu0 %763
      %765 = vrot.lane.b32.xlu0 %v357, 127
      %v766 = vpop.permute.xlu0 %765
      %767 = vrot.lane.b32.xlu0 %v358, 127
      %v768 = vpop.permute.xlu0 %767
      %769 = vrot.lane.b32.xlu0 %v359, 127
      %v770 = vpop.permute.xlu0 %769
      %vm771 = vcmask 1039360
      %v772 = vsel %vm771, %v756, %v758
      %v773 = vsel %vm771, %v758, %v760
      %v774 = vsel %vm771, %v760, %v762
      %v775 = vsel %vm771, %v762, %v764
      %v776 = vsel %vm771, %v764, %v766
      %v777 = vsel %vm771, %v766, %v768
      %v778 = vsel %vm771, %v768, %v770
      %v788 = vsel %vm771, %v770, %v756
      %s789 = scalar_lea.vmem %s1, 5
      %v790 = vld [vmem:[%s789] ss:$8 sm:$0xf]
      %v791 = vld [vmem:[%s789] ss:$8 sm:$0xf0]
      %v792 = vor.u32 %v790, %v791
      %v794 = vlaneseq
      %v795 = vshrl.u32 %v794, 7
      %v796 = vsub.s32 0, %v795
      %v797 = vrot.slane %v792, %v796
      %v798 = vlaneseq
      %v799 = vshrl.u32 %v798, 7
      %v800 = vsub.s32 1, %v799
      %v801 = vrot.slane %v792, %v800
      %v802 = vlaneseq
      %v803 = vshrl.u32 %v802, 7
      %v804 = vsub.s32 2, %v803
      %v805 = vrot.slane %v792, %v804
      %v806 = vlaneseq
      %v807 = vshrl.u32 %v806, 7
      %v808 = vsub.s32 3, %v807
      %v809 = vrot.slane %v792, %v808
      %v810 = vlaneseq
      %v811 = vshrl.u32 %v810, 7
      %v812 = vsub.s32 4, %v811
      %v813 = vrot.slane %v792, %v812
      %v814 = vlaneseq
      %v815 = vshrl.u32 %v814, 7
      %v816 = vsub.s32 5, %v815
      %v817 = vrot.slane %v792, %v816
      %v818 = vlaneseq
      %v819 = vshrl.u32 %v818, 7
      %v820 = vsub.s32 6, %v819
      %v821 = vrot.slane %v792, %v820
      %v822 = vlaneseq
      %v823 = vshrl.u32 %v822, 7
      %v824 = vsub.s32 7, %v823
      %v825 = vrot.slane %v792, %v824
      %v834 = vmul.f32 %v772, %v797
      %v835 = vmul.f32 %v773, %v801
      %v836 = vmul.f32 %v774, %v805
      %v837 = vmul.f32 %v775, %v809
      %v838 = vmul.f32 %v776, %v813
      %v839 = vmul.f32 %v777, %v817
      %v840 = vmul.f32 %v778, %v821
      %v841 = vmul.f32 %v788, %v825
      %842 = vst [vmem:[#allocation2 + $0x140] sm:$0xff] %v834
      %843 = vst [vmem:[#allocation2 + $0x148] sm:$0xff] %v835
      %844 = vst [vmem:[#allocation2 + $0x150] sm:$0xff] %v836
      %845 = vst [vmem:[#allocation2 + $0x158] sm:$0xff] %v837
      %846 = vst [vmem:[#allocation2 + $0x160] sm:$0xff] %v838
      %847 = vst [vmem:[#allocation2 + $0x168] sm:$0xff] %v839
      %848 = vst [vmem:[#allocation2 + $0x170] sm:$0xff] %v840
      %849 = vst [vmem:[#allocation2 + $0x178] sm:$0xff] %v841
      %850 = vrot.lane.b32.xlu0 %v352, 97
      %v851 = vpop.permute.xlu0 %850
      %852 = vrot.lane.b32.xlu0 %v353, 97
      %v853 = vpop.permute.xlu0 %852
      %854 = vrot.lane.b32.xlu0 %v354, 97
      %v855 = vpop.permute.xlu0 %854
      %856 = vrot.lane.b32.xlu0 %v355, 97
      %v857 = vpop.permute.xlu0 %856
      %858 = vrot.lane.b32.xlu0 %v356, 97
      %v859 = vpop.permute.xlu0 %858
      %860 = vrot.lane.b32.xlu0 %v357, 97
      %v861 = vpop.permute.xlu0 %860
      %862 = vrot.lane.b32.xlu0 %v358, 97
      %v863 = vpop.permute.xlu0 %862
      %864 = vrot.lane.b32.xlu0 %v359, 97
      %v865 = vpop.permute.xlu0 %864
      %vm866 = vcmask 793600
      %v867 = vsel %vm866, %v851, %v853
      %v868 = vsel %vm866, %v853, %v855
      %v869 = vsel %vm866, %v855, %v857
      %v870 = vsel %vm866, %v857, %v859
      %v871 = vsel %vm866, %v859, %v861
      %v872 = vsel %vm866, %v861, %v863
      %v873 = vsel %vm866, %v863, %v865
      %v883 = vsel %vm866, %v865, %v851
      %s884 = scalar_lea.vmem %s1, 6
      %v885 = vld [vmem:[%s884] ss:$8 sm:$0xf]
      %v886 = vld [vmem:[%s884] ss:$8 sm:$0xf0]
      %v887 = vor.u32 %v885, %v886
      %v889 = vlaneseq
      %v890 = vshrl.u32 %v889, 7
      %v891 = vsub.s32 0, %v890
      %v892 = vrot.slane %v887, %v891
      %v893 = vlaneseq
      %v894 = vshrl.u32 %v893, 7
      %v895 = vsub.s32 1, %v894
      %v896 = vrot.slane %v887, %v895
      %v897 = vlaneseq
      %v898 = vshrl.u32 %v897, 7
      %v899 = vsub.s32 2, %v898
      %v900 = vrot.slane %v887, %v899
      %v901 = vlaneseq
      %v902 = vshrl.u32 %v901, 7
      %v903 = vsub.s32 3, %v902
      %v904 = vrot.slane %v887, %v903
      %v905 = vlaneseq
      %v906 = vshrl.u32 %v905, 7
      %v907 = vsub.s32 4, %v906
      %v908 = vrot.slane %v887, %v907
      %v909 = vlaneseq
      %v910 = vshrl.u32 %v909, 7
      %v911 = vsub.s32 5, %v910
      %v912 = vrot.slane %v887, %v911
      %v913 = vlaneseq
      %v914 = vshrl.u32 %v913, 7
      %v915 = vsub.s32 6, %v914
      %v916 = vrot.slane %v887, %v915
      %v917 = vlaneseq
      %v918 = vshrl.u32 %v917, 7
      %v919 = vsub.s32 7, %v918
      %v920 = vrot.slane %v887, %v919
      %v929 = vmul.f32 %v867, %v892
      %v930 = vmul.f32 %v868, %v896
      %v931 = vmul.f32 %v869, %v900
      %v932 = vmul.f32 %v870, %v904
      %v933 = vmul.f32 %v871, %v908
      %v934 = vmul.f32 %v872, %v912
      %v935 = vmul.f32 %v873, %v916
      %v936 = vmul.f32 %v883, %v920
      %937 = vst [vmem:[#allocation2 + $0x180] sm:$0xff] %v929
      %938 = vst [vmem:[#allocation2 + $0x188] sm:$0xff] %v930
      %939 = vst [vmem:[#allocation2 + $0x190] sm:$0xff] %v931
      %940 = vst [vmem:[#allocation2 + $0x198] sm:$0xff] %v932
      %941 = vst [vmem:[#allocation2 + $0x1a0] sm:$0xff] %v933
      %942 = vst [vmem:[#allocation2 + $0x1a8] sm:$0xff] %v934
      %943 = vst [vmem:[#allocation2 + $0x1b0] sm:$0xff] %v935
      %944 = vst [vmem:[#allocation2 + $0x1b8] sm:$0xff] %v936
      %945 = vrot.lane.b32.xlu0 %v352, 96
      %v946 = vpop.permute.xlu0 %945
      %947 = vrot.lane.b32.xlu0 %v353, 96
      %v948 = vpop.permute.xlu0 %947
      %949 = vrot.lane.b32.xlu0 %v354, 96
      %v950 = vpop.permute.xlu0 %949
      %951 = vrot.lane.b32.xlu0 %v355, 96
      %v952 = vpop.permute.xlu0 %951
      %953 = vrot.lane.b32.xlu0 %v356, 96
      %v954 = vpop.permute.xlu0 %953
      %955 = vrot.lane.b32.xlu0 %v357, 96
      %v956 = vpop.permute.xlu0 %955
      %957 = vrot.lane.b32.xlu0 %v358, 96
      %v958 = vpop.permute.xlu0 %957
      %959 = vrot.lane.b32.xlu0 %v359, 96
      %v960 = vpop.permute.xlu0 %959
      %vm961 = vcmask 785408
      %v962 = vsel %vm961, %v946, %v948
      %v963 = vsel %vm961, %v948, %v950
      %v964 = vsel %vm961, %v950, %v952
      %v965 = vsel %vm961, %v952, %v954
      %v966 = vsel %vm961, %v954, %v956
      %v967 = vsel %vm961, %v956, %v958
      %v968 = vsel %vm961, %v958, %v960
      %v978 = vsel %vm961, %v960, %v946
      %s979 = scalar_lea.vmem %s1, 7
      %v980 = vld [vmem:[%s979] ss:$8 sm:$0xf]
      %v981 = vld [vmem:[%s979] ss:$8 sm:$0xf0]
      %v982 = vor.u32 %v980, %v981
      %v984 = vlaneseq
      %v985 = vshrl.u32 %v984, 7
      %v986 = vsub.s32 0, %v985
      %v987 = vrot.slane %v982, %v986
      %v988 = vlaneseq
      %v989 = vshrl.u32 %v988, 7
      %v990 = vsub.s32 1, %v989
      %v991 = vrot.slane %v982, %v990
      %v992 = vlaneseq
      %v993 = vshrl.u32 %v992, 7
      %v994 = vsub.s32 2, %v993
      %v995 = vrot.slane %v982, %v994
      %v996 = vlaneseq
      %v997 = vshrl.u32 %v996, 7
      %v998 = vsub.s32 3, %v997
      %v999 = vrot.slane %v982, %v998
      %v1000 = vlaneseq
      %v1001 = vshrl.u32 %v1000, 7
      %v1002 = vsub.s32 4, %v1001
      %v1003 = vrot.slane %v982, %v1002
      %v1004 = vlaneseq
      %v1005 = vshrl.u32 %v1004, 7
      %v1006 = vsub.s32 5, %v1005
      %v1007 = vrot.slane %v982, %v1006
      %v1008 = vlaneseq
      %v1009 = vshrl.u32 %v1008, 7
      %v1010 = vsub.s32 6, %v1009
      %v1011 = vrot.slane %v982, %v1010
      %v1012 = vlaneseq
      %v1013 = vshrl.u32 %v1012, 7
      %v1014 = vsub.s32 7, %v1013
      %v1015 = vrot.slane %v982, %v1014
      %v1024 = vmul.f32 %v962, %v987
      %v1025 = vmul.f32 %v963, %v991
      %v1026 = vmul.f32 %v964, %v995
      %v1027 = vmul.f32 %v965, %v999
      %v1028 = vmul.f32 %v966, %v1003
      %v1029 = vmul.f32 %v967, %v1007
      %v1030 = vmul.f32 %v968, %v1011
      %v1031 = vmul.f32 %v978, %v1015
      %1032 = vst [vmem:[#allocation2 + $0x1c0] sm:$0xff] %v1024
      %1033 = vst [vmem:[#allocation2 + $0x1c8] sm:$0xff] %v1025
      %1034 = vst [vmem:[#allocation2 + $0x1d0] sm:$0xff] %v1026
      %1035 = vst [vmem:[#allocation2 + $0x1d8] sm:$0xff] %v1027
      %1036 = vst [vmem:[#allocation2 + $0x1e0] sm:$0xff] %v1028
      %1037 = vst [vmem:[#allocation2 + $0x1e8] sm:$0xff] %v1029
      %1038 = vst [vmem:[#allocation2 + $0x1f0] sm:$0xff] %v1030
      %1039 = vst [vmem:[#allocation2 + $0x1f8] sm:$0xff] %v1031
      %1040 = vrot.lane.b32.xlu0 %v352, 95
      %v1041 = vpop.permute.xlu0 %1040
      %1042 = vrot.lane.b32.xlu0 %v353, 95
      %v1043 = vpop.permute.xlu0 %1042
      %1044 = vrot.lane.b32.xlu0 %v354, 95
      %v1045 = vpop.permute.xlu0 %1044
      %1046 = vrot.lane.b32.xlu0 %v355, 95
      %v1047 = vpop.permute.xlu0 %1046
      %1048 = vrot.lane.b32.xlu0 %v356, 95
      %v1049 = vpop.permute.xlu0 %1048
      %1050 = vrot.lane.b32.xlu0 %v357, 95
      %v1051 = vpop.permute.xlu0 %1050
      %1052 = vrot.lane.b32.xlu0 %v358, 95
      %v1053 = vpop.permute.xlu0 %1052
      %1054 = vrot.lane.b32.xlu0 %v359, 95
      %v1055 = vpop.permute.xlu0 %1054
      %vm1056 = vcmask 777216
      %v1057 = vsel %vm1056, %v1041, %v1043
      %v1058 = vsel %vm1056, %v1043, %v1045
      %v1059 = vsel %vm1056, %v1045, %v1047
      %v1060 = vsel %vm1056, %v1047, %v1049
      %v1061 = vsel %vm1056, %v1049, %v1051
      %v1062 = vsel %vm1056, %v1051, %v1053
      %v1063 = vsel %vm1056, %v1053, %v1055
      %v1073 = vsel %vm1056, %v1055, %v1041
      %s1074 = scalar_lea.vmem %s1, 64
      %v1075 = vld [vmem:[%s1074] ss:$8 sm:$0xf]
      %v1076 = vld [vmem:[%s1074] ss:$8 sm:$0xf0]
      %v1077 = vor.u32 %v1075, %v1076
      %v1079 = vlaneseq
      %v1080 = vshrl.u32 %v1079, 7
      %v1081 = vsub.s32 0, %v1080
      %v1082 = vrot.slane %v1077, %v1081
      %v1083 = vlaneseq
      %v1084 = vshrl.u32 %v1083, 7
      %v1085 = vsub.s32 1, %v1084
      %v1086 = vrot.slane %v1077, %v1085
      %v1087 = vlaneseq
      %v1088 = vshrl.u32 %v1087, 7
      %v1089 = vsub.s32 2, %v1088
      %v1090 = vrot.slane %v1077, %v1089
      %v1091 = vlaneseq
      %v1092 = vshrl.u32 %v1091, 7
      %v1093 = vsub.s32 3, %v1092
      %v1094 = vrot.slane %v1077, %v1093
      %v1095 = vlaneseq
      %v1096 = vshrl.u32 %v1095, 7
      %v1097 = vsub.s32 4, %v1096
      %v1098 = vrot.slane %v1077, %v1097
      %v1099 = vlaneseq
      %v1100 = vshrl.u32 %v1099, 7
      %v1101 = vsub.s32 5, %v1100
      %v1102 = vrot.slane %v1077, %v1101
      %v1103 = vlaneseq
      %v1104 = vshrl.u32 %v1103, 7
      %v1105 = vsub.s32 6, %v1104
      %v1106 = vrot.slane %v1077, %v1105
      %v1107 = vlaneseq
      %v1108 = vshrl.u32 %v1107, 7
      %v1109 = vsub.s32 7, %v1108
      %v1110 = vrot.slane %v1077, %v1109
      %v1119 = vmul.f32 %v1057, %v1082
      %v1120 = vmul.f32 %v1058, %v1086
      %v1121 = vmul.f32 %v1059, %v1090
      %v1122 = vmul.f32 %v1060, %v1094
      %v1123 = vmul.f32 %v1061, %v1098
      %v1124 = vmul.f32 %v1062, %v1102
      %v1125 = vmul.f32 %v1063, %v1106
      %v1126 = vmul.f32 %v1073, %v1110
      %1127 = vst [vmem:[#allocation2 + $0x200] sm:$0xff] %v1119
      %1128 = vst [vmem:[#allocation2 + $0x208] sm:$0xff] %v1120
      %1129 = vst [vmem:[#allocation2 + $0x210] sm:$0xff] %v1121
      %1130 = vst [vmem:[#allocation2 + $0x218] sm:$0xff] %v1122
      %1131 = vst [vmem:[#allocation2 + $0x220] sm:$0xff] %v1123
      %1132 = vst [vmem:[#allocation2 + $0x228] sm:$0xff] %v1124
      %1133 = vst [vmem:[#allocation2 + $0x230] sm:$0xff] %v1125
      %1134 = vst [vmem:[#allocation2 + $0x238] sm:$0xff] %v1126
      %v1135 = vld [vmem:[%s2] sm:$0xff]
      %v1136 = vld [vmem:[#allocation2] sm:$0xff]
      %v1137 = vld [vmem:[#allocation2 + $0x8] sm:$0xff]
      %v1138 = vld [vmem:[#allocation2 + $0x10] sm:$0xff]
      %v1139 = vld [vmem:[#allocation2 + $0x18] sm:$0xff]
      %v1140 = vld [vmem:[#allocation2 + $0x20] sm:$0xff]
      %v1141 = vld [vmem:[#allocation2 + $0x28] sm:$0xff]
      %v1142 = vld [vmem:[#allocation2 + $0x30] sm:$0xff]
      %v1143 = vld [vmem:[#allocation2 + $0x38] sm:$0xff]
      %v1144 = vld [vmem:[#allocation2 + $0x40] sm:$0xff]
      %v1145 = vld [vmem:[#allocation2 + $0x48] sm:$0xff]
      %v1146 = vld [vmem:[#allocation2 + $0x50] sm:$0xff]
      %v1147 = vld [vmem:[#allocation2 + $0x58] sm:$0xff]
      %v1148 = vld [vmem:[#allocation2 + $0x60] sm:$0xff]
      %v1149 = vld [vmem:[#allocation2 + $0x68] sm:$0xff]
      %v1150 = vld [vmem:[#allocation2 + $0x70] sm:$0xff]
      %v1151 = vld [vmem:[#allocation2 + $0x78] sm:$0xff]
      %v1152 = vld [vmem:[#allocation2 + $0x80] sm:$0xff]
      %v1153 = vld [vmem:[#allocation2 + $0x88] sm:$0xff]
      %v1154 = vld [vmem:[#allocation2 + $0x90] sm:$0xff]
      %v1155 = vld [vmem:[#allocation2 + $0x98] sm:$0xff]
      %v1156 = vld [vmem:[#allocation2 + $0xa0] sm:$0xff]
      %v1157 = vld [vmem:[#allocation2 + $0xa8] sm:$0xff]
      %v1158 = vld [vmem:[#allocation2 + $0xb0] sm:$0xff]
      %v1159 = vld [vmem:[#allocation2 + $0xb8] sm:$0xff]
      %v1160 = vld [vmem:[#allocation2 + $0xc0] sm:$0xff]
      %v1161 = vld [vmem:[#allocation2 + $0xc8] sm:$0xff]
      %v1162 = vld [vmem:[#allocation2 + $0xd0] sm:$0xff]
      %v1163 = vld [vmem:[#allocation2 + $0xd8] sm:$0xff]
      %v1164 = vld [vmem:[#allocation2 + $0xe0] sm:$0xff]
      %v1165 = vld [vmem:[#allocation2 + $0xe8] sm:$0xff]
      %v1166 = vld [vmem:[#allocation2 + $0xf0] sm:$0xff]
      %v1167 = vld [vmem:[#allocation2 + $0xf8] sm:$0xff]
      %v1168 = vld [vmem:[#allocation2 + $0x100] sm:$0xff]
      %v1169 = vld [vmem:[#allocation2 + $0x108] sm:$0xff]
      %v1170 = vld [vmem:[#allocation2 + $0x110] sm:$0xff]
      %v1171 = vld [vmem:[#allocation2 + $0x118] sm:$0xff]
      %v1172 = vld [vmem:[#allocation2 + $0x120] sm:$0xff]
      %v1173 = vld [vmem:[#allocation2 + $0x128] sm:$0xff]
      %v1174 = vld [vmem:[#allocation2 + $0x130] sm:$0xff]
      %v1175 = vld [vmem:[#allocation2 + $0x138] sm:$0xff]
      %v1176 = vld [vmem:[#allocation2 + $0x140] sm:$0xff]
      %v1177 = vld [vmem:[#allocation2 + $0x148] sm:$0xff]
      %v1178 = vld [vmem:[#allocation2 + $0x150] sm:$0xff]
      %v1179 = vld [vmem:[#allocation2 + $0x158] sm:$0xff]
      %v1180 = vld [vmem:[#allocation2 + $0x160] sm:$0xff]
      %v1181 = vld [vmem:[#allocation2 + $0x168] sm:$0xff]
      %v1182 = vld [vmem:[#allocation2 + $0x170] sm:$0xff]
      %v1183 = vld [vmem:[#allocation2 + $0x178] sm:$0xff]
      %v1184 = vld [vmem:[#allocation2 + $0x180] sm:$0xff]
      %v1185 = vld [vmem:[#allocation2 + $0x188] sm:$0xff]
      %v1186 = vld [vmem:[#allocation2 + $0x190] sm:$0xff]
      %v1187 = vld [vmem:[#allocation2 + $0x198] sm:$0xff]
      %v1188 = vld [vmem:[#allocation2 + $0x1a0] sm:$0xff]
      %v1189 = vld [vmem:[#allocation2 + $0x1a8] sm:$0xff]
      %v1190 = vld [vmem:[#allocation2 + $0x1b0] sm:$0xff]
      %v1191 = vld [vmem:[#allocation2 + $0x1b8] sm:$0xff]
      %v1192 = vld [vmem:[#allocation2 + $0x1c0] sm:$0xff]
      %v1193 = vld [vmem:[#allocation2 + $0x1c8] sm:$0xff]
      %v1194 = vld [vmem:[#allocation2 + $0x1d0] sm:$0xff]
      %v1195 = vld [vmem:[#allocation2 + $0x1d8] sm:$0xff]
      %v1196 = vld [vmem:[#allocation2 + $0x1e0] sm:$0xff]
      %v1197 = vld [vmem:[#allocation2 + $0x1e8] sm:$0xff]
      %v1198 = vld [vmem:[#allocation2 + $0x1f0] sm:$0xff]
      %v1199 = vld [vmem:[#allocation2 + $0x1f8] sm:$0xff]
      %v1200 = vld [vmem:[#allocation2 + $0x200] sm:$0xff]
      %v1201 = vld [vmem:[#allocation2 + $0x208] sm:$0xff]
      %v1202 = vld [vmem:[#allocation2 + $0x210] sm:$0xff]
      %v1203 = vld [vmem:[#allocation2 + $0x218] sm:$0xff]
      %v1204 = vld [vmem:[#allocation2 + $0x220] sm:$0xff]
      %v1205 = vld [vmem:[#allocation2 + $0x228] sm:$0xff]
      %v1206 = vld [vmem:[#allocation2 + $0x230] sm:$0xff]
      %v1207 = vld [vmem:[#allocation2 + $0x238] sm:$0xff]
      %vm1208 = vcmask 588800
      %v1210 = vsel %vm1208, %v1135, 0
      %1212 = vmatprep.subr.mxu0 %v1137
      %1213 = vmatpush1.msra.mxu0 %v1136
      %1214 = vmatprep.subr.mxu0 %v1145
      %1215 = vmatpush1.msra.mxu0 %v1144
      %1216 = vmatprep.subr.mxu0 %v1153
      %1217 = vmatpush1.msra.mxu0 %v1152
      %1218 = vmatprep.subr.mxu0 %v1161
      %1219 = vmatpush1.msra.mxu0 %v1160
      %1220 = vmatprep.subr.mxu0 %v1169
      %1221 = vmatpush1.msra.mxu0 %v1168
      %1222 = vmatprep.subr.mxu0 %v1177
      %1223 = vmatpush1.msra.mxu0 %v1176
      %1224 = vmatprep.subr.mxu0 %v1185
      %1225 = vmatpush1.msra.mxu0 %v1184
      %1226 = vmatprep.subr.mxu0 %v1193
      %1227 = vmatpush1.msra.mxu0 %v1192
      %1228 = vmatprep.subr.mxu0 %v1201
      %1229 = vmatpush1.msra.mxu0 %v1200
      %1230 = vmatprep.subr.mxu0 0.0
      %1231 = vmatpush1.msra.mxu0 0.0
      %1232 = vmatprep.subr.mxu0 0.0
      %1233 = vmatpush1.msra.mxu0 0.0
      %1234 = vmatprep.subr.mxu0 0.0
      %1235 = vmatpush1.msra.mxu0 0.0
      %1236 = vmatprep.subr.mxu0 0.0
      %1237 = vmatpush1.msra.mxu0 0.0
      %1238 = vmatprep.subr.mxu0 0.0
      %1239 = vmatpush1.msra.mxu0 0.0
      %1240 = vmatprep.subr.mxu0 0.0
      %1241 = vmatpush1.msra.mxu0 0.0
      %1242 = vmatprep.subr.mxu0 0.0
      %1243 = vmatpush1.msra.mxu0 0.0
      %1244 = vmatprep.subr.mxu0 0.0
      %1245 = vmatpush1.msra.mxu0 0.0
      %1246 = vmatprep.subr.mxu0 0.0
      %1247 = vmatpush1.msra.mxu0 0.0
      %1248 = vmatprep.subr.mxu0 0.0
      %1249 = vmatpush1.msra.mxu0 0.0
      %1250 = vmatprep.subr.mxu0 0.0
      %1251 = vmatpush1.msra.mxu0 0.0
      %1252 = vmatprep.subr.mxu0 0.0
      %1253 = vmatpush1.msra.mxu0 0.0
      %1254 = vmatprep.subr.mxu0 0.0
      %1255 = vmatpush1.msra.mxu0 0.0
      %1256 = vmatprep.subr.mxu0 0.0
      %1257 = vmatpush1.msra.mxu0 0.0
      %1258 = vmatprep.subr.mxu0 0.0
      %1259 = vmatpush1.msra.mxu0 0.0
      %1260 = vmatprep.subr.mxu0 0.0
      %1261 = vmatpush1.msra.mxu0 0.0
      %1262 = vmatprep.subr.mxu0 0.0
      %1263 = vmatpush1.msra.mxu0 0.0
      %1264 = vmatprep.subr.mxu0 0.0
      %1265 = vmatpush1.msra.mxu0 0.0
      %1266 = vmatprep.subr.mxu0 0.0
      %1267 = vmatpush1.msra.mxu0 0.0
      %1268 = vmatprep.subr.mxu0 0.0
      %1269 = vmatpush1.msra.mxu0 0.0
      %1270 = vmatprep.subr.mxu0 0.0
      %1271 = vmatpush1.msra.mxu0 0.0
      %1272 = vmatprep.subr.mxu0 0.0
      %1273 = vmatpush1.msra.mxu0 0.0
      %1274 = vmatprep.subr.mxu0 0.0
      %1275 = vmatpush1.msra.mxu0 0.0
      %1276 = vmatprep.mubr.f32.mxu0 0.0
      %1277 = vmatmul.mubr.f32.gmra.mrb[0].mxu0 %v1210
      %v1278 = vpop.f32.mrb[0].mxu0
      %v1279 = vadd.f32 0.0, %v1278
      %v1280 = vpop.f32.mrb[0].mxu0
      %v1281 = vadd.f32 0.0, %v1280
      %1282 = vdwg.mxu0
      %1283 = vmatprep.subr.mxu0 %v1139
      %1284 = vmatpush1.msra.mxu0 %v1138
      %1285 = vmatprep.subr.mxu0 %v1147
      %1286 = vmatpush1.msra.mxu0 %v1146
      %1287 = vmatprep.subr.mxu0 %v1155
      %1288 = vmatpush1.msra.mxu0 %v1154
      %1289 = vmatprep.subr.mxu0 %v1163
      %1290 = vmatpush1.msra.mxu0 %v1162
      %1291 = vmatprep.subr.mxu0 %v1171
      %1292 = vmatpush1.msra.mxu0 %v1170
      %1293 = vmatprep.subr.mxu0 %v1179
      %1294 = vmatpush1.msra.mxu0 %v1178
      %1295 = vmatprep.subr.mxu0 %v1187
      %1296 = vmatpush1.msra.mxu0 %v1186
      %1297 = vmatprep.subr.mxu0 %v1195
      %1298 = vmatpush1.msra.mxu0 %v1194
      %1299 = vmatprep.subr.mxu0 %v1203
      %1300 = vmatpush1.msra.mxu0 %v1202
      %1301 = vmatprep.subr.mxu0 0.0
      %1302 = vmatpush1.msra.mxu0 0.0
      %1303 = vmatprep.subr.mxu0 0.0
      %1304 = vmatpush1.msra.mxu0 0.0
      %1305 = vmatprep.subr.mxu0 0.0
      %1306 = vmatpush1.msra.mxu0 0.0
      %1307 = vmatprep.subr.mxu0 0.0
      %1308 = vmatpush1.msra.mxu0 0.0
      %1309 = vmatprep.subr.mxu0 0.0
      %1310 = vmatpush1.msra.mxu0 0.0
      %1311 = vmatprep.subr.mxu0 0.0
      %1312 = vmatpush1.msra.mxu0 0.0
      %1313 = vmatprep.subr.mxu0 0.0
      %1314 = vmatpush1.msra.mxu0 0.0
      %1315 = vmatprep.subr.mxu0 0.0
      %1316 = vmatpush1.msra.mxu0 0.0
      %1317 = vmatprep.subr.mxu0 0.0
      %1318 = vmatpush1.msra.mxu0 0.0
      %1319 = vmatprep.subr.mxu0 0.0
      %1320 = vmatpush1.msra.mxu0 0.0
      %1321 = vmatprep.subr.mxu0 0.0
      %1322 = vmatpush1.msra.mxu0 0.0
      %1323 = vmatprep.subr.mxu0 0.0
      %1324 = vmatpush1.msra.mxu0 0.0
      %1325 = vmatprep.subr.mxu0 0.0
      %1326 = vmatpush1.msra.mxu0 0.0
      %1327 = vmatprep.subr.mxu0 0.0
      %1328 = vmatpush1.msra.mxu0 0.0
      %1329 = vmatprep.subr.mxu0 0.0
      %1330 = vmatpush1.msra.mxu0 0.0
      %1331 = vmatprep.subr.mxu0 0.0
      %1332 = vmatpush1.msra.mxu0 0.0
      %1333 = vmatprep.subr.mxu0 0.0
      %1334 = vmatpush1.msra.mxu0 0.0
      %1335 = vmatprep.subr.mxu0 0.0
      %1336 = vmatpush1.msra.mxu0 0.0
      %1337 = vmatprep.subr.mxu0 0.0
      %1338 = vmatpush1.msra.mxu0 0.0
      %1339 = vmatprep.subr.mxu0 0.0
      %1340 = vmatpush1.msra.mxu0 0.0
      %1341 = vmatprep.subr.mxu0 0.0
      %1342 = vmatpush1.msra.mxu0 0.0
      %1343 = vmatprep.subr.mxu0 0.0
      %1344 = vmatpush1.msra.mxu0 0.0
      %1345 = vmatprep.subr.mxu0 0.0
      %1346 = vmatpush1.msra.mxu0 0.0
      %1347 = vmatprep.mubr.f32.mxu0 0.0
      %1348 = vmatmul.mubr.f32.gmra.mrb[0].mxu0 %v1210
      %v1349 = vpop.f32.mrb[0].mxu0
      %v1350 = vadd.f32 0.0, %v1349
      %v1351 = vpop.f32.mrb[0].mxu0
      %v1352 = vadd.f32 0.0, %v1351
      %1353 = vdwg.mxu0
      %1354 = vmatprep.subr.mxu0 %v1141
      %1355 = vmatpush1.msra.mxu0 %v1140
      %1356 = vmatprep.subr.mxu0 %v1149
      %1357 = vmatpush1.msra.mxu0 %v1148
      %1358 = vmatprep.subr.mxu0 %v1157
      %1359 = vmatpush1.msra.mxu0 %v1156
      %1360 = vmatprep.subr.mxu0 %v1165
      %1361 = vmatpush1.msra.mxu0 %v1164
      %1362 = vmatprep.subr.mxu0 %v1173
      %1363 = vmatpush1.msra.mxu0 %v1172
      %1364 = vmatprep.subr.mxu0 %v1181
      %1365 = vmatpush1.msra.mxu0 %v1180
      %1366 = vmatprep.subr.mxu0 %v1189
      %1367 = vmatpush1.msra.mxu0 %v1188
      %1368 = vmatprep.subr.mxu0 %v1197
      %1369 = vmatpush1.msra.mxu0 %v1196
      %1370 = vmatprep.subr.mxu0 %v1205
      %1371 = vmatpush1.msra.mxu0 %v1204
      %1372 = vmatprep.subr.mxu0 0.0
      %1373 = vmatpush1.msra.mxu0 0.0
      %1374 = vmatprep.subr.mxu0 0.0
      %1375 = vmatpush1.msra.mxu0 0.0
      %1376 = vmatprep.subr.mxu0 0.0
      %1377 = vmatpush1.msra.mxu0 0.0
      %1378 = vmatprep.subr.mxu0 0.0
      %1379 = vmatpush1.msra.mxu0 0.0
      %1380 = vmatprep.subr.mxu0 0.0
      %1381 = vmatpush1.msra.mxu0 0.0
      %1382 = vmatprep.subr.mxu0 0.0
      %1383 = vmatpush1.msra.mxu0 0.0
      %1384 = vmatprep.subr.mxu0 0.0
      %1385 = vmatpush1.msra.mxu0 0.0
      %1386 = vmatprep.subr.mxu0 0.0
      %1387 = vmatpush1.msra.mxu0 0.0
      %1388 = vmatprep.subr.mxu0 0.0
      %1389 = vmatpush1.msra.mxu0 0.0
      %1390 = vmatprep.subr.mxu0 0.0
      %1391 = vmatpush1.msra.mxu0 0.0
      %1392 = vmatprep.subr.mxu0 0.0
      %1393 = vmatpush1.msra.mxu0 0.0
      %1394 = vmatprep.subr.mxu0 0.0
      %1395 = vmatpush1.msra.mxu0 0.0
      %1396 = vmatprep.subr.mxu0 0.0
      %1397 = vmatpush1.msra.mxu0 0.0
      %1398 = vmatprep.subr.mxu0 0.0
      %1399 = vmatpush1.msra.mxu0 0.0
      %1400 = vmatprep.subr.mxu0 0.0
      %1401 = vmatpush1.msra.mxu0 0.0
      %1402 = vmatprep.subr.mxu0 0.0
      %1403 = vmatpush1.msra.mxu0 0.0
      %1404 = vmatprep.subr.mxu0 0.0
      %1405 = vmatpush1.msra.mxu0 0.0
      %1406 = vmatprep.subr.mxu0 0.0
      %1407 = vmatpush1.msra.mxu0 0.0
      %1408 = vmatprep.subr.mxu0 0.0
      %1409 = vmatpush1.msra.mxu0 0.0
      %1410 = vmatprep.subr.mxu0 0.0
      %1411 = vmatpush1.msra.mxu0 0.0
      %1412 = vmatprep.subr.mxu0 0.0
      %1413 = vmatpush1.msra.mxu0 0.0
      %1414 = vmatprep.subr.mxu0 0.0
      %1415 = vmatpush1.msra.mxu0 0.0
      %1416 = vmatprep.subr.mxu0 0.0
      %1417 = vmatpush1.msra.mxu0 0.0
      %1418 = vmatprep.mubr.f32.mxu0 0.0
      %1419 = vmatmul.mubr.f32.gmra.mrb[0].mxu0 %v1210
      %v1420 = vpop.f32.mrb[0].mxu0
      %v1421 = vadd.f32 0.0, %v1420
      %v1422 = vpop.f32.mrb[0].mxu0
      %v1423 = vadd.f32 0.0, %v1422
      %1424 = vdwg.mxu0
      %1425 = vmatprep.subr.mxu0 %v1143
      %1426 = vmatpush1.msra.mxu0 %v1142
      %1427 = vmatprep.subr.mxu0 %v1151
      %1428 = vmatpush1.msra.mxu0 %v1150
      %1429 = vmatprep.subr.mxu0 %v1159
      %1430 = vmatpush1.msra.mxu0 %v1158
      %1431 = vmatprep.subr.mxu0 %v1167
      %1432 = vmatpush1.msra.mxu0 %v1166
      %1433 = vmatprep.subr.mxu0 %v1175
      %1434 = vmatpush1.msra.mxu0 %v1174
      %1435 = vmatprep.subr.mxu0 %v1183
      %1436 = vmatpush1.msra.mxu0 %v1182
      %1437 = vmatprep.subr.mxu0 %v1191
      %1438 = vmatpush1.msra.mxu0 %v1190
      %1439 = vmatprep.subr.mxu0 %v1199
      %1440 = vmatpush1.msra.mxu0 %v1198
      %1441 = vmatprep.subr.mxu0 %v1207
      %1442 = vmatpush1.msra.mxu0 %v1206
      %1443 = vmatprep.subr.mxu0 0.0
      %1444 = vmatpush1.msra.mxu0 0.0
      %1445 = vmatprep.subr.mxu0 0.0
      %1446 = vmatpush1.msra.mxu0 0.0
      %1447 = vmatprep.subr.mxu0 0.0
      %1448 = vmatpush1.msra.mxu0 0.0
      %1449 = vmatprep.subr.mxu0 0.0
      %1450 = vmatpush1.msra.mxu0 0.0
      %1451 = vmatprep.subr.mxu0 0.0
      %1452 = vmatpush1.msra.mxu0 0.0
      %1453 = vmatprep.subr.mxu0 0.0
      %1454 = vmatpush1.msra.mxu0 0.0
      %1455 = vmatprep.subr.mxu0 0.0
      %1456 = vmatpush1.msra.mxu0 0.0
      %1457 = vmatprep.subr.mxu0 0.0
      %1458 = vmatpush1.msra.mxu0 0.0
      %1459 = vmatprep.subr.mxu0 0.0
      %1460 = vmatpush1.msra.mxu0 0.0
      %1461 = vmatprep.subr.mxu0 0.0
      %1462 = vmatpush1.msra.mxu0 0.0
      %1463 = vmatprep.subr.mxu0 0.0
      %1464 = vmatpush1.msra.mxu0 0.0
      %1465 = vmatprep.subr.mxu0 0.0
      %1466 = vmatpush1.msra.mxu0 0.0
      %1467 = vmatprep.subr.mxu0 0.0
      %1468 = vmatpush1.msra.mxu0 0.0
      %1469 = vmatprep.subr.mxu0 0.0
      %1470 = vmatpush1.msra.mxu0 0.0
      %1471 = vmatprep.subr.mxu0 0.0
      %1472 = vmatpush1.msra.mxu0 0.0
      %1473 = vmatprep.subr.mxu0 0.0
      %1474 = vmatpush1.msra.mxu0 0.0
      %1475 = vmatprep.subr.mxu0 0.0
      %1476 = vmatpush1.msra.mxu0 0.0
      %1477 = vmatprep.subr.mxu0 0.0
      %1478 = vmatpush1.msra.mxu0 0.0
      %1479 = vmatprep.subr.mxu0 0.0
      %1480 = vmatpush1.msra.mxu0 0.0
      %1481 = vmatprep.subr.mxu0 0.0
      %1482 = vmatpush1.msra.mxu0 0.0
      %1483 = vmatprep.subr.mxu0 0.0
      %1484 = vmatpush1.msra.mxu0 0.0
      %1485 = vmatprep.subr.mxu0 0.0
      %1486 = vmatpush1.msra.mxu0 0.0
      %1487 = vmatprep.subr.mxu0 0.0
      %1488 = vmatpush1.msra.mxu0 0.0
      %1489 = vmatprep.mubr.f32.mxu0 0.0
      %1490 = vmatmul.mubr.f32.gmra.mrb[0].mxu0 %v1210
      %v1491 = vpop.f32.mrb[0].mxu0
      %v1492 = vadd.f32 0.0, %v1491
      %v1493 = vpop.f32.mrb[0].mxu0
      %v1494 = vadd.f32 0.0, %v1493
      %1495 = vdwg.mxu0
      %v1496 = vld [vmem:[%s5] sm:$0xff]
      %1498 = vset.pattern.permute.xlu0 0
      %1499 = vperm.xlu0 %1498, %v1496
      %v1500 = vpop.permute.xlu0 %1499
      %v1502 = vmul.f32 %v1279, %v1500
      %v1503 = vmul.f32 %v1281, %v1500
      %v1504 = vmul.f32 %v1350, %v1500
      %v1505 = vmul.f32 %v1352, %v1500
      %v1506 = vmul.f32 %v1421, %v1500
      %v1507 = vmul.f32 %v1423, %v1500
      %v1508 = vmul.f32 %v1492, %v1500
      %v1509 = vmul.f32 %v1494, %v1500
      %v1510 = vld [vmem:[%s6] sm:$0xff]
      %1512 = vset.pattern.permute.xlu0 0
      %1513 = vperm.xlu0 %1512, %v1510
      %v1514 = vpop.permute.xlu0 %1513
      %v1516 = vadd.f32 %v1502, %v1514
      %v1517 = vadd.f32 %v1503, %v1514
      %v1518 = vadd.f32 %v1504, %v1514
      %v1519 = vadd.f32 %v1505, %v1514
      %v1520 = vadd.f32 %v1506, %v1514
      %v1521 = vadd.f32 %v1507, %v1514
      %v1522 = vadd.f32 %v1508, %v1514
      %v1523 = vadd.f32 %v1509, %v1514
      %v1524 = vmax.f32 %v1516, 0.0
      %v1525 = vmax.f32 %v1517, 0.0
      %v1526 = vmax.f32 %v1518, 0.0
      %v1527 = vmax.f32 %v1519, 0.0
      %v1528 = vmax.f32 %v1520, 0.0
      %v1529 = vmax.f32 %v1521, 0.0
      %v1530 = vmax.f32 %v1522, 0.0
      %v1531 = vmax.f32 %v1523, 0.0
      %1533 = vrot.lane.b32.xlu0 %v1531, 33
      %v1534 = vpop.permute.xlu0 %1533
      %1543 = vrot.lane.b32.xlu0 %v1524, 33
      %v1544 = vpop.permute.xlu0 %1543
      %1545 = vrot.lane.b32.xlu0 %v1525, 33
      %v1546 = vpop.permute.xlu0 %1545
      %1547 = vrot.lane.b32.xlu0 %v1526, 33
      %v1548 = vpop.permute.xlu0 %1547
      %1549 = vrot.lane.b32.xlu0 %v1527, 33
      %v1550 = vpop.permute.xlu0 %1549
      %1551 = vrot.lane.b32.xlu0 %v1528, 33
      %v1552 = vpop.permute.xlu0 %1551
      %1553 = vrot.lane.b32.xlu0 %v1529, 33
      %v1554 = vpop.permute.xlu0 %1553
      %1555 = vrot.lane.b32.xlu0 %v1530, 33
      %v1556 = vpop.permute.xlu0 %1555
      %v1557 = vsel %vm385, %v1544, %v1546
      %v1558 = vsel %vm385, %v1546, %v1548
      %v1559 = vsel %vm385, %v1548, %v1550
      %v1560 = vsel %vm385, %v1550, %v1552
      %v1561 = vsel %vm385, %v1552, %v1554
      %v1562 = vsel %vm385, %v1554, %v1556
      %v1563 = vsel %vm385, %v1556, %v1534
      %v1572 = vsel %vm385, %v1534, %v1544
      %v1573 = vld [vmem:[%s1] ss:$8 sm:$0xf]
      %v1574 = vld [vmem:[%s1] ss:$8 sm:$0xf0]
      %v1575 = vor.u32 %v1573, %v1574
      %v1577 = vlaneseq
      %v1578 = vshrl.u32 %v1577, 7
      %v1579 = vsub.s32 0, %v1578
      %v1580 = vrot.slane %v1575, %v1579
      %v1581 = vlaneseq
      %v1582 = vshrl.u32 %v1581, 7
      %v1583 = vsub.s32 1, %v1582
      %v1584 = vrot.slane %v1575, %v1583
      %v1585 = vlaneseq
      %v1586 = vshrl.u32 %v1585, 7
      %v1587 = vsub.s32 2, %v1586
      %v1588 = vrot.slane %v1575, %v1587
      %v1589 = vlaneseq
      %v1590 = vshrl.u32 %v1589, 7
      %v1591 = vsub.s32 3, %v1590
      %v1592 = vrot.slane %v1575, %v1591
      %v1593 = vlaneseq
      %v1594 = vshrl.u32 %v1593, 7
      %v1595 = vsub.s32 4, %v1594
      %v1596 = vrot.slane %v1575, %v1595
      %v1597 = vlaneseq
      %v1598 = vshrl.u32 %v1597, 7
      %v1599 = vsub.s32 5, %v1598
      %v1600 = vrot.slane %v1575, %v1599
      %v1601 = vlaneseq
      %v1602 = vshrl.u32 %v1601, 7
      %v1603 = vsub.s32 6, %v1602
      %v1604 = vrot.slane %v1575, %v1603
      %v1605 = vlaneseq
      %v1606 = vshrl.u32 %v1605, 7
      %v1607 = vsub.s32 7, %v1606
      %v1608 = vrot.slane %v1575, %v1607
      %v1617 = vmul.f32 %v1572, %v1580
      %v1618 = vmul.f32 %v1557, %v1584
      %v1619 = vmul.f32 %v1558, %v1588
      %v1620 = vmul.f32 %v1559, %v1592
      %v1621 = vmul.f32 %v1560, %v1596
      %v1622 = vmul.f32 %v1561, %v1600
      %v1623 = vmul.f32 %v1562, %v1604
      %v1624 = vmul.f32 %v1563, %v1608
      %1625 = vst [vmem:[#allocation2] sm:$0xff] %v1617
      %1626 = vst [vmem:[#allocation2 + $0x8] sm:$0xff] %v1618
      %1627 = vst [vmem:[#allocation2 + $0x10] sm:$0xff] %v1619
      %1628 = vst [vmem:[#allocation2 + $0x18] sm:$0xff] %v1620
      %1629 = vst [vmem:[#allocation2 + $0x20] sm:$0xff] %v1621
      %1630 = vst [vmem:[#allocation2 + $0x28] sm:$0xff] %v1622
      %1631 = vst [vmem:[#allocation2 + $0x30] sm:$0xff] %v1623
      %1632 = vst [vmem:[#allocation2 + $0x38] sm:$0xff] %v1624
      %1633 = vrot.lane.b32.xlu0 %v1531, 32
      %v1634 = vpop.permute.xlu0 %1633
      %1636 = vrot.lane.b32.xlu0 %v1524, 32
      %v1637 = vpop.permute.xlu0 %1636
      %1638 = vrot.lane.b32.xlu0 %v1525, 32
      %v1639 = vpop.permute.xlu0 %1638
      %1640 = vrot.lane.b32.xlu0 %v1526, 32
      %v1641 = vpop.permute.xlu0 %1640
      %1642 = vrot.lane.b32.xlu0 %v1527, 32
      %v1643 = vpop.permute.xlu0 %1642
      %1644 = vrot.lane.b32.xlu0 %v1528, 32
      %v1645 = vpop.permute.xlu0 %1644
      %1646 = vrot.lane.b32.xlu0 %v1529, 32
      %v1647 = vpop.permute.xlu0 %1646
      %1648 = vrot.lane.b32.xlu0 %v1530, 32
      %v1649 = vpop.permute.xlu0 %1648
      %v1650 = vsel %vm479, %v1637, %v1639
      %v1651 = vsel %vm479, %v1639, %v1641
      %v1652 = vsel %vm479, %v1641, %v1643
      %v1653 = vsel %vm479, %v1643, %v1645
      %v1654 = vsel %vm479, %v1645, %v1647
      %v1655 = vsel %vm479, %v1647, %v1649
      %v1656 = vsel %vm479, %v1649, %v1634
      %v1665 = vsel %vm479, %v1634, %v1637
      %v1666 = vld [vmem:[%s496] ss:$8 sm:$0xf]
      %v1667 = vld [vmem:[%s496] ss:$8 sm:$0xf0]
      %v1668 = vor.u32 %v1666, %v1667
      %v1670 = vlaneseq
      %v1671 = vshrl.u32 %v1670, 7
      %v1672 = vsub.s32 0, %v1671
      %v1673 = vrot.slane %v1668, %v1672
      %v1674 = vlaneseq
      %v1675 = vshrl.u32 %v1674, 7
      %v1676 = vsub.s32 1, %v1675
      %v1677 = vrot.slane %v1668, %v1676
      %v1678 = vlaneseq
      %v1679 = vshrl.u32 %v1678, 7
      %v1680 = vsub.s32 2, %v1679
      %v1681 = vrot.slane %v1668, %v1680
      %v1682 = vlaneseq
      %v1683 = vshrl.u32 %v1682, 7
      %v1684 = vsub.s32 3, %v1683
      %v1685 = vrot.slane %v1668, %v1684
      %v1686 = vlaneseq
      %v1687 = vshrl.u32 %v1686, 7
      %v1688 = vsub.s32 4, %v1687
      %v1689 = vrot.slane %v1668, %v1688
      %v1690 = vlaneseq
      %v1691 = vshrl.u32 %v1690, 7
      %v1692 = vsub.s32 5, %v1691
      %v1693 = vrot.slane %v1668, %v1692
      %v1694 = vlaneseq
      %v1695 = vshrl.u32 %v1694, 7
      %v1696 = vsub.s32 6, %v1695
      %v1697 = vrot.slane %v1668, %v1696
      %v1698 = vlaneseq
      %v1699 = vshrl.u32 %v1698, 7
      %v1700 = vsub.s32 7, %v1699
      %v1701 = vrot.slane %v1668, %v1700
      %v1710 = vmul.f32 %v1665, %v1673
      %v1711 = vmul.f32 %v1650, %v1677
      %v1712 = vmul.f32 %v1651, %v1681
      %v1713 = vmul.f32 %v1652, %v1685
      %v1714 = vmul.f32 %v1653, %v1689
      %v1715 = vmul.f32 %v1654, %v1693
      %v1716 = vmul.f32 %v1655, %v1697
      %v1717 = vmul.f32 %v1656, %v1701
      %1718 = vst [vmem:[#allocation2 + $0x40] sm:$0xff] %v1710
      %1719 = vst [vmem:[#allocation2 + $0x48] sm:$0xff] %v1711
      %1720 = vst [vmem:[#allocation2 + $0x50] sm:$0xff] %v1712
      %1721 = vst [vmem:[#allocation2 + $0x58] sm:$0xff] %v1713
      %1722 = vst [vmem:[#allocation2 + $0x60] sm:$0xff] %v1714
      %1723 = vst [vmem:[#allocation2 + $0x68] sm:$0xff] %v1715
      %1724 = vst [vmem:[#allocation2 + $0x70] sm:$0xff] %v1716
      %1725 = vst [vmem:[#allocation2 + $0x78] sm:$0xff] %v1717
      %1726 = vrot.lane.b32.xlu0 %v1531, 31
      %v1727 = vpop.permute.xlu0 %1726
      %1729 = vrot.lane.b32.xlu0 %v1524, 31
      %v1730 = vpop.permute.xlu0 %1729
      %1731 = vrot.lane.b32.xlu0 %v1525, 31
      %v1732 = vpop.permute.xlu0 %1731
      %1733 = vrot.lane.b32.xlu0 %v1526, 31
      %v1734 = vpop.permute.xlu0 %1733
      %1735 = vrot.lane.b32.xlu0 %v1527, 31
      %v1736 = vpop.permute.xlu0 %1735
      %1737 = vrot.lane.b32.xlu0 %v1528, 31
      %v1738 = vpop.permute.xlu0 %1737
      %1739 = vrot.lane.b32.xlu0 %v1529, 31
      %v1740 = vpop.permute.xlu0 %1739
      %1741 = vrot.lane.b32.xlu0 %v1530, 31
      %v1742 = vpop.permute.xlu0 %1741
      %v1743 = vsel %vm574, %v1730, %v1732
      %v1744 = vsel %vm574, %v1732, %v1734
      %v1745 = vsel %vm574, %v1734, %v1736
      %v1746 = vsel %vm574, %v1736, %v1738
      %v1747 = vsel %vm574, %v1738, %v1740
      %v1748 = vsel %vm574, %v1740, %v1742
      %v1749 = vsel %vm574, %v1742, %v1727
      %v1758 = vsel %vm574, %v1727, %v1730
      %v1759 = vld [vmem:[%s591] ss:$8 sm:$0xf]
      %v1760 = vld [vmem:[%s591] ss:$8 sm:$0xf0]
      %v1761 = vor.u32 %v1759, %v1760
      %v1763 = vlaneseq
      %v1764 = vshrl.u32 %v1763, 7
      %v1765 = vsub.s32 0, %v1764
      %v1766 = vrot.slane %v1761, %v1765
      %v1767 = vlaneseq
      %v1768 = vshrl.u32 %v1767, 7
      %v1769 = vsub.s32 1, %v1768
      %v1770 = vrot.slane %v1761, %v1769
      %v1771 = vlaneseq
      %v1772 = vshrl.u32 %v1771, 7
      %v1773 = vsub.s32 2, %v1772
      %v1774 = vrot.slane %v1761, %v1773
      %v1775 = vlaneseq
      %v1776 = vshrl.u32 %v1775, 7
      %v1777 = vsub.s32 3, %v1776
      %v1778 = vrot.slane %v1761, %v1777
      %v1779 = vlaneseq
      %v1780 = vshrl.u32 %v1779, 7
      %v1781 = vsub.s32 4, %v1780
      %v1782 = vrot.slane %v1761, %v1781
      %v1783 = vlaneseq
      %v1784 = vshrl.u32 %v1783, 7
      %v1785 = vsub.s32 5, %v1784
      %v1786 = vrot.slane %v1761, %v1785
      %v1787 = vlaneseq
      %v1788 = vshrl.u32 %v1787, 7
      %v1789 = vsub.s32 6, %v1788
      %v1790 = vrot.slane %v1761, %v1789
      %v1791 = vlaneseq
      %v1792 = vshrl.u32 %v1791, 7
      %v1793 = vsub.s32 7, %v1792
      %v1794 = vrot.slane %v1761, %v1793
      %v1803 = vmul.f32 %v1758, %v1766
      %v1804 = vmul.f32 %v1743, %v1770
      %v1805 = vmul.f32 %v1744, %v1774
      %v1806 = vmul.f32 %v1745, %v1778
      %v1807 = vmul.f32 %v1746, %v1782
      %v1808 = vmul.f32 %v1747, %v1786
      %v1809 = vmul.f32 %v1748, %v1790
      %v1810 = vmul.f32 %v1749, %v1794
      %1811 = vst [vmem:[#allocation2 + $0x80] sm:$0xff] %v1803
      %1812 = vst [vmem:[#allocation2 + $0x88] sm:$0xff] %v1804
      %1813 = vst [vmem:[#allocation2 + $0x90] sm:$0xff] %v1805
      %1814 = vst [vmem:[#allocation2 + $0x98] sm:$0xff] %v1806
      %1815 = vst [vmem:[#allocation2 + $0xa0] sm:$0xff] %v1807
      %1816 = vst [vmem:[#allocation2 + $0xa8] sm:$0xff] %v1808
      %1817 = vst [vmem:[#allocation2 + $0xb0] sm:$0xff] %v1809
      %1818 = vst [vmem:[#allocation2 + $0xb8] sm:$0xff] %v1810
      %1819 = vrot.lane.b32.xlu0 %v1531, 1
      %v1820 = vpop.permute.xlu0 %1819
      %1822 = vrot.lane.b32.xlu0 %v1524, 1
      %v1823 = vpop.permute.xlu0 %1822
      %1824 = vrot.lane.b32.xlu0 %v1525, 1
      %v1825 = vpop.permute.xlu0 %1824
      %1826 = vrot.lane.b32.xlu0 %v1526, 1
      %v1827 = vpop.permute.xlu0 %1826
      %1828 = vrot.lane.b32.xlu0 %v1527, 1
      %v1829 = vpop.permute.xlu0 %1828
      %1830 = vrot.lane.b32.xlu0 %v1528, 1
      %v1831 = vpop.permute.xlu0 %1830
      %1832 = vrot.lane.b32.xlu0 %v1529, 1
      %v1833 = vpop.permute.xlu0 %1832
      %1834 = vrot.lane.b32.xlu0 %v1530, 1
      %v1835 = vpop.permute.xlu0 %1834
      %v1836 = vsel %vm669, %v1823, %v1825
      %v1837 = vsel %vm669, %v1825, %v1827
      %v1838 = vsel %vm669, %v1827, %v1829
      %v1839 = vsel %vm669, %v1829, %v1831
      %v1840 = vsel %vm669, %v1831, %v1833
      %v1841 = vsel %vm669, %v1833, %v1835
      %v1842 = vsel %vm669, %v1835, %v1820
      %v1851 = vsel %vm669, %v1820, %v1823
      %v1852 = vld [vmem:[%s686] ss:$8 sm:$0xf]
      %v1853 = vld [vmem:[%s686] ss:$8 sm:$0xf0]
      %v1854 = vor.u32 %v1852, %v1853
      %v1856 = vlaneseq
      %v1857 = vshrl.u32 %v1856, 7
      %v1858 = vsub.s32 0, %v1857
      %v1859 = vrot.slane %v1854, %v1858
      %v1860 = vlaneseq
      %v1861 = vshrl.u32 %v1860, 7
      %v1862 = vsub.s32 1, %v1861
      %v1863 = vrot.slane %v1854, %v1862
      %v1864 = vlaneseq
      %v1865 = vshrl.u32 %v1864, 7
      %v1866 = vsub.s32 2, %v1865
      %v1867 = vrot.slane %v1854, %v1866
      %v1868 = vlaneseq
      %v1869 = vshrl.u32 %v1868, 7
      %v1870 = vsub.s32 3, %v1869
      %v1871 = vrot.slane %v1854, %v1870
      %v1872 = vlaneseq
      %v1873 = vshrl.u32 %v1872, 7
      %v1874 = vsub.s32 4, %v1873
      %v1875 = vrot.slane %v1854, %v1874
      %v1876 = vlaneseq
      %v1877 = vshrl.u32 %v1876, 7
      %v1878 = vsub.s32 5, %v1877
      %v1879 = vrot.slane %v1854, %v1878
      %v1880 = vlaneseq
      %v1881 = vshrl.u32 %v1880, 7
      %v1882 = vsub.s32 6, %v1881
      %v1883 = vrot.slane %v1854, %v1882
      %v1884 = vlaneseq
      %v1885 = vshrl.u32 %v1884, 7
      %v1886 = vsub.s32 7, %v1885
      %v1887 = vrot.slane %v1854, %v1886
      %v1896 = vmul.f32 %v1851, %v1859
      %v1897 = vmul.f32 %v1836, %v1863
      %v1898 = vmul.f32 %v1837, %v1867
      %v1899 = vmul.f32 %v1838, %v1871
      %v1900 = vmul.f32 %v1839, %v1875
      %v1901 = vmul.f32 %v1840, %v1879
      %v1902 = vmul.f32 %v1841, %v1883
      %v1903 = vmul.f32 %v1842, %v1887
      %1904 = vst [vmem:[#allocation2 + $0xc0] sm:$0xff] %v1896
      %1905 = vst [vmem:[#allocation2 + $0xc8] sm:$0xff] %v1897
      %1906 = vst [vmem:[#allocation2 + $0xd0] sm:$0xff] %v1898
      %1907 = vst [vmem:[#allocation2 + $0xd8] sm:$0xff] %v1899
      %1908 = vst [vmem:[#allocation2 + $0xe0] sm:$0xff] %v1900
      %1909 = vst [vmem:[#allocation2 + $0xe8] sm:$0xff] %v1901
      %1910 = vst [vmem:[#allocation2 + $0xf0] sm:$0xff] %v1902
      %1911 = vst [vmem:[#allocation2 + $0xf8] sm:$0xff] %v1903
      %1912 = vst [vmem:[#allocation2 + $0x100] sm:$0xff] %v1524
      %1913 = vst [vmem:[#allocation2 + $0x108] sm:$0xff] %v1525
      %1914 = vst [vmem:[#allocation2 + $0x110] sm:$0xff] %v1526
      %1915 = vst [vmem:[#allocation2 + $0x118] sm:$0xff] %v1527
      %1916 = vst [vmem:[#allocation2 + $0x120] sm:$0xff] %v1528
      %1917 = vst [vmem:[#allocation2 + $0x128] sm:$0xff] %v1529
      %1918 = vst [vmem:[#allocation2 + $0x130] sm:$0xff] %v1530
      %1919 = vst [vmem:[#allocation2 + $0x138] sm:$0xff] %v1531
      %1920 = vrot.lane.b32.xlu0 %v1524, 127
      %v1921 = vpop.permute.xlu0 %1920
      %1922 = vrot.lane.b32.xlu0 %v1525, 127
      %v1923 = vpop.permute.xlu0 %1922
      %1924 = vrot.lane.b32.xlu0 %v1526, 127
      %v1925 = vpop.permute.xlu0 %1924
      %1926 = vrot.lane.b32.xlu0 %v1527, 127
      %v1927 = vpop.permute.xlu0 %1926
      %1928 = vrot.lane.b32.xlu0 %v1528, 127
      %v1929 = vpop.permute.xlu0 %1928
      %1930 = vrot.lane.b32.xlu0 %v1529, 127
      %v1931 = vpop.permute.xlu0 %1930
      %1932 = vrot.lane.b32.xlu0 %v1530, 127
      %v1933 = vpop.permute.xlu0 %1932
      %1934 = vrot.lane.b32.xlu0 %v1531, 127
      %v1935 = vpop.permute.xlu0 %1934
      %v1936 = vsel %vm771, %v1921, %v1923
      %v1937 = vsel %vm771, %v1923, %v1925
      %v1938 = vsel %vm771, %v1925, %v1927
      %v1939 = vsel %vm771, %v1927, %v1929
      %v1940 = vsel %vm771, %v1929, %v1931
      %v1941 = vsel %vm771, %v1931, %v1933
      %v1942 = vsel %vm771, %v1933, %v1935
      %v1952 = vsel %vm771, %v1935, %v1921
      %v1953 = vld [vmem:[%s789] ss:$8 sm:$0xf]
      %v1954 = vld [vmem:[%s789] ss:$8 sm:$0xf0]
      %v1955 = vor.u32 %v1953, %v1954
      %v1957 = vlaneseq
      %v1958 = vshrl.u32 %v1957, 7
      %v1959 = vsub.s32 0, %v1958
      %v1960 = vrot.slane %v1955, %v1959
      %v1961 = vlaneseq
      %v1962 = vshrl.u32 %v1961, 7
      %v1963 = vsub.s32 1, %v1962
      %v1964 = vrot.slane %v1955, %v1963
      %v1965 = vlaneseq
      %v1966 = vshrl.u32 %v1965, 7
      %v1967 = vsub.s32 2, %v1966
      %v1968 = vrot.slane %v1955, %v1967
      %v1969 = vlaneseq
      %v1970 = vshrl.u32 %v1969, 7
      %v1971 = vsub.s32 3, %v1970
      %v1972 = vrot.slane %v1955, %v1971
      %v1973 = vlaneseq
      %v1974 = vshrl.u32 %v1973, 7
      %v1975 = vsub.s32 4, %v1974
      %v1976 = vrot.slane %v1955, %v1975
      %v1977 = vlaneseq
      %v1978 = vshrl.u32 %v1977, 7
      %v1979 = vsub.s32 5, %v1978
      %v1980 = vrot.slane %v1955, %v1979
      %v1981 = vlaneseq
      %v1982 = vshrl.u32 %v1981, 7
      %v1983 = vsub.s32 6, %v1982
      %v1984 = vrot.slane %v1955, %v1983
      %v1985 = vlaneseq
      %v1986 = vshrl.u32 %v1985, 7
      %v1987 = vsub.s32 7, %v1986
      %v1988 = vrot.slane %v1955, %v1987
      %v1997 = vmul.f32 %v1936, %v1960
      %v1998 = vmul.f32 %v1937, %v1964
      %v1999 = vmul.f32 %v1938, %v1968
      %v2000 = vmul.f32 %v1939, %v1972
      %v2001 = vmul.f32 %v1940, %v1976
      %v2002 = vmul.f32 %v1941, %v1980
      %v2003 = vmul.f32 %v1942, %v1984
      %v2004 = vmul.f32 %v1952, %v1988
      %2005 = vst [vmem:[#allocation2 + $0x140] sm:$0xff] %v1997
      %2006 = vst [vmem:[#allocation2 + $0x148] sm:$0xff] %v1998
      %2007 = vst [vmem:[#allocation2 + $0x150] sm:$0xff] %v1999
      %2008 = vst [vmem:[#allocation2 + $0x158] sm:$0xff] %v2000
      %2009 = vst [vmem:[#allocation2 + $0x160] sm:$0xff] %v2001
      %2010 = vst [vmem:[#allocation2 + $0x168] sm:$0xff] %v2002
      %2011 = vst [vmem:[#allocation2 + $0x170] sm:$0xff] %v2003
      %2012 = vst [vmem:[#allocation2 + $0x178] sm:$0xff] %v2004
      %2013 = vrot.lane.b32.xlu0 %v1524, 97
      %v2014 = vpop.permute.xlu0 %2013
      %2015 = vrot.lane.b32.xlu0 %v1525, 97
      %v2016 = vpop.permute.xlu0 %2015
      %2017 = vrot.lane.b32.xlu0 %v1526, 97
      %v2018 = vpop.permute.xlu0 %2017
      %2019 = vrot.lane.b32.xlu0 %v1527, 97
      %v2020 = vpop.permute.xlu0 %2019
      %2021 = vrot.lane.b32.xlu0 %v1528, 97
      %v2022 = vpop.permute.xlu0 %2021
      %2023 = vrot.lane.b32.xlu0 %v1529, 97
      %v2024 = vpop.permute.xlu0 %2023
      %2025 = vrot.lane.b32.xlu0 %v1530, 97
      %v2026 = vpop.permute.xlu0 %2025
      %2027 = vrot.lane.b32.xlu0 %v1531, 97
      %v2028 = vpop.permute.xlu0 %2027
      %v2029 = vsel %vm866, %v2014, %v2016
      %v2030 = vsel %vm866, %v2016, %v2018
      %v2031 = vsel %vm866, %v2018, %v2020
      %v2032 = vsel %vm866, %v2020, %v2022
      %v2033 = vsel %vm866, %v2022, %v2024
      %v2034 = vsel %vm866, %v2024, %v2026
      %v2035 = vsel %vm866, %v2026, %v2028
      %v2045 = vsel %vm866, %v2028, %v2014
      %v2046 = vld [vmem:[%s884] ss:$8 sm:$0xf]
      %v2047 = vld [vmem:[%s884] ss:$8 sm:$0xf0]
      %v2048 = vor.u32 %v2046, %v2047
      %v2050 = vlaneseq
      %v2051 = vshrl.u32 %v2050, 7
      %v2052 = vsub.s32 0, %v2051
      %v2053 = vrot.slane %v2048, %v2052
      %v2054 = vlaneseq
      %v2055 = vshrl.u32 %v2054, 7
      %v2056 = vsub.s32 1, %v2055
      %v2057 = vrot.slane %v2048, %v2056
      %v2058 = vlaneseq
      %v2059 = vshrl.u32 %v2058, 7
      %v2060 = vsub.s32 2, %v2059
      %v2061 = vrot.slane %v2048, %v2060
      %v2062 = vlaneseq
      %v2063 = vshrl.u32 %v2062, 7
      %v2064 = vsub.s32 3, %v2063
      %v2065 = vrot.slane %v2048, %v2064
      %v2066 = vlaneseq
      %v2067 = vshrl.u32 %v2066, 7
      %v2068 = vsub.s32 4, %v2067
      %v2069 = vrot.slane %v2048, %v2068
      %v2070 = vlaneseq
      %v2071 = vshrl.u32 %v2070, 7
      %v2072 = vsub.s32 5, %v2071
      %v2073 = vrot.slane %v2048, %v2072
      %v2074 = vlaneseq
      %v2075 = vshrl.u32 %v2074, 7
      %v2076 = vsub.s32 6, %v2075
      %v2077 = vrot.slane %v2048, %v2076
      %v2078 = vlaneseq
      %v2079 = vshrl.u32 %v2078, 7
      %v2080 = vsub.s32 7, %v2079
      %v2081 = vrot.slane %v2048, %v2080
      %v2090 = vmul.f32 %v2029, %v2053
      %v2091 = vmul.f32 %v2030, %v2057
      %v2092 = vmul.f32 %v2031, %v2061
      %v2093 = vmul.f32 %v2032, %v2065
      %v2094 = vmul.f32 %v2033, %v2069
      %v2095 = vmul.f32 %v2034, %v2073
      %v2096 = vmul.f32 %v2035, %v2077
      %v2097 = vmul.f32 %v2045, %v2081
      %2098 = vst [vmem:[#allocation2 + $0x180] sm:$0xff] %v2090
      %2099 = vst [vmem:[#allocation2 + $0x188] sm:$0xff] %v2091
      %2100 = vst [vmem:[#allocation2 + $0x190] sm:$0xff] %v2092
      %2101 = vst [vmem:[#allocation2 + $0x198] sm:$0xff] %v2093
      %2102 = vst [vmem:[#allocation2 + $0x1a0] sm:$0xff] %v2094
      %2103 = vst [vmem:[#allocation2 + $0x1a8] sm:$0xff] %v2095
      %2104 = vst [vmem:[#allocation2 + $0x1b0] sm:$0xff] %v2096
      %2105 = vst [vmem:[#allocation2 + $0x1b8] sm:$0xff] %v2097
      %2106 = vrot.lane.b32.xlu0 %v1524, 96
      %v2107 = vpop.permute.xlu0 %2106
      %2108 = vrot.lane.b32.xlu0 %v1525, 96
      %v2109 = vpop.permute.xlu0 %2108
      %2110 = vrot.lane.b32.xlu0 %v1526, 96
      %v2111 = vpop.permute.xlu0 %2110
      %2112 = vrot.lane.b32.xlu0 %v1527, 96
      %v2113 = vpop.permute.xlu0 %2112
      %2114 = vrot.lane.b32.xlu0 %v1528, 96
      %v2115 = vpop.permute.xlu0 %2114
      %2116 = vrot.lane.b32.xlu0 %v1529, 96
      %v2117 = vpop.permute.xlu0 %2116
      %2118 = vrot.lane.b32.xlu0 %v1530, 96
      %v2119 = vpop.permute.xlu0 %2118
      %2120 = vrot.lane.b32.xlu0 %v1531, 96
      %v2121 = vpop.permute.xlu0 %2120
      %v2122 = vsel %vm961, %v2107, %v2109
      %v2123 = vsel %vm961, %v2109, %v2111
      %v2124 = vsel %vm961, %v2111, %v2113
      %v2125 = vsel %vm961, %v2113, %v2115
      %v2126 = vsel %vm961, %v2115, %v2117
      %v2127 = vsel %vm961, %v2117, %v2119
      %v2128 = vsel %vm961, %v2119, %v2121
      %v2138 = vsel %vm961, %v2121, %v2107
      %v2139 = vld [vmem:[%s979] ss:$8 sm:$0xf]
      %v2140 = vld [vmem:[%s979] ss:$8 sm:$0xf0]
      %v2141 = vor.u32 %v2139, %v2140
      %v2143 = vlaneseq
      %v2144 = vshrl.u32 %v2143, 7
      %v2145 = vsub.s32 0, %v2144
      %v2146 = vrot.slane %v2141, %v2145
      %v2147 = vlaneseq
      %v2148 = vshrl.u32 %v2147, 7
      %v2149 = vsub.s32 1, %v2148
      %v2150 = vrot.slane %v2141, %v2149
      %v2151 = vlaneseq
      %v2152 = vshrl.u32 %v2151, 7
      %v2153 = vsub.s32 2, %v2152
      %v2154 = vrot.slane %v2141, %v2153
      %v2155 = vlaneseq
      %v2156 = vshrl.u32 %v2155, 7
      %v2157 = vsub.s32 3, %v2156
      %v2158 = vrot.slane %v2141, %v2157
      %v2159 = vlaneseq
      %v2160 = vshrl.u32 %v2159, 7
      %v2161 = vsub.s32 4, %v2160
      %v2162 = vrot.slane %v2141, %v2161
      %v2163 = vlaneseq
      %v2164 = vshrl.u32 %v2163, 7
      %v2165 = vsub.s32 5, %v2164
      %v2166 = vrot.slane %v2141, %v2165
      %v2167 = vlaneseq
      %v2168 = vshrl.u32 %v2167, 7
      %v2169 = vsub.s32 6, %v2168
      %v2170 = vrot.slane %v2141, %v2169
      %v2171 = vlaneseq
      %v2172 = vshrl.u32 %v2171, 7
      %v2173 = vsub.s32 7, %v2172
      %v2174 = vrot.slane %v2141, %v2173
      %v2183 = vmul.f32 %v2122, %v2146
      %v2184 = vmul.f32 %v2123, %v2150
      %v2185 = vmul.f32 %v2124, %v2154
      %v2186 = vmul.f32 %v2125, %v2158
      %v2187 = vmul.f32 %v2126, %v2162
      %v2188 = vmul.f32 %v2127, %v2166
      %v2189 = vmul.f32 %v2128, %v2170
      %v2190 = vmul.f32 %v2138, %v2174
      %2191 = vst [vmem:[#allocation2 + $0x1c0] sm:$0xff] %v2183
      %2192 = vst [vmem:[#allocation2 + $0x1c8] sm:$0xff] %v2184
      %2193 = vst [vmem:[#allocation2 + $0x1d0] sm:$0xff] %v2185
      %2194 = vst [vmem:[#allocation2 + $0x1d8] sm:$0xff] %v2186
      %2195 = vst [vmem:[#allocation2 + $0x1e0] sm:$0xff] %v2187
      %2196 = vst [vmem:[#allocation2 + $0x1e8] sm:$0xff] %v2188
      %2197 = vst [vmem:[#allocation2 + $0x1f0] sm:$0xff] %v2189
      %2198 = vst [vmem:[#allocation2 + $0x1f8] sm:$0xff] %v2190
      %2199 = vrot.lane.b32.xlu0 %v1524, 95
      %v2200 = vpop.permute.xlu0 %2199
      %2201 = vrot.lane.b32.xlu0 %v1525, 95
      %v2202 = vpop.permute.xlu0 %2201
      %2203 = vrot.lane.b32.xlu0 %v1526, 95
      %v2204 = vpop.permute.xlu0 %2203
      %2205 = vrot.lane.b32.xlu0 %v1527, 95
      %v2206 = vpop.permute.xlu0 %2205
      %2207 = vrot.lane.b32.xlu0 %v1528, 95
      %v2208 = vpop.permute.xlu0 %2207
      %2209 = vrot.lane.b32.xlu0 %v1529, 95
      %v2210 = vpop.permute.xlu0 %2209
      %2211 = vrot.lane.b32.xlu0 %v1530, 95
      %v2212 = vpop.permute.xlu0 %2211
      %2213 = vrot.lane.b32.xlu0 %v1531, 95
      %v2214 = vpop.permute.xlu0 %2213
      %v2215 = vsel %vm1056, %v2200, %v2202
      %v2216 = vsel %vm1056, %v2202, %v2204
      %v2217 = vsel %vm1056, %v2204, %v2206
      %v2218 = vsel %vm1056, %v2206, %v2208
      %v2219 = vsel %vm1056, %v2208, %v2210
      %v2220 = vsel %vm1056, %v2210, %v2212
      %v2221 = vsel %vm1056, %v2212, %v2214
      %v2231 = vsel %vm1056, %v2214, %v2200
      %v2232 = vld [vmem:[%s1074] ss:$8 sm:$0xf]
      %v2233 = vld [vmem:[%s1074] ss:$8 sm:$0xf0]
      %v2234 = vor.u32 %v2232, %v2233
      %v2236 = vlaneseq
      %v2237 = vshrl.u32 %v2236, 7
      %v2238 = vsub.s32 0, %v2237
      %v2239 = vrot.slane %v2234, %v2238
      %v2240 = vlaneseq
      %v2241 = vshrl.u32 %v2240, 7
      %v2242 = vsub.s32 1, %v2241
      %v2243 = vrot.slane %v2234, %v2242
      %v2244 = vlaneseq
      %v2245 = vshrl.u32 %v2244, 7
      %v2246 = vsub.s32 2, %v2245
      %v2247 = vrot.slane %v2234, %v2246
      %v2248 = vlaneseq
      %v2249 = vshrl.u32 %v2248, 7
      %v2250 = vsub.s32 3, %v2249
      %v2251 = vrot.slane %v2234, %v2250
      %v2252 = vlaneseq
      %v2253 = vshrl.u32 %v2252, 7
      %v2254 = vsub.s32 4, %v2253
      %v2255 = vrot.slane %v2234, %v2254
      %v2256 = vlaneseq
      %v2257 = vshrl.u32 %v2256, 7
      %v2258 = vsub.s32 5, %v2257
      %v2259 = vrot.slane %v2234, %v2258
      %v2260 = vlaneseq
      %v2261 = vshrl.u32 %v2260, 7
      %v2262 = vsub.s32 6, %v2261
      %v2263 = vrot.slane %v2234, %v2262
      %v2264 = vlaneseq
      %v2265 = vshrl.u32 %v2264, 7
      %v2266 = vsub.s32 7, %v2265
      %v2267 = vrot.slane %v2234, %v2266
      %v2276 = vmul.f32 %v2215, %v2239
      %v2277 = vmul.f32 %v2216, %v2243
      %v2278 = vmul.f32 %v2217, %v2247
      %v2279 = vmul.f32 %v2218, %v2251
      %v2280 = vmul.f32 %v2219, %v2255
      %v2281 = vmul.f32 %v2220, %v2259
      %v2282 = vmul.f32 %v2221, %v2263
      %v2283 = vmul.f32 %v2231, %v2267
      %2284 = vst [vmem:[#allocation2 + $0x200] sm:$0xff] %v2276
      %2285 = vst [vmem:[#allocation2 + $0x208] sm:$0xff] %v2277
      %2286 = vst [vmem:[#allocation2 + $0x210] sm:$0xff] %v2278
      %2287 = vst [vmem:[#allocation2 + $0x218] sm:$0xff] %v2279
      %2288 = vst [vmem:[#allocation2 + $0x220] sm:$0xff] %v2280
      %2289 = vst [vmem:[#allocation2 + $0x228] sm:$0xff] %v2281
      %2290 = vst [vmem:[#allocation2 + $0x230] sm:$0xff] %v2282
      %2291 = vst [vmem:[#allocation2 + $0x238] sm:$0xff] %v2283
      %v2292 = vld [vmem:[%s3] sm:$0xff]
      %v2293 = vld [vmem:[#allocation2] sm:$0xff]
      %v2294 = vld [vmem:[#allocation2 + $0x8] sm:$0xff]
      %v2295 = vld [vmem:[#allocation2 + $0x10] sm:$0xff]
      %v2296 = vld [vmem:[#allocation2 + $0x18] sm:$0xff]
      %v2297 = vld [vmem:[#allocation2 + $0x20] sm:$0xff]
      %v2298 = vld [vmem:[#allocation2 + $0x28] sm:$0xff]
      %v2299 = vld [vmem:[#allocation2 + $0x30] sm:$0xff]
      %v2300 = vld [vmem:[#allocation2 + $0x38] sm:$0xff]
      %v2301 = vld [vmem:[#allocation2 + $0x40] sm:$0xff]
      %v2302 = vld [vmem:[#allocation2 + $0x48] sm:$0xff]
      %v2303 = vld [vmem:[#allocation2 + $0x50] sm:$0xff]
      %v2304 = vld [vmem:[#allocation2 + $0x58] sm:$0xff]
      %v2305 = vld [vmem:[#allocation2 + $0x60] sm:$0xff]
      %v2306 = vld [vmem:[#allocation2 + $0x68] sm:$0xff]
      %v2307 = vld [vmem:[#allocation2 + $0x70] sm:$0xff]
      %v2308 = vld [vmem:[#allocation2 + $0x78] sm:$0xff]
      %v2309 = vld [vmem:[#allocation2 + $0x80] sm:$0xff]
      %v2310 = vld [vmem:[#allocation2 + $0x88] sm:$0xff]
      %v2311 = vld [vmem:[#allocation2 + $0x90] sm:$0xff]
      %v2312 = vld [vmem:[#allocation2 + $0x98] sm:$0xff]
      %v2313 = vld [vmem:[#allocation2 + $0xa0] sm:$0xff]
      %v2314 = vld [vmem:[#allocation2 + $0xa8] sm:$0xff]
      %v2315 = vld [vmem:[#allocation2 + $0xb0] sm:$0xff]
      %v2316 = vld [vmem:[#allocation2 + $0xb8] sm:$0xff]
      %v2317 = vld [vmem:[#allocation2 + $0xc0] sm:$0xff]
      %v2318 = vld [vmem:[#allocation2 + $0xc8] sm:$0xff]
      %v2319 = vld [vmem:[#allocation2 + $0xd0] sm:$0xff]
      %v2320 = vld [vmem:[#allocation2 + $0xd8] sm:$0xff]
      %v2321 = vld [vmem:[#allocation2 + $0xe0] sm:$0xff]
      %v2322 = vld [vmem:[#allocation2 + $0xe8] sm:$0xff]
      %v2323 = vld [vmem:[#allocation2 + $0xf0] sm:$0xff]
      %v2324 = vld [vmem:[#allocation2 + $0xf8] sm:$0xff]
      %v2325 = vld [vmem:[#allocation2 + $0x100] sm:$0xff]
      %v2326 = vld [vmem:[#allocation2 + $0x108] sm:$0xff]
      %v2327 = vld [vmem:[#allocation2 + $0x110] sm:$0xff]
      %v2328 = vld [vmem:[#allocation2 + $0x118] sm:$0xff]
      %v2329 = vld [vmem:[#allocation2 + $0x120] sm:$0xff]
      %v2330 = vld [vmem:[#allocation2 + $0x128] sm:$0xff]
      %v2331 = vld [vmem:[#allocation2 + $0x130] sm:$0xff]
      %v2332 = vld [vmem:[#allocation2 + $0x138] sm:$0xff]
      %v2333 = vld [vmem:[#allocation2 + $0x140] sm:$0xff]
      %v2334 = vld [vmem:[#allocation2 + $0x148] sm:$0xff]
      %v2335 = vld [vmem:[#allocation2 + $0x150] sm:$0xff]
      %v2336 = vld [vmem:[#allocation2 + $0x158] sm:$0xff]
      %v2337 = vld [vmem:[#allocation2 + $0x160] sm:$0xff]
      %v2338 = vld [vmem:[#allocation2 + $0x168] sm:$0xff]
      %v2339 = vld [vmem:[#allocation2 + $0x170] sm:$0xff]
      %v2340 = vld [vmem:[#allocation2 + $0x178] sm:$0xff]
      %v2341 = vld [vmem:[#allocation2 + $0x180] sm:$0xff]
      %v2342 = vld [vmem:[#allocation2 + $0x188] sm:$0xff]
      %v2343 = vld [vmem:[#allocation2 + $0x190] sm:$0xff]
      %v2344 = vld [vmem:[#allocation2 + $0x198] sm:$0xff]
      %v2345 = vld [vmem:[#allocation2 + $0x1a0] sm:$0xff]
      %v2346 = vld [vmem:[#allocation2 + $0x1a8] sm:$0xff]
      %v2347 = vld [vmem:[#allocation2 + $0x1b0] sm:$0xff]
      %v2348 = vld [vmem:[#allocation2 + $0x1b8] sm:$0xff]
      %v2349 = vld [vmem:[#allocation2 + $0x1c0] sm:$0xff]
      %v2350 = vld [vmem:[#allocation2 + $0x1c8] sm:$0xff]
      %v2351 = vld [vmem:[#allocation2 + $0x1d0] sm:$0xff]
      %v2352 = vld [vmem:[#allocation2 + $0x1d8] sm:$0xff]
      %v2353 = vld [vmem:[#allocation2 + $0x1e0] sm:$0xff]
      %v2354 = vld [vmem:[#allocation2 + $0x1e8] sm:$0xff]
      %v2355 = vld [vmem:[#allocation2 + $0x1f0] sm:$0xff]
      %v2356 = vld [vmem:[#allocation2 + $0x1f8] sm:$0xff]
      %v2357 = vld [vmem:[#allocation2 + $0x200] sm:$0xff]
      %v2358 = vld [vmem:[#allocation2 + $0x208] sm:$0xff]
      %v2359 = vld [vmem:[#allocation2 + $0x210] sm:$0xff]
      %v2360 = vld [vmem:[#allocation2 + $0x218] sm:$0xff]
      %v2361 = vld [vmem:[#allocation2 + $0x220] sm:$0xff]
      %v2362 = vld [vmem:[#allocation2 + $0x228] sm:$0xff]
      %v2363 = vld [vmem:[#allocation2 + $0x230] sm:$0xff]
      %v2364 = vld [vmem:[#allocation2 + $0x238] sm:$0xff]
      %v2366 = vsel %vm1208, %v2292, 0
      %2368 = vmatprep.subr.mxu0 %v2294
      %2369 = vmatpush1.msra.mxu0 %v2293
      %2370 = vmatprep.subr.mxu0 %v2302
      %2371 = vmatpush1.msra.mxu0 %v2301
      %2372 = vmatprep.subr.mxu0 %v2310
      %2373 = vmatpush1.msra.mxu0 %v2309
      %2374 = vmatprep.subr.mxu0 %v2318
      %2375 = vmatpush1.msra.mxu0 %v2317
      %2376 = vmatprep.subr.mxu0 %v2326
      %2377 = vmatpush1.msra.mxu0 %v2325
      %2378 = vmatprep.subr.mxu0 %v2334
      %2379 = vmatpush1.msra.mxu0 %v2333
      %2380 = vmatprep.subr.mxu0 %v2342
      %2381 = vmatpush1.msra.mxu0 %v2341
      %2382 = vmatprep.subr.mxu0 %v2350
      %2383 = vmatpush1.msra.mxu0 %v2349
      %2384 = vmatprep.subr.mxu0 %v2358
      %2385 = vmatpush1.msra.mxu0 %v2357
      %2386 = vmatprep.subr.mxu0 0.0
      %2387 = vmatpush1.msra.mxu0 0.0
      %2388 = vmatprep.subr.mxu0 0.0
      %2389 = vmatpush1.msra.mxu0 0.0
      %2390 = vmatprep.subr.mxu0 0.0
      %2391 = vmatpush1.msra.mxu0 0.0
      %2392 = vmatprep.subr.mxu0 0.0
      %2393 = vmatpush1.msra.mxu0 0.0
      %2394 = vmatprep.subr.mxu0 0.0
      %2395 = vmatpush1.msra.mxu0 0.0
      %2396 = vmatprep.subr.mxu0 0.0
      %2397 = vmatpush1.msra.mxu0 0.0
      %2398 = vmatprep.subr.mxu0 0.0
      %2399 = vmatpush1.msra.mxu0 0.0
      %2400 = vmatprep.subr.mxu0 0.0
      %2401 = vmatpush1.msra.mxu0 0.0
      %2402 = vmatprep.subr.mxu0 0.0
      %2403 = vmatpush1.msra.mxu0 0.0
      %2404 = vmatprep.subr.mxu0 0.0
      %2405 = vmatpush1.msra.mxu0 0.0
      %2406 = vmatprep.subr.mxu0 0.0
      %2407 = vmatpush1.msra.mxu0 0.0
      %2408 = vmatprep.subr.mxu0 0.0
      %2409 = vmatpush1.msra.mxu0 0.0
      %2410 = vmatprep.subr.mxu0 0.0
      %2411 = vmatpush1.msra.mxu0 0.0
      %2412 = vmatprep.subr.mxu0 0.0
      %2413 = vmatpush1.msra.mxu0 0.0
      %2414 = vmatprep.subr.mxu0 0.0
      %2415 = vmatpush1.msra.mxu0 0.0
      %2416 = vmatprep.subr.mxu0 0.0
      %2417 = vmatpush1.msra.mxu0 0.0
      %2418 = vmatprep.subr.mxu0 0.0
      %2419 = vmatpush1.msra.mxu0 0.0
      %2420 = vmatprep.subr.mxu0 0.0
      %2421 = vmatpush1.msra.mxu0 0.0
      %2422 = vmatprep.subr.mxu0 0.0
      %2423 = vmatpush1.msra.mxu0 0.0
      %2424 = vmatprep.subr.mxu0 0.0
      %2425 = vmatpush1.msra.mxu0 0.0
      %2426 = vmatprep.subr.mxu0 0.0
      %2427 = vmatpush1.msra.mxu0 0.0
      %2428 = vmatprep.subr.mxu0 0.0
      %2429 = vmatpush1.msra.mxu0 0.0
      %2430 = vmatprep.subr.mxu0 0.0
      %2431 = vmatpush1.msra.mxu0 0.0
      %2432 = vmatprep.mubr.f32.mxu0 0.0
      %2433 = vmatmul.mubr.f32.gmra.mrb[0].mxu0 %v2366
      %v2434 = vpop.f32.mrb[0].mxu0
      %v2435 = vadd.f32 0.0, %v2434
      %v2436 = vpop.f32.mrb[0].mxu0
      %v2437 = vadd.f32 0.0, %v2436
      %2438 = vdwg.mxu0
      %2439 = vmatprep.subr.mxu0 %v2296
      %2440 = vmatpush1.msra.mxu0 %v2295
      %2441 = vmatprep.subr.mxu0 %v2304
      %2442 = vmatpush1.msra.mxu0 %v2303
      %2443 = vmatprep.subr.mxu0 %v2312
      %2444 = vmatpush1.msra.mxu0 %v2311
      %2445 = vmatprep.subr.mxu0 %v2320
      %2446 = vmatpush1.msra.mxu0 %v2319
      %2447 = vmatprep.subr.mxu0 %v2328
      %2448 = vmatpush1.msra.mxu0 %v2327
      %2449 = vmatprep.subr.mxu0 %v2336
      %2450 = vmatpush1.msra.mxu0 %v2335
      %2451 = vmatprep.subr.mxu0 %v2344
      %2452 = vmatpush1.msra.mxu0 %v2343
      %2453 = vmatprep.subr.mxu0 %v2352
      %2454 = vmatpush1.msra.mxu0 %v2351
      %2455 = vmatprep.subr.mxu0 %v2360
      %2456 = vmatpush1.msra.mxu0 %v2359
      %2457 = vmatprep.subr.mxu0 0.0
      %2458 = vmatpush1.msra.mxu0 0.0
      %2459 = vmatprep.subr.mxu0 0.0
      %2460 = vmatpush1.msra.mxu0 0.0
      %2461 = vmatprep.subr.mxu0 0.0
      %2462 = vmatpush1.msra.mxu0 0.0
      %2463 = vmatprep.subr.mxu0 0.0
      %2464 = vmatpush1.msra.mxu0 0.0
      %2465 = vmatprep.subr.mxu0 0.0
      %2466 = vmatpush1.msra.mxu0 0.0
      %2467 = vmatprep.subr.mxu0 0.0
      %2468 = vmatpush1.msra.mxu0 0.0
      %2469 = vmatprep.subr.mxu0 0.0
      %2470 = vmatpush1.msra.mxu0 0.0
      %2471 = vmatprep.subr.mxu0 0.0
      %2472 = vmatpush1.msra.mxu0 0.0
      %2473 = vmatprep.subr.mxu0 0.0
      %2474 = vmatpush1.msra.mxu0 0.0
      %2475 = vmatprep.subr.mxu0 0.0
      %2476 = vmatpush1.msra.mxu0 0.0
      %2477 = vmatprep.subr.mxu0 0.0
      %2478 = vmatpush1.msra.mxu0 0.0
      %2479 = vmatprep.subr.mxu0 0.0
      %2480 = vmatpush1.msra.mxu0 0.0
      %2481 = vmatprep.subr.mxu0 0.0
      %2482 = vmatpush1.msra.mxu0 0.0
      %2483 = vmatprep.subr.mxu0 0.0
      %2484 = vmatpush1.msra.mxu0 0.0
      %2485 = vmatprep.subr.mxu0 0.0
      %2486 = vmatpush1.msra.mxu0 0.0
      %2487 = vmatprep.subr.mxu0 0.0
      %2488 = vmatpush1.msra.mxu0 0.0
      %2489 = vmatprep.subr.mxu0 0.0
      %2490 = vmatpush1.msra.mxu0 0.0
      %2491 = vmatprep.subr.mxu0 0.0
      %2492 = vmatpush1.msra.mxu0 0.0
      %2493 = vmatprep.subr.mxu0 0.0
      %2494 = vmatpush1.msra.mxu0 0.0
      %2495 = vmatprep.subr.mxu0 0.0
      %2496 = vmatpush1.msra.mxu0 0.0
      %2497 = vmatprep.subr.mxu0 0.0
      %2498 = vmatpush1.msra.mxu0 0.0
      %2499 = vmatprep.subr.mxu0 0.0
      %2500 = vmatpush1.msra.mxu0 0.0
      %2501 = vmatprep.subr.mxu0 0.0
      %2502 = vmatpush1.msra.mxu0 0.0
      %2503 = vmatprep.mubr.f32.mxu0 0.0
      %2504 = vmatmul.mubr.f32.gmra.mrb[0].mxu0 %v2366
      %v2505 = vpop.f32.mrb[0].mxu0
      %v2506 = vadd.f32 0.0, %v2505
      %v2507 = vpop.f32.mrb[0].mxu0
      %v2508 = vadd.f32 0.0, %v2507
      %2509 = vdwg.mxu0
      %2510 = vmatprep.subr.mxu0 %v2298
      %2511 = vmatpush1.msra.mxu0 %v2297
      %2512 = vmatprep.subr.mxu0 %v2306
      %2513 = vmatpush1.msra.mxu0 %v2305
      %2514 = vmatprep.subr.mxu0 %v2314
      %2515 = vmatpush1.msra.mxu0 %v2313
      %2516 = vmatprep.subr.mxu0 %v2322
      %2517 = vmatpush1.msra.mxu0 %v2321
      %2518 = vmatprep.subr.mxu0 %v2330
      %2519 = vmatpush1.msra.mxu0 %v2329
      %2520 = vmatprep.subr.mxu0 %v2338
      %2521 = vmatpush1.msra.mxu0 %v2337
      %2522 = vmatprep.subr.mxu0 %v2346
      %2523 = vmatpush1.msra.mxu0 %v2345
      %2524 = vmatprep.subr.mxu0 %v2354
      %2525 = vmatpush1.msra.mxu0 %v2353
      %2526 = vmatprep.subr.mxu0 %v2362
      %2527 = vmatpush1.msra.mxu0 %v2361
      %2528 = vmatprep.subr.mxu0 0.0
      %2529 = vmatpush1.msra.mxu0 0.0
      %2530 = vmatprep.subr.mxu0 0.0
      %2531 = vmatpush1.msra.mxu0 0.0
      %2532 = vmatprep.subr.mxu0 0.0
      %2533 = vmatpush1.msra.mxu0 0.0
      %2534 = vmatprep.subr.mxu0 0.0
      %2535 = vmatpush1.msra.mxu0 0.0
      %2536 = vmatprep.subr.mxu0 0.0
      %2537 = vmatpush1.msra.mxu0 0.0
      %2538 = vmatprep.subr.mxu0 0.0
      %2539 = vmatpush1.msra.mxu0 0.0
      %2540 = vmatprep.subr.mxu0 0.0
      %2541 = vmatpush1.msra.mxu0 0.0
      %2542 = vmatprep.subr.mxu0 0.0
      %2543 = vmatpush1.msra.mxu0 0.0
      %2544 = vmatprep.subr.mxu0 0.0
      %2545 = vmatpush1.msra.mxu0 0.0
      %2546 = vmatprep.subr.mxu0 0.0
      %2547 = vmatpush1.msra.mxu0 0.0
      %2548 = vmatprep.subr.mxu0 0.0
      %2549 = vmatpush1.msra.mxu0 0.0
      %2550 = vmatprep.subr.mxu0 0.0
      %2551 = vmatpush1.msra.mxu0 0.0
      %2552 = vmatprep.subr.mxu0 0.0
      %2553 = vmatpush1.msra.mxu0 0.0
      %2554 = vmatprep.subr.mxu0 0.0
      %2555 = vmatpush1.msra.mxu0 0.0
      %2556 = vmatprep.subr.mxu0 0.0
      %2557 = vmatpush1.msra.mxu0 0.0
      %2558 = vmatprep.subr.mxu0 0.0
      %2559 = vmatpush1.msra.mxu0 0.0
      %2560 = vmatprep.subr.mxu0 0.0
      %2561 = vmatpush1.msra.mxu0 0.0
      %2562 = vmatprep.subr.mxu0 0.0
      %2563 = vmatpush1.msra.mxu0 0.0
      %2564 = vmatprep.subr.mxu0 0.0
      %2565 = vmatpush1.msra.mxu0 0.0
      %2566 = vmatprep.subr.mxu0 0.0
      %2567 = vmatpush1.msra.mxu0 0.0
      %2568 = vmatprep.subr.mxu0 0.0
      %2569 = vmatpush1.msra.mxu0 0.0
      %2570 = vmatprep.subr.mxu0 0.0
      %2571 = vmatpush1.msra.mxu0 0.0
      %2572 = vmatprep.subr.mxu0 0.0
      %2573 = vmatpush1.msra.mxu0 0.0
      %2574 = vmatprep.mubr.f32.mxu0 0.0
      %2575 = vmatmul.mubr.f32.gmra.mrb[0].mxu0 %v2366
      %v2576 = vpop.f32.mrb[0].mxu0
      %v2577 = vadd.f32 0.0, %v2576
      %v2578 = vpop.f32.mrb[0].mxu0
      %v2579 = vadd.f32 0.0, %v2578
      %2580 = vdwg.mxu0
      %2581 = vmatprep.subr.mxu0 %v2300
      %2582 = vmatpush1.msra.mxu0 %v2299
      %2583 = vmatprep.subr.mxu0 %v2308
      %2584 = vmatpush1.msra.mxu0 %v2307
      %2585 = vmatprep.subr.mxu0 %v2316
      %2586 = vmatpush1.msra.mxu0 %v2315
      %2587 = vmatprep.subr.mxu0 %v2324
      %2588 = vmatpush1.msra.mxu0 %v2323
      %2589 = vmatprep.subr.mxu0 %v2332
      %2590 = vmatpush1.msra.mxu0 %v2331
      %2591 = vmatprep.subr.mxu0 %v2340
      %2592 = vmatpush1.msra.mxu0 %v2339
      %2593 = vmatprep.subr.mxu0 %v2348
      %2594 = vmatpush1.msra.mxu0 %v2347
      %2595 = vmatprep.subr.mxu0 %v2356
      %2596 = vmatpush1.msra.mxu0 %v2355
      %2597 = vmatprep.subr.mxu0 %v2364
      %2598 = vmatpush1.msra.mxu0 %v2363
      %2599 = vmatprep.subr.mxu0 0.0
      %2600 = vmatpush1.msra.mxu0 0.0
      %2601 = vmatprep.subr.mxu0 0.0
      %2602 = vmatpush1.msra.mxu0 0.0
      %2603 = vmatprep.subr.mxu0 0.0
      %2604 = vmatpush1.msra.mxu0 0.0
      %2605 = vmatprep.subr.mxu0 0.0
      %2606 = vmatpush1.msra.mxu0 0.0
      %2607 = vmatprep.subr.mxu0 0.0
      %2608 = vmatpush1.msra.mxu0 0.0
      %2609 = vmatprep.subr.mxu0 0.0
      %2610 = vmatpush1.msra.mxu0 0.0
      %2611 = vmatprep.subr.mxu0 0.0
      %2612 = vmatpush1.msra.mxu0 0.0
      %2613 = vmatprep.subr.mxu0 0.0
      %2614 = vmatpush1.msra.mxu0 0.0
      %2615 = vmatprep.subr.mxu0 0.0
      %2616 = vmatpush1.msra.mxu0 0.0
      %2617 = vmatprep.subr.mxu0 0.0
      %2618 = vmatpush1.msra.mxu0 0.0
      %2619 = vmatprep.subr.mxu0 0.0
      %2620 = vmatpush1.msra.mxu0 0.0
      %2621 = vmatprep.subr.mxu0 0.0
      %2622 = vmatpush1.msra.mxu0 0.0
      %2623 = vmatprep.subr.mxu0 0.0
      %2624 = vmatpush1.msra.mxu0 0.0
      %2625 = vmatprep.subr.mxu0 0.0
      %2626 = vmatpush1.msra.mxu0 0.0
      %2627 = vmatprep.subr.mxu0 0.0
      %2628 = vmatpush1.msra.mxu0 0.0
      %2629 = vmatprep.subr.mxu0 0.0
      %2630 = vmatpush1.msra.mxu0 0.0
      %2631 = vmatprep.subr.mxu0 0.0
      %2632 = vmatpush1.msra.mxu0 0.0
      %2633 = vmatprep.subr.mxu0 0.0
      %2634 = vmatpush1.msra.mxu0 0.0
      %2635 = vmatprep.subr.mxu0 0.0
      %2636 = vmatpush1.msra.mxu0 0.0
      %2637 = vmatprep.subr.mxu0 0.0
      %2638 = vmatpush1.msra.mxu0 0.0
      %2639 = vmatprep.subr.mxu0 0.0
      %2640 = vmatpush1.msra.mxu0 0.0
      %2641 = vmatprep.subr.mxu0 0.0
      %2642 = vmatpush1.msra.mxu0 0.0
      %2643 = vmatprep.subr.mxu0 0.0
      %2644 = vmatpush1.msra.mxu0 0.0
      %2645 = vmatprep.mubr.f32.mxu0 0.0
      %2646 = vmatmul.mubr.f32.gmra.mrb[0].mxu0 %v2366
      %v2647 = vpop.f32.mrb[0].mxu0
      %v2648 = vadd.f32 0.0, %v2647
      %v2649 = vpop.f32.mrb[0].mxu0
      %v2650 = vadd.f32 0.0, %v2649
      %2651 = vdwg.mxu0
      %v2652 = vld [vmem:[%s7] sm:$0xff]
      %2654 = vset.pattern.permute.xlu0 0
      %2655 = vperm.xlu0 %2654, %v2652
      %v2656 = vpop.permute.xlu0 %2655
      %v2658 = vmul.f32 %v2435, %v2656
      %v2659 = vmul.f32 %v2437, %v2656
      %v2660 = vmul.f32 %v2506, %v2656
      %v2661 = vmul.f32 %v2508, %v2656
      %v2662 = vmul.f32 %v2577, %v2656
      %v2663 = vmul.f32 %v2579, %v2656
      %v2664 = vmul.f32 %v2648, %v2656
      %v2665 = vmul.f32 %v2650, %v2656
      %v2666 = vld [vmem:[%s8] sm:$0xff]
      %2668 = vset.pattern.permute.xlu0 0
      %2669 = vperm.xlu0 %2668, %v2666
      %v2670 = vpop.permute.xlu0 %2669
      %v2672 = vadd.f32 %v2658, %v2670
      %v2673 = vadd.f32 %v2659, %v2670
      %v2674 = vadd.f32 %v2660, %v2670
      %v2675 = vadd.f32 %v2661, %v2670
      %v2676 = vadd.f32 %v2662, %v2670
      %v2677 = vadd.f32 %v2663, %v2670
      %v2678 = vadd.f32 %v2664, %v2670
      %v2679 = vadd.f32 %v2665, %v2670
      %v2680 = vld [vmem:[%s4] sm:$0xff]
      %vm2681 = vcmask 64512
      %v2683 = vsel %vm2681, %v2680, 0
      %2685 = vmatprep.subr.mxu0 %v334
      %2686 = vmatpush1.msra.mxu0 %v333
      %2687 = vmatprep.subr.mxu0 0.0
      %2688 = vmatpush1.msra.mxu0 0.0
      %2689 = vmatprep.subr.mxu0 0.0
      %2690 = vmatpush1.msra.mxu0 0.0
      %2691 = vmatprep.subr.mxu0 0.0
      %2692 = vmatpush1.msra.mxu0 0.0
      %2693 = vmatprep.subr.mxu0 0.0
      %2694 = vmatpush1.msra.mxu0 0.0
      %2695 = vmatprep.subr.mxu0 0.0
      %2696 = vmatpush1.msra.mxu0 0.0
      %2697 = vmatprep.subr.mxu0 0.0
      %2698 = vmatpush1.msra.mxu0 0.0
      %2699 = vmatprep.subr.mxu0 0.0
      %2700 = vmatpush1.msra.mxu0 0.0
      %2701 = vmatprep.subr.mxu0 0.0
      %2702 = vmatpush1.msra.mxu0 0.0
      %2703 = vmatprep.subr.mxu0 0.0
      %2704 = vmatpush1.msra.mxu0 0.0
      %2705 = vmatprep.subr.mxu0 0.0
      %2706 = vmatpush1.msra.mxu0 0.0
      %2707 = vmatprep.subr.mxu0 0.0
      %2708 = vmatpush1.msra.mxu0 0.0
      %2709 = vmatprep.subr.mxu0 0.0
      %2710 = vmatpush1.msra.mxu0 0.0
      %2711 = vmatprep.subr.mxu0 0.0
      %2712 = vmatpush1.msra.mxu0 0.0
      %2713 = vmatprep.subr.mxu0 0.0
      %2714 = vmatpush1.msra.mxu0 0.0
      %2715 = vmatprep.subr.mxu0 0.0
      %2716 = vmatpush1.msra.mxu0 0.0
      %2717 = vmatprep.subr.mxu0 0.0
      %2718 = vmatpush1.msra.mxu0 0.0
      %2719 = vmatprep.subr.mxu0 0.0
      %2720 = vmatpush1.msra.mxu0 0.0
      %2721 = vmatprep.subr.mxu0 0.0
      %2722 = vmatpush1.msra.mxu0 0.0
      %2723 = vmatprep.subr.mxu0 0.0
      %2724 = vmatpush1.msra.mxu0 0.0
      %2725 = vmatprep.subr.mxu0 0.0
      %2726 = vmatpush1.msra.mxu0 0.0
      %2727 = vmatprep.subr.mxu0 0.0
      %2728 = vmatpush1.msra.mxu0 0.0
      %2729 = vmatprep.subr.mxu0 0.0
      %2730 = vmatpush1.msra.mxu0 0.0
      %2731 = vmatprep.subr.mxu0 0.0
      %2732 = vmatpush1.msra.mxu0 0.0
      %2733 = vmatprep.subr.mxu0 0.0
      %2734 = vmatpush1.msra.mxu0 0.0
      %2735 = vmatprep.subr.mxu0 0.0
      %2736 = vmatpush1.msra.mxu0 0.0
      %2737 = vmatprep.subr.mxu0 0.0
      %2738 = vmatpush1.msra.mxu0 0.0
      %2739 = vmatprep.subr.mxu0 0.0
      %2740 = vmatpush1.msra.mxu0 0.0
      %2741 = vmatprep.subr.mxu0 0.0
      %2742 = vmatpush1.msra.mxu0 0.0
      %2743 = vmatprep.subr.mxu0 0.0
      %2744 = vmatpush1.msra.mxu0 0.0
      %2745 = vmatprep.subr.mxu0 0.0
      %2746 = vmatpush1.msra.mxu0 0.0
      %2747 = vmatprep.subr.mxu0 0.0
      %2748 = vmatpush1.msra.mxu0 0.0
      %2749 = vmatprep.mubr.f32.mxu0 0.0
      %2750 = vmatmul.mubr.f32.gmra.mrb[0].mxu0 %v2683
      %v2751 = vpop.f32.mrb[0].mxu0
      %v2752 = vadd.f32 0.0, %v2751
      %v2753 = vpop.f32.mrb[0].mxu0
      %v2754 = vadd.f32 0.0, %v2753
      %2755 = vdwg.mxu0
      %2756 = vmatprep.subr.mxu0 %v336
      %2757 = vmatpush1.msra.mxu0 %v335
      %2758 = vmatprep.subr.mxu0 0.0
      %2759 = vmatpush1.msra.mxu0 0.0
      %2760 = vmatprep.subr.mxu0 0.0
      %2761 = vmatpush1.msra.mxu0 0.0
      %2762 = vmatprep.subr.mxu0 0.0
      %2763 = vmatpush1.msra.mxu0 0.0
      %2764 = vmatprep.subr.mxu0 0.0
      %2765 = vmatpush1.msra.mxu0 0.0
      %2766 = vmatprep.subr.mxu0 0.0
      %2767 = vmatpush1.msra.mxu0 0.0
      %2768 = vmatprep.subr.mxu0 0.0
      %2769 = vmatpush1.msra.mxu0 0.0
      %2770 = vmatprep.subr.mxu0 0.0
      %2771 = vmatpush1.msra.mxu0 0.0
      %2772 = vmatprep.subr.mxu0 0.0
      %2773 = vmatpush1.msra.mxu0 0.0
      %2774 = vmatprep.subr.mxu0 0.0
      %2775 = vmatpush1.msra.mxu0 0.0
      %2776 = vmatprep.subr.mxu0 0.0
      %2777 = vmatpush1.msra.mxu0 0.0
      %2778 = vmatprep.subr.mxu0 0.0
      %2779 = vmatpush1.msra.mxu0 0.0
      %2780 = vmatprep.subr.mxu0 0.0
      %2781 = vmatpush1.msra.mxu0 0.0
      %2782 = vmatprep.subr.mxu0 0.0
      %2783 = vmatpush1.msra.mxu0 0.0
      %2784 = vmatprep.subr.mxu0 0.0
      %2785 = vmatpush1.msra.mxu0 0.0
      %2786 = vmatprep.subr.mxu0 0.0
      %2787 = vmatpush1.msra.mxu0 0.0
      %2788 = vmatprep.subr.mxu0 0.0
      %2789 = vmatpush1.msra.mxu0 0.0
      %2790 = vmatprep.subr.mxu0 0.0
      %2791 = vmatpush1.msra.mxu0 0.0
      %2792 = vmatprep.subr.mxu0 0.0
      %2793 = vmatpush1.msra.mxu0 0.0
      %2794 = vmatprep.subr.mxu0 0.0
      %2795 = vmatpush1.msra.mxu0 0.0
      %2796 = vmatprep.subr.mxu0 0.0
      %2797 = vmatpush1.msra.mxu0 0.0
      %2798 = vmatprep.subr.mxu0 0.0
      %2799 = vmatpush1.msra.mxu0 0.0
      %2800 = vmatprep.subr.mxu0 0.0
      %2801 = vmatpush1.msra.mxu0 0.0
      %2802 = vmatprep.subr.mxu0 0.0
      %2803 = vmatpush1.msra.mxu0 0.0
      %2804 = vmatprep.subr.mxu0 0.0
      %2805 = vmatpush1.msra.mxu0 0.0
      %2806 = vmatprep.subr.mxu0 0.0
      %2807 = vmatpush1.msra.mxu0 0.0
      %2808 = vmatprep.subr.mxu0 0.0
      %2809 = vmatpush1.msra.mxu0 0.0
      %2810 = vmatprep.subr.mxu0 0.0
      %2811 = vmatpush1.msra.mxu0 0.0
      %2812 = vmatprep.subr.mxu0 0.0
      %2813 = vmatpush1.msra.mxu0 0.0
      %2814 = vmatprep.subr.mxu0 0.0
      %2815 = vmatpush1.msra.mxu0 0.0
      %2816 = vmatprep.subr.mxu0 0.0
      %2817 = vmatpush1.msra.mxu0 0.0
      %2818 = vmatprep.subr.mxu0 0.0
      %2819 = vmatpush1.msra.mxu0 0.0
      %2820 = vmatprep.mubr.f32.mxu0 0.0
      %2821 = vmatmul.mubr.f32.gmra.mrb[0].mxu0 %v2683
      %v2822 = vpop.f32.mrb[0].mxu0
      %v2823 = vadd.f32 0.0, %v2822
      %v2824 = vpop.f32.mrb[0].mxu0
      %v2825 = vadd.f32 0.0, %v2824
      %2826 = vdwg.mxu0
      %2827 = vmatprep.subr.mxu0 %v338
      %2828 = vmatpush1.msra.mxu0 %v337
      %2829 = vmatprep.subr.mxu0 0.0
      %2830 = vmatpush1.msra.mxu0 0.0
      %2831 = vmatprep.subr.mxu0 0.0
      %2832 = vmatpush1.msra.mxu0 0.0
      %2833 = vmatprep.subr.mxu0 0.0
      %2834 = vmatpush1.msra.mxu0 0.0
      %2835 = vmatprep.subr.mxu0 0.0
      %2836 = vmatpush1.msra.mxu0 0.0
      %2837 = vmatprep.subr.mxu0 0.0
      %2838 = vmatpush1.msra.mxu0 0.0
      %2839 = vmatprep.subr.mxu0 0.0
      %2840 = vmatpush1.msra.mxu0 0.0
      %2841 = vmatprep.subr.mxu0 0.0
      %2842 = vmatpush1.msra.mxu0 0.0
      %2843 = vmatprep.subr.mxu0 0.0
      %2844 = vmatpush1.msra.mxu0 0.0
      %2845 = vmatprep.subr.mxu0 0.0
      %2846 = vmatpush1.msra.mxu0 0.0
      %2847 = vmatprep.subr.mxu0 0.0
      %2848 = vmatpush1.msra.mxu0 0.0
      %2849 = vmatprep.subr.mxu0 0.0
      %2850 = vmatpush1.msra.mxu0 0.0
      %2851 = vmatprep.subr.mxu0 0.0
      %2852 = vmatpush1.msra.mxu0 0.0
      %2853 = vmatprep.subr.mxu0 0.0
      %2854 = vmatpush1.msra.mxu0 0.0
      %2855 = vmatprep.subr.mxu0 0.0
      %2856 = vmatpush1.msra.mxu0 0.0
      %2857 = vmatprep.subr.mxu0 0.0
      %2858 = vmatpush1.msra.mxu0 0.0
      %2859 = vmatprep.subr.mxu0 0.0
      %2860 = vmatpush1.msra.mxu0 0.0
      %2861 = vmatprep.subr.mxu0 0.0
      %2862 = vmatpush1.msra.mxu0 0.0
      %2863 = vmatprep.subr.mxu0 0.0
      %2864 = vmatpush1.msra.mxu0 0.0
      %2865 = vmatprep.subr.mxu0 0.0
      %2866 = vmatpush1.msra.mxu0 0.0
      %2867 = vmatprep.subr.mxu0 0.0
      %2868 = vmatpush1.msra.mxu0 0.0
      %2869 = vmatprep.subr.mxu0 0.0
      %2870 = vmatpush1.msra.mxu0 0.0
      %2871 = vmatprep.subr.mxu0 0.0
      %2872 = vmatpush1.msra.mxu0 0.0
      %2873 = vmatprep.subr.mxu0 0.0
      %2874 = vmatpush1.msra.mxu0 0.0
      %2875 = vmatprep.subr.mxu0 0.0
      %2876 = vmatpush1.msra.mxu0 0.0
      %2877 = vmatprep.subr.mxu0 0.0
      %2878 = vmatpush1.msra.mxu0 0.0
      %2879 = vmatprep.subr.mxu0 0.0
      %2880 = vmatpush1.msra.mxu0 0.0
      %2881 = vmatprep.subr.mxu0 0.0
      %2882 = vmatpush1.msra.mxu0 0.0
      %2883 = vmatprep.subr.mxu0 0.0
      %2884 = vmatpush1.msra.mxu0 0.0
      %2885 = vmatprep.subr.mxu0 0.0
      %2886 = vmatpush1.msra.mxu0 0.0
      %2887 = vmatprep.subr.mxu0 0.0
      %2888 = vmatpush1.msra.mxu0 0.0
      %2889 = vmatprep.subr.mxu0 0.0
      %2890 = vmatpush1.msra.mxu0 0.0
      %2891 = vmatprep.mubr.f32.mxu0 0.0
      %2892 = vmatmul.mubr.f32.gmra.mrb[0].mxu0 %v2683
      %v2893 = vpop.f32.mrb[0].mxu0
      %v2894 = vadd.f32 0.0, %v2893
      %v2895 = vpop.f32.mrb[0].mxu0
      %v2896 = vadd.f32 0.0, %v2895
      %2897 = vdwg.mxu0
      %2898 = vmatprep.subr.mxu0 %v340
      %2899 = vmatpush1.msra.mxu0 %v339
      %2900 = vmatprep.subr.mxu0 0.0
      %2901 = vmatpush1.msra.mxu0 0.0
      %2902 = vmatprep.subr.mxu0 0.0
      %2903 = vmatpush1.msra.mxu0 0.0
      %2904 = vmatprep.subr.mxu0 0.0
      %2905 = vmatpush1.msra.mxu0 0.0
      %2906 = vmatprep.subr.mxu0 0.0
      %2907 = vmatpush1.msra.mxu0 0.0
      %2908 = vmatprep.subr.mxu0 0.0
      %2909 = vmatpush1.msra.mxu0 0.0
      %2910 = vmatprep.subr.mxu0 0.0
      %2911 = vmatpush1.msra.mxu0 0.0
      %2912 = vmatprep.subr.mxu0 0.0
      %2913 = vmatpush1.msra.mxu0 0.0
      %2914 = vmatprep.subr.mxu0 0.0
      %2915 = vmatpush1.msra.mxu0 0.0
      %2916 = vmatprep.subr.mxu0 0.0
      %2917 = vmatpush1.msra.mxu0 0.0
      %2918 = vmatprep.subr.mxu0 0.0
      %2919 = vmatpush1.msra.mxu0 0.0
      %2920 = vmatprep.subr.mxu0 0.0
      %2921 = vmatpush1.msra.mxu0 0.0
      %2922 = vmatprep.subr.mxu0 0.0
      %2923 = vmatpush1.msra.mxu0 0.0
      %2924 = vmatprep.subr.mxu0 0.0
      %2925 = vmatpush1.msra.mxu0 0.0
      %2926 = vmatprep.subr.mxu0 0.0
      %2927 = vmatpush1.msra.mxu0 0.0
      %2928 = vmatprep.subr.mxu0 0.0
      %2929 = vmatpush1.msra.mxu0 0.0
      %2930 = vmatprep.subr.mxu0 0.0
      %2931 = vmatpush1.msra.mxu0 0.0
      %2932 = vmatprep.subr.mxu0 0.0
      %2933 = vmatpush1.msra.mxu0 0.0
      %2934 = vmatprep.subr.mxu0 0.0
      %2935 = vmatpush1.msra.mxu0 0.0
      %2936 = vmatprep.subr.mxu0 0.0
      %2937 = vmatpush1.msra.mxu0 0.0
      %2938 = vmatprep.subr.mxu0 0.0
      %2939 = vmatpush1.msra.mxu0 0.0
      %2940 = vmatprep.subr.mxu0 0.0
      %2941 = vmatpush1.msra.mxu0 0.0
      %2942 = vmatprep.subr.mxu0 0.0
      %2943 = vmatpush1.msra.mxu0 0.0
      %2944 = vmatprep.subr.mxu0 0.0
      %2945 = vmatpush1.msra.mxu0 0.0
      %2946 = vmatprep.subr.mxu0 0.0
      %2947 = vmatpush1.msra.mxu0 0.0
      %2948 = vmatprep.subr.mxu0 0.0
      %2949 = vmatpush1.msra.mxu0 0.0
      %2950 = vmatprep.subr.mxu0 0.0
      %2951 = vmatpush1.msra.mxu0 0.0
      %2952 = vmatprep.subr.mxu0 0.0
      %2953 = vmatpush1.msra.mxu0 0.0
      %2954 = vmatprep.subr.mxu0 0.0
      %2955 = vmatpush1.msra.mxu0 0.0
      %2956 = vmatprep.subr.mxu0 0.0
      %2957 = vmatpush1.msra.mxu0 0.0
      %2958 = vmatprep.subr.mxu0 0.0
      %2959 = vmatpush1.msra.mxu0 0.0
      %2960 = vmatprep.subr.mxu0 0.0
      %2961 = vmatpush1.msra.mxu0 0.0
      %2962 = vmatprep.mubr.f32.mxu0 0.0
      %2963 = vmatmul.mubr.f32.gmra.mrb[0].mxu0 %v2683
      %v2964 = vpop.f32.mrb[0].mxu0
      %v2965 = vadd.f32 0.0, %v2964
      %v2966 = vpop.f32.mrb[0].mxu0
      %v2967 = vadd.f32 0.0, %v2966
      %2968 = vdwg.mxu0
      %v2969 = vadd.f32 %v2672, %v2752
      %v2970 = vadd.f32 %v2673, %v2754
      %v2971 = vadd.f32 %v2674, %v2823
      %v2972 = vadd.f32 %v2675, %v2825
      %v2973 = vadd.f32 %v2676, %v2894
      %v2974 = vadd.f32 %v2677, %v2896
      %v2975 = vadd.f32 %v2678, %v2965
      %v2976 = vadd.f32 %v2679, %v2967
      %2977 = vst [vmem:[%s332] sm:$0xff] %v2969
      %2978 = vst [vmem:[%s332 + $0x8] sm:$0xff] %v2970
      %2979 = vst [vmem:[%s332 + $0x10] sm:$0xff] %v2971
      %2980 = vst [vmem:[%s332 + $0x18] sm:$0xff] %v2972
      %2981 = vst [vmem:[%s332 + $0x20] sm:$0xff] %v2973
      %2982 = vst [vmem:[%s332 + $0x28] sm:$0xff] %v2974
      %2983 = vst [vmem:[%s332 + $0x30] sm:$0xff] %v2975
      %2984 = vst [vmem:[%s332 + $0x38] sm:$0xff] %v2976
      %p2985 = scmp.lt.s32.totalorder %s20, 1
      %s2986 = scalar_select %p2985, %s20, 1
      %s2987 = smul.addr %s2986, 8
      %s2988 = smul.addr %s2987, 8
      %s2989 = scalar_lea.vmem %s9, %s2988
      // Predicated region
      $region57: #{_lambda_.1} parent=55 // pred_check
        %p2990 = pneg %p232
      $region58: #{_lambda_.1} parent=55 // pred_check_branch
        %2992 = sbr.rel (%p2990) target = $region60
      $region59: #{_lambda_.1} parent=55 // pred_region
        _
      $region60: #{_lambda_.1} parent=55 // pred_fallthru
        _
    $region56: #{_lambda_.1} parent=5 // pred_fallthru
      _
    %p2993 = scmp.le.s32.totalorder 2, %s15
    // Predicated region
    $region61: #{_lambda_.1} parent=5 // pred_check
      %p2994 = pneg %p2993
    $region62: #{_lambda_.1} parent=5 // pred_check_branch
      %2996 = sbr.rel (%p2994) target = $region64
    $region63: #{_lambda_.1} parent=5 // pred_region
      %s2997 = ssub.s32 %s15, 2
      // Predicated region
      $region65: #{_lambda_.1} parent=63 // pred_check
        %p2998 = pneg %p238
      $region66: #{_lambda_.1} parent=63 // pred_check_branch
        %3000 = sbr.rel (%p2998) target = $region68
      $region67: #{_lambda_.1} parent=63 // pred_region
        %p3001 = scmp.lt.s32.totalorder %s21, 1
        %s3002 = scalar_select %p3001, %s21, 1
        %s3003 = smul.addr %s3002, 8
        %s3004 = smul.addr %s3003, 8
        %s3005 = scalar_lea.vmem %s9, %s3004
      $region68: #{_lambda_.1} parent=63 // pred_fallthru
        _
    $region64: #{_lambda_.1} parent=5 // pred_fallthru
      _
  $region6: #{_lambda_.1} parent=0 // loop_footer
    %s19 = sadd.s32 1, %s15
  $region7: #{_lambda_.1} parent=0 // loop_footer_branch
    %14 = sbr.rel target = $region3
  $region8: #{_lambda_.1} parent=0 // loop_exit
    _

</llo_original>
